<compile_context>
chip_gen: v6e
topology: v6e:2x2x1
jax: 0.10.0
libtpu: 0.0.40
codegen_flags: <defaults>
</compile_context>

<pallas_src>
import jax
import jax.numpy as jnp
from jax.experimental import pallas as pl
from jax.experimental.pallas import tpu as pltpu

FEAT = 8192   # flattened no_pool_resnet feature width per camera
H1 = 128      # fc1_1 / fc2_1 output width (two halves of the combined weight)


def actor_kernel(f1_ref, f2_ref, prop_ref,
                 w12_ref, s12_ref, b12_ref,
                 w3a_ref, w3b_ref, w3p_ref, b3_ref,
                 w4_ref, b4_ref, w5_ref, b5_ref,
                 a_ref,
                 out_ref):
    alpha = a_ref[0]  # single shared nn.PReLU() parameter (matches PyTorch)

    def prelu(x):
        return jnp.where(x >= 0.0, x, alpha * x)

    # fc1_1 / fc2_1: int8 weights cast to bf16 (exact: values are small ints),
    # bf16 x bf16 MXU matmul with f32 accumulation; per-output-channel scales
    # folded into the f32 accumulator before the bias add.
    w1h = w12_ref[:, :H1].astype(jnp.bfloat16)          # (8192, 128)
    acc1 = jnp.dot(f1_ref[...], w1h, preferred_element_type=jnp.float32)
    w2h = w12_ref[:, H1:].astype(jnp.bfloat16)           # (8192, 128)
    acc2 = jnp.dot(f2_ref[...], w2h, preferred_element_type=jnp.float32)

    i1 = prelu(acc1 * s12_ref[:, :H1] + b12_ref[:, :H1])
    i2 = prelu(acc2 * s12_ref[:, H1:] + b12_ref[:, H1:])

    # fc3 applied to cat([i1, i2, proprio], dim=1) as a split matmul
    # (avoids an unaligned 272-wide concat along the lane axis).
    h3 = (jnp.dot(i1, w3a_ref[...], preferred_element_type=jnp.float32)
          + jnp.dot(i2, w3b_ref[...], preferred_element_type=jnp.float32)
          + jnp.dot(prop_ref[...], w3p_ref[...],
                    preferred_element_type=jnp.float32)
          + b3_ref[...])
    h3 = prelu(h3)
    h4 = prelu(jnp.dot(h3, w4_ref[...],
                       preferred_element_type=jnp.float32) + b4_ref[...])
    out_ref[...] = jnp.tanh(
        jnp.dot(h4, w5_ref[...], preferred_element_type=jnp.float32)
        + b5_ref[...])


def actor_forward(feat1, feat2, prop, params):
    B, K = feat1.shape
    P = prop.shape[1]
    A = params["w5"].shape[1]
    assert K == FEAT

    # Feature vectors streamed as bf16 (tiny: 32 KiB each).
    f1 = feat1.astype(jnp.bfloat16)
    f2 = feat2.astype(jnp.bfloat16)

    def full(shape):
        return pl.BlockSpec(shape, lambda k: (0, 0))

    in_specs = [
        full((B, K)),            # feat1 (resident, bf16)
        full((B, K)),            # feat2 (resident, bf16)
        full((B, P)),            # proprio (f32)
        full((K, 2 * H1)),       # w12 combined fc1_1|fc2_1 weights (int8)
        full((1, 2 * H1)),       # per-output-channel dequant scales (f32)
        full((1, 2 * H1)),       # combined biases b1|b2
        full((H1, 128)),         # w3a (fc3 rows for i1)
        full((H1, 128)),         # w3b (fc3 rows for i2)
        full((P, 128)),          # w3p (fc3 rows for proprio)
        full((1, 128)),          # b3
        full((128, 32)),         # w4
        full((1, 32)),           # b4
        full((32, A)),           # w5
        full((1, A)),            # b5
        pl.BlockSpec(memory_space=pltpu.MemorySpace.SMEM),  # prelu alpha
    ]

    return pl.pallas_call(
        actor_kernel,
        out_shape=jax.ShapeDtypeStruct((B, A), jnp.float32),
        grid_spec=pltpu.PrefetchScalarGridSpec(
            num_scalar_prefetch=0,
            grid=(1,),
            in_specs=in_specs,
            out_specs=pl.BlockSpec((B, A), lambda k: (0, 0)),
        ),
        compiler_params=pltpu.CompilerParams(
            dimension_semantics=("arbitrary",),
            vmem_limit_bytes=32 << 20),
    )(f1, f2, prop,
      params["w12_q"], params["w12_scale"], params["b12"],
      params["w3a"], params["w3b"], params["w3p"], params["b3"],
      params["w4"], params["b4"], params["w5"], params["b5"],
      params["prelu_a"])


def init_params(key, proprio_dim, action_dim):
    """Deterministic PyTorch-style uniform(+-1/sqrt(fan_in)) init.

    fc1_1/fc2_1 weights are concatenated into one (8192, 256) tensor and
    stored as int8 with per-output-channel symmetric scales (HBM-bandwidth
    dominated path); an fp32 master is kept only for the reference check.
    """
    ks = jax.random.split(key, 5)

    def lin(k, fan_in, fan_out):
        kw, kb = jax.random.split(k)
        lim = 1.0 / jnp.sqrt(fan_in)
        w = jax.random.uniform(kw, (fan_in, fan_out), jnp.float32, -lim, lim)
        b = jax.random.uniform(kb, (1, fan_out), jnp.float32, -lim, lim)
        return w, b

    w1f, b1 = lin(ks[0], FEAT, H1)
    w2f, b2 = lin(ks[1], FEAT, H1)
    w3, b3 = lin(ks[2], 2 * H1 + proprio_dim, 128)
    w4, b4 = lin(ks[3], 128, 32)
    w5, b5 = lin(ks[4], 32, action_dim)

    w12_f32 = jnp.concatenate([w1f, w2f], axis=1)                 # (8192, 256)
    w12_scale = jnp.max(jnp.abs(w12_f32), axis=0, keepdims=True) / 127.0
    w12_q = jnp.clip(jnp.round(w12_f32 / w12_scale),
                     -127.0, 127.0).astype(jnp.int8)

    return {
        "w12_q": w12_q, "w12_scale": w12_scale, "w12_f32": w12_f32,
        "b12": jnp.concatenate([b1, b2], axis=1),
        "w3a": w3[:H1], "w3b": w3[H1:2 * H1], "w3p": w3[2 * H1:], "b3": b3,
        "w4": w4, "b4": b4,
        "w5": w5, "b5": b5,
        "prelu_a": jnp.array([0.25], jnp.float32),  # nn.PReLU() default
    }


def ref_forward(feat1, feat2, prop, params, *, mirror_quant=True):
    a = params["prelu_a"][0]
    prelu = lambda x: jnp.where(x >= 0, x, a * x)
    b12 = params["b12"]
    if mirror_quant:   # same numerics as the kernel (bf16 feats, int8 weights)
        f1 = feat1.astype(jnp.bfloat16)
        f2 = feat2.astype(jnp.bfloat16)
        wq = params["w12_q"].astype(jnp.bfloat16)
        acc1 = jnp.dot(f1, wq[:, :H1], preferred_element_type=jnp.float32)
        acc2 = jnp.dot(f2, wq[:, H1:], preferred_element_type=jnp.float32)
        i1 = prelu(acc1 * params["w12_scale"][:, :H1] + b12[:, :H1])
        i2 = prelu(acc2 * params["w12_scale"][:, H1:] + b12[:, H1:])
    else:              # full fp32 path (PyTorch-equivalent semantics)
        w = params["w12_f32"]
        i1 = prelu(jnp.dot(feat1, w[:, :H1],
                           preferred_element_type=jnp.float32) + b12[:, :H1])
        i2 = prelu(jnp.dot(feat2, w[:, H1:],
                           preferred_element_type=jnp.float32) + b12[:, H1:])
    s = jnp.concatenate([i1, i2, prop], axis=1)
    w3 = jnp.concatenate([params["w3a"], params["w3b"], params["w3p"]], axis=0)
    h3 = prelu(s @ w3 + params["b3"])
    h4 = prelu(h3 @ params["w4"] + params["b4"])
    return jnp.tanh(h4 @ params["w5"] + params["b5"])


if __name__ == "__main__":
    B, PROPRIO_DIM, ACTION_DIM = 2, 16, 8
    key = jax.random.PRNGKey(0)
    k_feat1, k_feat2, k_prop, k_params = jax.random.split(key, 4)

    feat1 = jax.random.normal(k_feat1, (B, FEAT), jnp.float32)  # resnet(state[0]).view(B,-1)
    feat2 = jax.random.normal(k_feat2, (B, FEAT), jnp.float32)  # resnet(state[1]).view(B,-1)
    prop = jax.random.normal(k_prop, (B, PROPRIO_DIM), jnp.float32)  # state[2].view(B,-1)
    params = init_params(k_params, PROPRIO_DIM, ACTION_DIM)

    out = actor_forward(feat1, feat2, prop, params)
    out = jax.block_until_ready(out)
    assert out.shape == (B, ACTION_DIM)

    # Tight check against a reference with identical (bf16 feats + int8 weight)
    # numerics -- only MXU vs XLA accumulation order differs.
    ref_q = ref_forward(feat1, feat2, prop, params, mirror_quant=True)
    assert jnp.allclose(out, ref_q, atol=2e-3, rtol=2e-3), \
        jnp.max(jnp.abs(out - ref_q))

    # Loose sanity check against the fp32 (PyTorch-semantics) reference:
    # bf16 activations + per-channel int8 fc1_1/fc2_1 weights give ~1% relative
    # error on the dominant matmuls (accuracy sign-off for the quantization).
    ref_f32 = ref_forward(feat1, feat2, prop, params, mirror_quant=False)
    assert jnp.allclose(out, ref_f32, atol=2e-2, rtol=2e-2), \
        jnp.max(jnp.abs(out - ref_f32))

    print("KERNEL_OK")
</pallas_src>

<mosaic_0001>
module attributes {stable_mosaic.version = 11 : i64} {
  func.func @actor_kernel(%arg0: i32, %arg1: memref<2x8192xbf16, #tpu.memory_space<vmem>>, %arg2: memref<2x8192xbf16, #tpu.memory_space<vmem>>, %arg3: memref<2x16xf32, #tpu.memory_space<vmem>>, %arg4: memref<8192x256xi8, #tpu.memory_space<vmem>>, %arg5: memref<1x256xf32, #tpu.memory_space<vmem>>, %arg6: memref<1x256xf32, #tpu.memory_space<vmem>>, %arg7: memref<128x128xf32, #tpu.memory_space<vmem>>, %arg8: memref<128x128xf32, #tpu.memory_space<vmem>>, %arg9: memref<16x128xf32, #tpu.memory_space<vmem>>, %arg10: memref<1x128xf32, #tpu.memory_space<vmem>>, %arg11: memref<128x32xf32, #tpu.memory_space<vmem>>, %arg12: memref<1x32xf32, #tpu.memory_space<vmem>>, %arg13: memref<32x8xf32, #tpu.memory_space<vmem>>, %arg14: memref<1x8xf32, #tpu.memory_space<vmem>>, %arg15: memref<1xf32, #tpu.memory_space<smem>>, %arg16: memref<2x8xf32, #tpu.memory_space<vmem>>) attributes {dimension_semantics = [#tpu.dimension_semantics<arbitrary>], iteration_bounds = array<i64: 1>, scalar_prefetch = 0 : i64, scratch_operands = 0 : i64, tpu.core_type = #tpu.core_type<tc>, window_params = [{pipeline_mode = #tpu.pipeline_mode<synchronous>, transform_indices = @transform_0, window_bounds = array<i64: 2, 8192>}, {pipeline_mode = #tpu.pipeline_mode<synchronous>, transform_indices = @transform_1, window_bounds = array<i64: 2, 8192>}, {pipeline_mode = #tpu.pipeline_mode<synchronous>, transform_indices = @transform_2, window_bounds = array<i64: 2, 16>}, {pipeline_mode = #tpu.pipeline_mode<synchronous>, transform_indices = @transform_3, window_bounds = array<i64: 8192, 256>}, {pipeline_mode = #tpu.pipeline_mode<synchronous>, transform_indices = @transform_4, window_bounds = array<i64: 1, 256>}, {pipeline_mode = #tpu.pipeline_mode<synchronous>, transform_indices = @transform_5, window_bounds = array<i64: 1, 256>}, {pipeline_mode = #tpu.pipeline_mode<synchronous>, transform_indices = @transform_6, window_bounds = array<i64: 128, 128>}, {pipeline_mode = #tpu.pipeline_mode<synchronous>, transform_indices = @transform_7, window_bounds = array<i64: 128, 128>}, {pipeline_mode = #tpu.pipeline_mode<synchronous>, transform_indices = @transform_8, window_bounds = array<i64: 16, 128>}, {pipeline_mode = #tpu.pipeline_mode<synchronous>, transform_indices = @transform_9, window_bounds = array<i64: 1, 128>}, {pipeline_mode = #tpu.pipeline_mode<synchronous>, transform_indices = @transform_10, window_bounds = array<i64: 128, 32>}, {pipeline_mode = #tpu.pipeline_mode<synchronous>, transform_indices = @transform_11, window_bounds = array<i64: 1, 32>}, {pipeline_mode = #tpu.pipeline_mode<synchronous>, transform_indices = @transform_12, window_bounds = array<i64: 32, 8>}, {pipeline_mode = #tpu.pipeline_mode<synchronous>, transform_indices = @transform_13, window_bounds = array<i64: 1, 8>}, {transform_indices = @transform_14, window_bounds = array<i64: 1>}, {pipeline_mode = #tpu.pipeline_mode<synchronous>, transform_indices = @transform_15, window_bounds = array<i64: 2, 8>}]} {
    %c0 = arith.constant 0 : index
    %0 = memref.load %arg15[%c0] : memref<1xf32, #tpu.memory_space<smem>>
    %c0_0 = arith.constant 0 : index
    %c0_1 = arith.constant 0 : index
    %1 = vector.load %arg4[%c0_0, %c0_1] : memref<8192x256xi8, #tpu.memory_space<vmem>>, vector<8192x128xi8>
    %2 = arith.sitofp %1 : vector<8192x128xi8> to vector<8192x128xbf16>
    %c0_2 = arith.constant 0 : index
    %c0_3 = arith.constant 0 : index
    %3 = vector.load %arg1[%c0_2, %c0_3] : memref<2x8192xbf16, #tpu.memory_space<vmem>>, vector<2x8192xbf16>
    %cst = arith.constant dense<0.000000e+00> : vector<2x128xf32>
    %4 = tpu.matmul %3, %2, %cst {dimension_numbers = #tpu.dot_dimension_numbers<[1], [0], [0], [1], [0, 0, 1, 1], [], []>} : vector<2x8192xbf16>, vector<8192x128xbf16>, vector<2x128xf32> -> vector<2x128xf32>
    %c0_4 = arith.constant 0 : index
    %c128 = arith.constant 128 : index
    %5 = vector.load %arg4[%c0_4, %c128] : memref<8192x256xi8, #tpu.memory_space<vmem>>, vector<8192x128xi8>
    %6 = arith.sitofp %5 : vector<8192x128xi8> to vector<8192x128xbf16>
    %c0_5 = arith.constant 0 : index
    %c0_6 = arith.constant 0 : index
    %7 = vector.load %arg2[%c0_5, %c0_6] : memref<2x8192xbf16, #tpu.memory_space<vmem>>, vector<2x8192xbf16>
    %cst_7 = arith.constant dense<0.000000e+00> : vector<2x128xf32>
    %8 = tpu.matmul %7, %6, %cst_7 {dimension_numbers = #tpu.dot_dimension_numbers<[1], [0], [0], [1], [0, 0, 1, 1], [], []>} : vector<2x8192xbf16>, vector<8192x128xbf16>, vector<2x128xf32> -> vector<2x128xf32>
    %c0_8 = arith.constant 0 : index
    %c0_9 = arith.constant 0 : index
    %9 = vector.load %arg5[%c0_8, %c0_9] : memref<1x256xf32, #tpu.memory_space<vmem>>, vector<1x128xf32>
    %10 = vector.broadcast %9 : vector<1x128xf32> to vector<2x128xf32>
    %11 = arith.mulf %4, %10 : vector<2x128xf32>
    %c0_10 = arith.constant 0 : index
    %c0_11 = arith.constant 0 : index
    %12 = vector.load %arg6[%c0_10, %c0_11] : memref<1x256xf32, #tpu.memory_space<vmem>>, vector<1x128xf32>
    %13 = vector.broadcast %12 : vector<1x128xf32> to vector<2x128xf32>
    %14 = arith.addf %11, %13 : vector<2x128xf32>
    %cst_12 = arith.constant 0.000000e+00 : f32
    %15 = vector.broadcast %cst_12 : f32 to vector<2x128xf32>
    %16 = arith.cmpf oge, %14, %15 : vector<2x128xf32>
    %17 = vector.broadcast %0 : f32 to vector<2x128xf32>
    %18 = arith.mulf %17, %14 : vector<2x128xf32>
    %19 = arith.select %16, %14, %18 : vector<2x128xi1>, vector<2x128xf32>
    %c0_13 = arith.constant 0 : index
    %c128_14 = arith.constant 128 : index
    %20 = vector.load %arg5[%c0_13, %c128_14] : memref<1x256xf32, #tpu.memory_space<vmem>>, vector<1x128xf32>
    %21 = vector.broadcast %20 : vector<1x128xf32> to vector<2x128xf32>
    %22 = arith.mulf %8, %21 : vector<2x128xf32>
    %c0_15 = arith.constant 0 : index
    %c128_16 = arith.constant 128 : index
    %23 = vector.load %arg6[%c0_15, %c128_16] : memref<1x256xf32, #tpu.memory_space<vmem>>, vector<1x128xf32>
    %24 = vector.broadcast %23 : vector<1x128xf32> to vector<2x128xf32>
    %25 = arith.addf %22, %24 : vector<2x128xf32>
    %cst_17 = arith.constant 0.000000e+00 : f32
    %26 = vector.broadcast %cst_17 : f32 to vector<2x128xf32>
    %27 = arith.cmpf oge, %25, %26 : vector<2x128xf32>
    %28 = vector.broadcast %0 : f32 to vector<2x128xf32>
    %29 = arith.mulf %28, %25 : vector<2x128xf32>
    %30 = arith.select %27, %25, %29 : vector<2x128xi1>, vector<2x128xf32>
    %c0_18 = arith.constant 0 : index
    %c0_19 = arith.constant 0 : index
    %31 = vector.load %arg7[%c0_18, %c0_19] : memref<128x128xf32, #tpu.memory_space<vmem>>, vector<128x128xf32>
    %cst_20 = arith.constant dense<0.000000e+00> : vector<2x128xf32>
    %32 = tpu.matmul %19, %31, %cst_20 {dimension_numbers = #tpu.dot_dimension_numbers<[1], [0], [0], [1], [0, 0, 1, 1], [], []>} : vector<2x128xf32>, vector<128x128xf32>, vector<2x128xf32> -> vector<2x128xf32>
    %c0_21 = arith.constant 0 : index
    %c0_22 = arith.constant 0 : index
    %33 = vector.load %arg8[%c0_21, %c0_22] : memref<128x128xf32, #tpu.memory_space<vmem>>, vector<128x128xf32>
    %cst_23 = arith.constant dense<0.000000e+00> : vector<2x128xf32>
    %34 = tpu.matmul %30, %33, %cst_23 {dimension_numbers = #tpu.dot_dimension_numbers<[1], [0], [0], [1], [0, 0, 1, 1], [], []>} : vector<2x128xf32>, vector<128x128xf32>, vector<2x128xf32> -> vector<2x128xf32>
    %35 = arith.addf %32, %34 : vector<2x128xf32>
    %c0_24 = arith.constant 0 : index
    %c0_25 = arith.constant 0 : index
    %36 = vector.load %arg3[%c0_24, %c0_25] : memref<2x16xf32, #tpu.memory_space<vmem>>, vector<2x16xf32>
    %c0_26 = arith.constant 0 : index
    %c0_27 = arith.constant 0 : index
    %37 = vector.load %arg9[%c0_26, %c0_27] : memref<16x128xf32, #tpu.memory_space<vmem>>, vector<16x128xf32>
    %cst_28 = arith.constant dense<0.000000e+00> : vector<2x128xf32>
    %38 = tpu.matmul %36, %37, %cst_28 {dimension_numbers = #tpu.dot_dimension_numbers<[1], [0], [0], [1], [0, 0, 1, 1], [], []>} : vector<2x16xf32>, vector<16x128xf32>, vector<2x128xf32> -> vector<2x128xf32>
    %39 = arith.addf %35, %38 : vector<2x128xf32>
    %c0_29 = arith.constant 0 : index
    %c0_30 = arith.constant 0 : index
    %40 = vector.load %arg10[%c0_29, %c0_30] : memref<1x128xf32, #tpu.memory_space<vmem>>, vector<1x128xf32>
    %41 = vector.broadcast %40 : vector<1x128xf32> to vector<2x128xf32>
    %42 = arith.addf %39, %41 : vector<2x128xf32>
    %cst_31 = arith.constant 0.000000e+00 : f32
    %43 = vector.broadcast %cst_31 : f32 to vector<2x128xf32>
    %44 = arith.cmpf oge, %42, %43 : vector<2x128xf32>
    %45 = vector.broadcast %0 : f32 to vector<2x128xf32>
    %46 = arith.mulf %45, %42 : vector<2x128xf32>
    %47 = arith.select %44, %42, %46 : vector<2x128xi1>, vector<2x128xf32>
    %c0_32 = arith.constant 0 : index
    %c0_33 = arith.constant 0 : index
    %48 = vector.load %arg11[%c0_32, %c0_33] : memref<128x32xf32, #tpu.memory_space<vmem>>, vector<128x32xf32>
    %cst_34 = arith.constant dense<0.000000e+00> : vector<2x32xf32>
    %49 = tpu.matmul %47, %48, %cst_34 {dimension_numbers = #tpu.dot_dimension_numbers<[1], [0], [0], [1], [0, 0, 1, 1], [], []>} : vector<2x128xf32>, vector<128x32xf32>, vector<2x32xf32> -> vector<2x32xf32>
    %c0_35 = arith.constant 0 : index
    %c0_36 = arith.constant 0 : index
    %50 = vector.load %arg12[%c0_35, %c0_36] : memref<1x32xf32, #tpu.memory_space<vmem>>, vector<1x32xf32>
    %51 = vector.broadcast %50 : vector<1x32xf32> to vector<2x32xf32>
    %52 = arith.addf %49, %51 : vector<2x32xf32>
    %cst_37 = arith.constant 0.000000e+00 : f32
    %53 = vector.broadcast %cst_37 : f32 to vector<2x32xf32>
    %54 = arith.cmpf oge, %52, %53 : vector<2x32xf32>
    %55 = vector.broadcast %0 : f32 to vector<2x32xf32>
    %56 = arith.mulf %55, %52 : vector<2x32xf32>
    %57 = arith.select %54, %52, %56 : vector<2x32xi1>, vector<2x32xf32>
    %c0_38 = arith.constant 0 : index
    %c0_39 = arith.constant 0 : index
    %58 = vector.load %arg13[%c0_38, %c0_39] : memref<32x8xf32, #tpu.memory_space<vmem>>, vector<32x8xf32>
    %cst_40 = arith.constant dense<0.000000e+00> : vector<2x8xf32>
    %59 = tpu.matmul %57, %58, %cst_40 {dimension_numbers = #tpu.dot_dimension_numbers<[1], [0], [0], [1], [0, 0, 1, 1], [], []>} : vector<2x32xf32>, vector<32x8xf32>, vector<2x8xf32> -> vector<2x8xf32>
    %c0_41 = arith.constant 0 : index
    %c0_42 = arith.constant 0 : index
    %60 = vector.load %arg14[%c0_41, %c0_42] : memref<1x8xf32, #tpu.memory_space<vmem>>, vector<1x8xf32>
    %61 = vector.broadcast %60 : vector<1x8xf32> to vector<2x8xf32>
    %62 = arith.addf %59, %61 : vector<2x8xf32>
    %63 = math.tanh %62 : vector<2x8xf32>
    %c0_43 = arith.constant 0 : index
    %c0_44 = arith.constant 0 : index
    %64 = vector.load %arg16[%c0_43, %c0_44] : memref<2x8xf32, #tpu.memory_space<vmem>>, vector<2x8xf32>
    tpu.vector_store %arg16[%c0_43, %c0_44], %63 {strides = array<i32>} : memref<2x8xf32, #tpu.memory_space<vmem>>, vector<2x8xf32>,
    return
  }
  func.func @transform_0(%arg0: i32) -> (i32, i32) {
    %c0_i32 = arith.constant 0 : i32
    %c0_i32_0 = arith.constant 0 : i32
    %c0_i32_1 = arith.constant 0 : i32
    return %c0_i32, %c0_i32_0 : i32, i32
  }
  func.func @transform_1(%arg0: i32) -> (i32, i32) {
    %c0_i32 = arith.constant 0 : i32
    %c0_i32_0 = arith.constant 0 : i32
    %c0_i32_1 = arith.constant 0 : i32
    return %c0_i32, %c0_i32_0 : i32, i32
  }
  func.func @transform_2(%arg0: i32) -> (i32, i32) {
    %c0_i32 = arith.constant 0 : i32
    %c0_i32_0 = arith.constant 0 : i32
    %c0_i32_1 = arith.constant 0 : i32
    return %c0_i32, %c0_i32_0 : i32, i32
  }
  func.func @transform_3(%arg0: i32) -> (i32, i32) {
    %c0_i32 = arith.constant 0 : i32
    %c0_i32_0 = arith.constant 0 : i32
    %c0_i32_1 = arith.constant 0 : i32
    return %c0_i32, %c0_i32_0 : i32, i32
  }
  func.func @transform_4(%arg0: i32) -> (i32, i32) {
    %c0_i32 = arith.constant 0 : i32
    %c0_i32_0 = arith.constant 0 : i32
    %c0_i32_1 = arith.constant 0 : i32
    return %c0_i32, %c0_i32_0 : i32, i32
  }
  func.func @transform_5(%arg0: i32) -> (i32, i32) {
    %c0_i32 = arith.constant 0 : i32
    %c0_i32_0 = arith.constant 0 : i32
    %c0_i32_1 = arith.constant 0 : i32
    return %c0_i32, %c0_i32_0 : i32, i32
  }
  func.func @transform_6(%arg0: i32) -> (i32, i32) {
    %c0_i32 = arith.constant 0 : i32
    %c0_i32_0 = arith.constant 0 : i32
    %c0_i32_1 = arith.constant 0 : i32
    return %c0_i32, %c0_i32_0 : i32, i32
  }
  func.func @transform_7(%arg0: i32) -> (i32, i32) {
    %c0_i32 = arith.constant 0 : i32
    %c0_i32_0 = arith.constant 0 : i32
    %c0_i32_1 = arith.constant 0 : i32
    return %c0_i32, %c0_i32_0 : i32, i32
  }
  func.func @transform_8(%arg0: i32) -> (i32, i32) {
    %c0_i32 = arith.constant 0 : i32
    %c0_i32_0 = arith.constant 0 : i32
    %c0_i32_1 = arith.constant 0 : i32
    return %c0_i32, %c0_i32_0 : i32, i32
  }
  func.func @transform_9(%arg0: i32) -> (i32, i32) {
    %c0_i32 = arith.constant 0 : i32
    %c0_i32_0 = arith.constant 0 : i32
    %c0_i32_1 = arith.constant 0 : i32
    return %c0_i32, %c0_i32_0 : i32, i32
  }
  func.func @transform_10(%arg0: i32) -> (i32, i32) {
    %c0_i32 = arith.constant 0 : i32
    %c0_i32_0 = arith.constant 0 : i32
    %c0_i32_1 = arith.constant 0 : i32
    return %c0_i32, %c0_i32_0 : i32, i32
  }
  func.func @transform_11(%arg0: i32) -> (i32, i32) {
    %c0_i32 = arith.constant 0 : i32
    %c0_i32_0 = arith.constant 0 : i32
    %c0_i32_1 = arith.constant 0 : i32
    return %c0_i32, %c0_i32_0 : i32, i32
  }
  func.func @transform_12(%arg0: i32) -> (i32, i32) {
    %c0_i32 = arith.constant 0 : i32
    %c0_i32_0 = arith.constant 0 : i32
    %c0_i32_1 = arith.constant 0 : i32
    return %c0_i32, %c0_i32_0 : i32, i32
  }
  func.func @transform_13(%arg0: i32) -> (i32, i32) {
    %c0_i32 = arith.constant 0 : i32
    %c0_i32_0 = arith.constant 0 : i32
    %c0_i32_1 = arith.constant 0 : i32
    return %c0_i32, %c0_i32_0 : i32, i32
  }
  func.func @transform_14(%arg0: i32) -> i32 {
    %c0_i32 = arith.constant 0 : i32
    %c0_i32_0 = arith.constant 0 : i32
    return %c0_i32 : i32
  }
  func.func @transform_15(%arg0: i32) -> (i32, i32) {
    %c0_i32 = arith.constant 0 : i32
    %c0_i32_0 = arith.constant 0 : i32
    %c0_i32_1 = arith.constant 0 : i32
    return %c0_i32, %c0_i32_0 : i32, i32
  }
}

</mosaic_0001>

<llo_original>
// kernel: tpu_custom_call.1
$region0: #{tpu_custom_call.1}
  #allocation0 [shape = 'u32[]', space=smem, size = 0x4, offset = 0x4, fixed_abs, tag = 'smem constant byte address 0x4 - core index']
  #allocation1 [shape = 'u32[144,128]{1,0:T(1,128)}', space=vmem, size = 0x12000, scoped, tag = 'internal scratch']
  #allocation2 [shape = 'f32[1]{0:T(128)S(6)}', space=smem, size = 0x200, scoped, tag = 'scoped memory for tpu_custom_call.1']
  %s0 = inlined_call_operand.hbm [shape: bf16[2,8192], index: 0, kind: input, shape index: {}]
  %s1 = inlined_call_operand.hbm [shape: bf16[2,8192], index: 1, kind: input, shape index: {}]
  %s2 = inlined_call_operand.hbm [shape: f32[2,16], index: 2, kind: input, shape index: {}]
  %s3 = inlined_call_operand.hbm [shape: s8[8192,256], index: 3, kind: input, shape index: {}]
  %s4 = inlined_call_operand.hbm [shape: f32[1,256], index: 4, kind: input, shape index: {}]
  %s5 = inlined_call_operand.hbm [shape: f32[1,256], index: 5, kind: input, shape index: {}]
  %s6 = inlined_call_operand.hbm [shape: f32[128,128], index: 6, kind: input, shape index: {}]
  %s7 = inlined_call_operand.hbm [shape: f32[128,128], index: 7, kind: input, shape index: {}]
  %s8 = inlined_call_operand.hbm [shape: f32[16,128], index: 8, kind: input, shape index: {}]
  %s9 = inlined_call_operand.hbm [shape: f32[1,128], index: 9, kind: input, shape index: {}]
  %s10 = inlined_call_operand.vmem [shape: f32[128,32], index: 10, kind: input, shape index: {}]
  %s11 = inlined_call_operand.hbm [shape: f32[1,32], index: 11, kind: input, shape index: {}]
  %s12 = inlined_call_operand.vmem [shape: f32[32,8], index: 12, kind: input, shape index: {}]
  %s13 = inlined_call_operand.hbm [shape: f32[1,8], index: 13, kind: input, shape index: {}]
  %s14 = inlined_call_operand.<no memory space> [shape: f32[1], index: 14, kind: input, shape index: {}]
  %s15 = inlined_call_operand.hbm [shape: f32[2,8], index: 15, kind: output, shape index: {}]
  %s16 = sld [smem:[#allocation0]]
  $region118: #{tpu_custom_call.1} parent=0
    _
  %s18 = ssub.s32 1, %s16
  %s19 = scalar_select 0, %s18, %s16
  %20 = sst [smem:[#allocation2]] %s14
  $region1: #{tpu_custom_call.1} parent=0
    #allocation3 [shape = 'u8[32768]{0}', space=vmem, size = 0x8000, scoped, tag = 'input window, operand 0, single buffered']
    #allocation4 [shape = 's32[1]{0}', space=sflag, size = 0x4, scoped, tag = 'scoped memory for tpu_custom_call.1']
    #allocation5 [shape = 's32[1]{0}', space=sflag, size = 0x4, scoped, tag = 'scoped memory for tpu_custom_call.1']
    #allocation6 [shape = 'u8[32768]{0}', space=vmem, size = 0x8000, scoped, tag = 'input window, operand 1, single buffered']
    #allocation7 [shape = 's32[1]{0}', space=sflag, size = 0x4, scoped, tag = 'scoped memory for tpu_custom_call.1']
    #allocation8 [shape = 'u8[1024]{0}', space=vmem, size = 0x400, scoped, tag = 'input window, operand 2, single buffered']
    #allocation9 [shape = 'u8[2097152]{0}', space=vmem, size = 0x200000, scoped, tag = 'input window, operand 3, single buffered']
    #allocation10 [shape = 's32[1]{0}', space=sflag, size = 0x4, scoped, tag = 'scoped memory for tpu_custom_call.1']
    #allocation11 [shape = 'u8[1024]{0}', space=vmem, size = 0x400, scoped, tag = 'input window, operand 4, single buffered']
    #allocation12 [shape = 'u8[1024]{0}', space=vmem, size = 0x400, scoped, tag = 'input window, operand 5, single buffered']
    #allocation13 [shape = 's32[1]{0}', space=sflag, size = 0x4, scoped, tag = 'scoped memory for tpu_custom_call.1']
    #allocation14 [shape = 'u8[65536]{0}', space=vmem, size = 0x10000, scoped, tag = 'input window, operand 6, single buffered']
    #allocation15 [shape = 'u8[65536]{0}', space=vmem, size = 0x10000, scoped, tag = 'input window, operand 7, single buffered']
    #allocation16 [shape = 's32[1]{0}', space=sflag, size = 0x4, scoped, tag = 'scoped memory for tpu_custom_call.1']
    #allocation17 [shape = 'u8[8192]{0}', space=vmem, size = 0x2000, scoped, tag = 'input window, operand 8, single buffered']
    #allocation18 [shape = 'u8[512]{0}', space=vmem, size = 0x400, scoped, tag = 'input window, operand 9, single buffered']
    #allocation19 [shape = 's32[1]{0}', space=sflag, size = 0x4, scoped, tag = 'scoped memory for tpu_custom_call.1']
    #allocation20 [shape = 'u8[512]{0}', space=vmem, size = 0x400, scoped, tag = 'input window, operand 11, single buffered']
    #allocation21 [shape = 'u8[512]{0}', space=vmem, size = 0x400, scoped, tag = 'input window, operand 13, single buffered']
    #allocation22 [shape = 's32[1]{0}', space=sflag, size = 0x4, scoped, tag = 'scoped memory for tpu_custom_call.1']
    #allocation23 [shape = 'u8[1024]{0}', space=vmem, size = 0x400, scoped, tag = 'output window, operand 0, single buffered']
    %21 = vsyncpa [#allocation4], 0
    %22 = vsyncpa [#allocation7], 0
    %23 = vsyncpa [#allocation10], 0
    %24 = vsyncpa [#allocation13], 0
    %25 = vsyncpa [#allocation16], 0
    %26 = vsyncpa [#allocation19], 0
    %27 = vsyncpa [#allocation22], 0
    %28 = vsyncpa [#allocation5], 0
    // Predicated region
    $region2: #{tpu_custom_call.1} parent=1 // pred_check
      _
    $region3: #{tpu_custom_call.1} parent=1 // pred_check_branch
      %30 = sbr.rel (0) target = $region5
    $region4: #{tpu_custom_call.1} parent=1 // pred_region
      %s32 = ssub.s32 1024, 1024
      %33 = vsyncadd [#allocation4], %s32
      %s35 = sshll.u32 [#allocation3], 4
      %s36 = int_to_ptr.vmem [resolvable:$true] %s35
      %38 = dma.hbm_to_vmem [thread:$0]  %s0, 1024, %s36, [#allocation4]
    $region5: #{tpu_custom_call.1} parent=1 // pred_fallthru
      _
    // Predicated region
    $region6: #{tpu_custom_call.1} parent=1 // pred_check
      _
    $region7: #{tpu_custom_call.1} parent=1 // pred_check_branch
      %40 = sbr.rel (0) target = $region9
    $region8: #{tpu_custom_call.1} parent=1 // pred_region
      %s42 = ssub.s32 1024, 1024
      %43 = vsyncadd [#allocation7], %s42
      %s45 = sshll.u32 [#allocation6], 4
      %s46 = int_to_ptr.vmem [resolvable:$true] %s45
      %48 = dma.hbm_to_vmem [thread:$0]  %s1, 1024, %s46, [#allocation7]
    $region9: #{tpu_custom_call.1} parent=1 // pred_fallthru
      _
    // Predicated region
    $region10: #{tpu_custom_call.1} parent=1 // pred_check
      _
    $region11: #{tpu_custom_call.1} parent=1 // pred_check_branch
      %50 = sbr.rel (0) target = $region13
    $region12: #{tpu_custom_call.1} parent=1 // pred_region
      %s52 = ssub.s32 32, 32
      %53 = vsyncadd [#allocation7], %s52
      %s55 = sshll.u32 [#allocation8], 4
      %s56 = int_to_ptr.vmem [resolvable:$true] %s55
      %58 = dma.hbm_to_vmem [thread:$0]  %s2, 32, %s56, [#allocation7]
    $region13: #{tpu_custom_call.1} parent=1 // pred_fallthru
      _
    // Predicated region
    $region14: #{tpu_custom_call.1} parent=1 // pred_check
      _
    $region15: #{tpu_custom_call.1} parent=1 // pred_check_branch
      %60 = sbr.rel (0) target = $region17
    $region16: #{tpu_custom_call.1} parent=1 // pred_region
      %s62 = ssub.s32 65536, 65536
      %63 = vsyncadd [#allocation10], %s62
      %s64 = sshll.u32 [#allocation9], 4
      %s65 = int_to_ptr.vmem [resolvable:$true] %s64
      %70 = dma.hbm_to_vmem [thread:$0]  %s3, 65536, %s65, [#allocation10], 256, 256, 16
    $region17: #{tpu_custom_call.1} parent=1 // pred_fallthru
      _
    // Predicated region
    $region18: #{tpu_custom_call.1} parent=1 // pred_check
      _
    $region19: #{tpu_custom_call.1} parent=1 // pred_check_branch
      %72 = sbr.rel (0) target = $region21
    $region20: #{tpu_custom_call.1} parent=1 // pred_region
      %s74 = ssub.s32 32, 32
      %75 = vsyncadd [#allocation10], %s74
      %s77 = sshll.u32 [#allocation11], 4
      %s78 = int_to_ptr.vmem [resolvable:$true] %s77
      %80 = dma.hbm_to_vmem [thread:$0]  %s4, 32, %s78, [#allocation10]
    $region21: #{tpu_custom_call.1} parent=1 // pred_fallthru
      _
    // Predicated region
    $region22: #{tpu_custom_call.1} parent=1 // pred_check
      _
    $region23: #{tpu_custom_call.1} parent=1 // pred_check_branch
      %82 = sbr.rel (0) target = $region25
    $region24: #{tpu_custom_call.1} parent=1 // pred_region
      %s84 = ssub.s32 32, 32
      %85 = vsyncadd [#allocation13], %s84
      %s87 = sshll.u32 [#allocation12], 4
      %s88 = int_to_ptr.vmem [resolvable:$true] %s87
      %90 = dma.hbm_to_vmem [thread:$0]  %s5, 32, %s88, [#allocation13]
    $region25: #{tpu_custom_call.1} parent=1 // pred_fallthru
      _
    // Predicated region
    $region26: #{tpu_custom_call.1} parent=1 // pred_check
      _
    $region27: #{tpu_custom_call.1} parent=1 // pred_check_branch
      %92 = sbr.rel (0) target = $region29
    $region28: #{tpu_custom_call.1} parent=1 // pred_region
      %s94 = ssub.s32 2048, 2048
      %95 = vsyncadd [#allocation13], %s94
      %s96 = sshll.u32 [#allocation14], 4
      %s97 = int_to_ptr.vmem [resolvable:$true] %s96
      %102 = dma.hbm_to_vmem [thread:$0]  %s6, 2048, %s97, [#allocation13], 128, 128, 8
    $region29: #{tpu_custom_call.1} parent=1 // pred_fallthru
      _
    // Predicated region
    $region30: #{tpu_custom_call.1} parent=1 // pred_check
      _
    $region31: #{tpu_custom_call.1} parent=1 // pred_check_branch
      %104 = sbr.rel (0) target = $region33
    $region32: #{tpu_custom_call.1} parent=1 // pred_region
      %s106 = ssub.s32 2048, 2048
      %107 = vsyncadd [#allocation16], %s106
      %s108 = sshll.u32 [#allocation15], 4
      %s109 = int_to_ptr.vmem [resolvable:$true] %s108
      %114 = dma.hbm_to_vmem [thread:$0]  %s7, 2048, %s109, [#allocation16], 128, 128, 8
    $region33: #{tpu_custom_call.1} parent=1 // pred_fallthru
      _
    // Predicated region
    $region34: #{tpu_custom_call.1} parent=1 // pred_check
      _
    $region35: #{tpu_custom_call.1} parent=1 // pred_check_branch
      %116 = sbr.rel (0) target = $region37
    $region36: #{tpu_custom_call.1} parent=1 // pred_region
      %s118 = ssub.s32 256, 256
      %119 = vsyncadd [#allocation16], %s118
      %s120 = sshll.u32 [#allocation17], 4
      %s121 = int_to_ptr.vmem [resolvable:$true] %s120
      %126 = dma.hbm_to_vmem [thread:$0]  %s8, 256, %s121, [#allocation16], 128, 128, 8
    $region37: #{tpu_custom_call.1} parent=1 // pred_fallthru
      _
    // Predicated region
    $region38: #{tpu_custom_call.1} parent=1 // pred_check
      _
    $region39: #{tpu_custom_call.1} parent=1 // pred_check_branch
      %128 = sbr.rel (0) target = $region41
    $region40: #{tpu_custom_call.1} parent=1 // pred_region
      %s130 = ssub.s32 16, 16
      %131 = vsyncadd [#allocation19], %s130
      %s133 = sshll.u32 [#allocation18], 4
      %s134 = int_to_ptr.vmem [resolvable:$true] %s133
      %136 = dma.hbm_to_vmem [thread:$0]  %s9, 16, %s134, [#allocation19]
    $region41: #{tpu_custom_call.1} parent=1 // pred_fallthru
      _
    // Predicated region
    $region42: #{tpu_custom_call.1} parent=1 // pred_check
      _
    $region43: #{tpu_custom_call.1} parent=1 // pred_check_branch
      %138 = sbr.rel (0) target = $region45
    $region44: #{tpu_custom_call.1} parent=1 // pred_region
      _
    $region45: #{tpu_custom_call.1} parent=1 // pred_fallthru
      _
    // Predicated region
    $region46: #{tpu_custom_call.1} parent=1 // pred_check
      _
    $region47: #{tpu_custom_call.1} parent=1 // pred_check_branch
      %140 = sbr.rel (0) target = $region49
    $region48: #{tpu_custom_call.1} parent=1 // pred_region
      %s142 = ssub.s32 16, 16
      %143 = vsyncadd [#allocation19], %s142
      %s145 = sshll.u32 [#allocation20], 4
      %s146 = int_to_ptr.vmem [resolvable:$true] %s145
      %148 = dma.hbm_to_vmem [thread:$0]  %s11, 16, %s146, [#allocation19]
    $region49: #{tpu_custom_call.1} parent=1 // pred_fallthru
      _
    // Predicated region
    $region50: #{tpu_custom_call.1} parent=1 // pred_check
      _
    $region51: #{tpu_custom_call.1} parent=1 // pred_check_branch
      %150 = sbr.rel (0) target = $region53
    $region52: #{tpu_custom_call.1} parent=1 // pred_region
      _
    $region53: #{tpu_custom_call.1} parent=1 // pred_fallthru
      _
    // Predicated region
    $region54: #{tpu_custom_call.1} parent=1 // pred_check
      _
    $region55: #{tpu_custom_call.1} parent=1 // pred_check_branch
      %152 = sbr.rel (0) target = $region57
    $region56: #{tpu_custom_call.1} parent=1 // pred_region
      %s154 = ssub.s32 16, 16
      %155 = vsyncadd [#allocation22], %s154
      %s157 = sshll.u32 [#allocation21], 4
      %s158 = int_to_ptr.vmem [resolvable:$true] %s157
      %160 = dma.hbm_to_vmem [thread:$0]  %s13, 16, %s158, [#allocation22]
    $region57: #{tpu_custom_call.1} parent=1 // pred_fallthru
      _
    // Predicated region
    $region58: #{tpu_custom_call.1} parent=1 // pred_check
      _
    $region59: #{tpu_custom_call.1} parent=1 // pred_check_branch
      %162 = sbr.rel (0) target = $region61
    $region60: #{tpu_custom_call.1} parent=1 // pred_region
      _
    $region61: #{tpu_custom_call.1} parent=1 // pred_fallthru
      _
    // Predicated region
    $region62: #{tpu_custom_call.1} parent=1 // pred_check
      _
    $region63: #{tpu_custom_call.1} parent=1 // pred_check_branch
      %164 = sbr.rel (0) target = $region65
    $region64: #{tpu_custom_call.1} parent=1 // pred_region
      %165 = dma.done [#allocation4], 1024
    $region65: #{tpu_custom_call.1} parent=1 // pred_fallthru
      _
    // Predicated region
    $region66: #{tpu_custom_call.1} parent=1 // pred_check
      _
    $region67: #{tpu_custom_call.1} parent=1 // pred_check_branch
      %167 = sbr.rel (0) target = $region69
    $region68: #{tpu_custom_call.1} parent=1 // pred_region
      %168 = dma.done [#allocation7], 1024
    $region69: #{tpu_custom_call.1} parent=1 // pred_fallthru
      _
    // Predicated region
    $region70: #{tpu_custom_call.1} parent=1 // pred_check
      _
    $region71: #{tpu_custom_call.1} parent=1 // pred_check_branch
      %170 = sbr.rel (0) target = $region73
    $region72: #{tpu_custom_call.1} parent=1 // pred_region
      %171 = dma.done [#allocation7], 32
    $region73: #{tpu_custom_call.1} parent=1 // pred_fallthru
      _
    // Predicated region
    $region74: #{tpu_custom_call.1} parent=1 // pred_check
      _
    $region75: #{tpu_custom_call.1} parent=1 // pred_check_branch
      %173 = sbr.rel (0) target = $region77
    $region76: #{tpu_custom_call.1} parent=1 // pred_region
      %174 = dma.done [#allocation10], 65536
    $region77: #{tpu_custom_call.1} parent=1 // pred_fallthru
      _
    // Predicated region
    $region78: #{tpu_custom_call.1} parent=1 // pred_check
      _
    $region79: #{tpu_custom_call.1} parent=1 // pred_check_branch
      %176 = sbr.rel (0) target = $region81
    $region80: #{tpu_custom_call.1} parent=1 // pred_region
      %177 = dma.done [#allocation10], 32
    $region81: #{tpu_custom_call.1} parent=1 // pred_fallthru
      _
    // Predicated region
    $region82: #{tpu_custom_call.1} parent=1 // pred_check
      _
    $region83: #{tpu_custom_call.1} parent=1 // pred_check_branch
      %179 = sbr.rel (0) target = $region85
    $region84: #{tpu_custom_call.1} parent=1 // pred_region
      %180 = dma.done [#allocation13], 32
    $region85: #{tpu_custom_call.1} parent=1 // pred_fallthru
      _
    // Predicated region
    $region86: #{tpu_custom_call.1} parent=1 // pred_check
      _
    $region87: #{tpu_custom_call.1} parent=1 // pred_check_branch
      %182 = sbr.rel (0) target = $region89
    $region88: #{tpu_custom_call.1} parent=1 // pred_region
      %183 = dma.done [#allocation13], 2048
    $region89: #{tpu_custom_call.1} parent=1 // pred_fallthru
      _
    // Predicated region
    $region90: #{tpu_custom_call.1} parent=1 // pred_check
      _
    $region91: #{tpu_custom_call.1} parent=1 // pred_check_branch
      %185 = sbr.rel (0) target = $region93
    $region92: #{tpu_custom_call.1} parent=1 // pred_region
      %186 = dma.done [#allocation16], 2048
    $region93: #{tpu_custom_call.1} parent=1 // pred_fallthru
      _
    // Predicated region
    $region94: #{tpu_custom_call.1} parent=1 // pred_check
      _
    $region95: #{tpu_custom_call.1} parent=1 // pred_check_branch
      %188 = sbr.rel (0) target = $region97
    $region96: #{tpu_custom_call.1} parent=1 // pred_region
      %189 = dma.done [#allocation16], 256
    $region97: #{tpu_custom_call.1} parent=1 // pred_fallthru
      _
    // Predicated region
    $region98: #{tpu_custom_call.1} parent=1 // pred_check
      _
    $region99: #{tpu_custom_call.1} parent=1 // pred_check_branch
      %191 = sbr.rel (0) target = $region101
    $region100: #{tpu_custom_call.1} parent=1 // pred_region
      %192 = dma.done [#allocation19], 16
    $region101: #{tpu_custom_call.1} parent=1 // pred_fallthru
      _
    // Predicated region
    $region102: #{tpu_custom_call.1} parent=1 // pred_check
      _
    $region103: #{tpu_custom_call.1} parent=1 // pred_check_branch
      %194 = sbr.rel (0) target = $region105
    $region104: #{tpu_custom_call.1} parent=1 // pred_region
      %195 = dma.done [#allocation19], 16
    $region105: #{tpu_custom_call.1} parent=1 // pred_fallthru
      _
    // Predicated region
    $region106: #{tpu_custom_call.1} parent=1 // pred_check
      _
    $region107: #{tpu_custom_call.1} parent=1 // pred_check_branch
      %197 = sbr.rel (0) target = $region109
    $region108: #{tpu_custom_call.1} parent=1 // pred_region
      %198 = dma.done [#allocation22], 16
    $region109: #{tpu_custom_call.1} parent=1 // pred_fallthru
      _
    %s200 = sld [smem:[#allocation2]]
    %v201 = vld [vmem:[#allocation9] sm:$0xff]
    %v202 = vld [vmem:[#allocation9 + $0x10] sm:$0xff]
    %v203 = vld [vmem:[#allocation9 + $0x20] sm:$0xff]
    %v204 = vld [vmem:[#allocation9 + $0x30] sm:$0xff]
    %v205 = vld [vmem:[#allocation9 + $0x40] sm:$0xff]
    %v206 = vld [vmem:[#allocation9 + $0x50] sm:$0xff]
    %v207 = vld [vmem:[#allocation9 + $0x60] sm:$0xff]
    %v208 = vld [vmem:[#allocation9 + $0x70] sm:$0xff]
    %v209 = vld [vmem:[#allocation9 + $0x80] sm:$0xff]
    %v210 = vld [vmem:[#allocation9 + $0x90] sm:$0xff]
    %v211 = vld [vmem:[#allocation9 + $0xa0] sm:$0xff]
    %v212 = vld [vmem:[#allocation9 + $0xb0] sm:$0xff]
    %v213 = vld [vmem:[#allocation9 + $0xc0] sm:$0xff]
    %v214 = vld [vmem:[#allocation9 + $0xd0] sm:$0xff]
    %v215 = vld [vmem:[#allocation9 + $0xe0] sm:$0xff]
    %v216 = vld [vmem:[#allocation9 + $0xf0] sm:$0xff]
    %v217 = vld [vmem:[#allocation9 + $0x100] sm:$0xff]
    %v218 = vld [vmem:[#allocation9 + $0x110] sm:$0xff]
    %v219 = vld [vmem:[#allocation9 + $0x120] sm:$0xff]
    %v220 = vld [vmem:[#allocation9 + $0x130] sm:$0xff]
    %v221 = vld [vmem:[#allocation9 + $0x140] sm:$0xff]
    %v222 = vld [vmem:[#allocation9 + $0x150] sm:$0xff]
    %v223 = vld [vmem:[#allocation9 + $0x160] sm:$0xff]
    %v224 = vld [vmem:[#allocation9 + $0x170] sm:$0xff]
    %v225 = vld [vmem:[#allocation9 + $0x180] sm:$0xff]
    %v226 = vld [vmem:[#allocation9 + $0x190] sm:$0xff]
    %v227 = vld [vmem:[#allocation9 + $0x1a0] sm:$0xff]
    %v228 = vld [vmem:[#allocation9 + $0x1b0] sm:$0xff]
    %v229 = vld [vmem:[#allocation9 + $0x1c0] sm:$0xff]
    %v230 = vld [vmem:[#allocation9 + $0x1d0] sm:$0xff]
    %v231 = vld [vmem:[#allocation9 + $0x1e0] sm:$0xff]
    %v232 = vld [vmem:[#allocation9 + $0x1f0] sm:$0xff]
    %v233 = vld [vmem:[#allocation9 + $0x200] sm:$0xff]
    %v234 = vld [vmem:[#allocation9 + $0x210] sm:$0xff]
    %v235 = vld [vmem:[#allocation9 + $0x220] sm:$0xff]
    %v236 = vld [vmem:[#allocation9 + $0x230] sm:$0xff]
    %v237 = vld [vmem:[#allocation9 + $0x240] sm:$0xff]
    %v238 = vld [vmem:[#allocation9 + $0x250] sm:$0xff]
    %v239 = vld [vmem:[#allocation9 + $0x260] sm:$0xff]
    %v240 = vld [vmem:[#allocation9 + $0x270] sm:$0xff]
    %v241 = vld [vmem:[#allocation9 + $0x280] sm:$0xff]
    %v242 = vld [vmem:[#allocation9 + $0x290] sm:$0xff]
    %v243 = vld [vmem:[#allocation9 + $0x2a0] sm:$0xff]
    %v244 = vld [vmem:[#allocation9 + $0x2b0] sm:$0xff]
    %v245 = vld [vmem:[#allocation9 + $0x2c0] sm:$0xff]
    %v246 = vld [vmem:[#allocation9 + $0x2d0] sm:$0xff]
    %v247 = vld [vmem:[#allocation9 + $0x2e0] sm:$0xff]
    %v248 = vld [vmem:[#allocation9 + $0x2f0] sm:$0xff]
    %v249 = vld [vmem:[#allocation9 + $0x300] sm:$0xff]
    %v250 = vld [vmem:[#allocation9 + $0x310] sm:$0xff]
    %v251 = vld [vmem:[#allocation9 + $0x320] sm:$0xff]
    %v252 = vld [vmem:[#allocation9 + $0x330] sm:$0xff]
    %v253 = vld [vmem:[#allocation9 + $0x340] sm:$0xff]
    %v254 = vld [vmem:[#allocation9 + $0x350] sm:$0xff]
    %v255 = vld [vmem:[#allocation9 + $0x360] sm:$0xff]
    %v256 = vld [vmem:[#allocation9 + $0x370] sm:$0xff]
    %v257 = vld [vmem:[#allocation9 + $0x380] sm:$0xff]
    %v258 = vld [vmem:[#allocation9 + $0x390] sm:$0xff]
    %v259 = vld [vmem:[#allocation9 + $0x3a0] sm:$0xff]
    %v260 = vld [vmem:[#allocation9 + $0x3b0] sm:$0xff]
    %v261 = vld [vmem:[#allocation9 + $0x3c0] sm:$0xff]
    %v262 = vld [vmem:[#allocation9 + $0x3d0] sm:$0xff]
    %v263 = vld [vmem:[#allocation9 + $0x3e0] sm:$0xff]
    %v264 = vld [vmem:[#allocation9 + $0x3f0] sm:$0xff]
    %v265 = vld [vmem:[#allocation9 + $0x400] sm:$0xff]
    %v266 = vld [vmem:[#allocation9 + $0x410] sm:$0xff]
    %v267 = vld [vmem:[#allocation9 + $0x420] sm:$0xff]
    %v268 = vld [vmem:[#allocation9 + $0x430] sm:$0xff]
    %v269 = vld [vmem:[#allocation9 + $0x440] sm:$0xff]
    %v270 = vld [vmem:[#allocation9 + $0x450] sm:$0xff]
    %v271 = vld [vmem:[#allocation9 + $0x460] sm:$0xff]
    %v272 = vld [vmem:[#allocation9 + $0x470] sm:$0xff]
    %v273 = vld [vmem:[#allocation9 + $0x480] sm:$0xff]
    %v274 = vld [vmem:[#allocation9 + $0x490] sm:$0xff]
    %v275 = vld [vmem:[#allocation9 + $0x4a0] sm:$0xff]
    %v276 = vld [vmem:[#allocation9 + $0x4b0] sm:$0xff]
    %v277 = vld [vmem:[#allocation9 + $0x4c0] sm:$0xff]
    %v278 = vld [vmem:[#allocation9 + $0x4d0] sm:$0xff]
    %v279 = vld [vmem:[#allocation9 + $0x4e0] sm:$0xff]
    %v280 = vld [vmem:[#allocation9 + $0x4f0] sm:$0xff]
    %v281 = vld [vmem:[#allocation9 + $0x500] sm:$0xff]
    %v282 = vld [vmem:[#allocation9 + $0x510] sm:$0xff]
    %v283 = vld [vmem:[#allocation9 + $0x520] sm:$0xff]
    %v284 = vld [vmem:[#allocation9 + $0x530] sm:$0xff]
    %v285 = vld [vmem:[#allocation9 + $0x540] sm:$0xff]
    %v286 = vld [vmem:[#allocation9 + $0x550] sm:$0xff]
    %v287 = vld [vmem:[#allocation9 + $0x560] sm:$0xff]
    %v288 = vld [vmem:[#allocation9 + $0x570] sm:$0xff]
    %v289 = vld [vmem:[#allocation9 + $0x580] sm:$0xff]
    %v290 = vld [vmem:[#allocation9 + $0x590] sm:$0xff]
    %v291 = vld [vmem:[#allocation9 + $0x5a0] sm:$0xff]
    %v292 = vld [vmem:[#allocation9 + $0x5b0] sm:$0xff]
    %v293 = vld [vmem:[#allocation9 + $0x5c0] sm:$0xff]
    %v294 = vld [vmem:[#allocation9 + $0x5d0] sm:$0xff]
    %v295 = vld [vmem:[#allocation9 + $0x5e0] sm:$0xff]
    %v296 = vld [vmem:[#allocation9 + $0x5f0] sm:$0xff]
    %v297 = vld [vmem:[#allocation9 + $0x600] sm:$0xff]
    %v298 = vld [vmem:[#allocation9 + $0x610] sm:$0xff]
    %v299 = vld [vmem:[#allocation9 + $0x620] sm:$0xff]
    %v300 = vld [vmem:[#allocation9 + $0x630] sm:$0xff]
    %v301 = vld [vmem:[#allocation9 + $0x640] sm:$0xff]
    %v302 = vld [vmem:[#allocation9 + $0x650] sm:$0xff]
    %v303 = vld [vmem:[#allocation9 + $0x660] sm:$0xff]
    %v304 = vld [vmem:[#allocation9 + $0x670] sm:$0xff]
    %v305 = vld [vmem:[#allocation9 + $0x680] sm:$0xff]
    %v306 = vld [vmem:[#allocation9 + $0x690] sm:$0xff]
    %v307 = vld [vmem:[#allocation9 + $0x6a0] sm:$0xff]
    %v308 = vld [vmem:[#allocation9 + $0x6b0] sm:$0xff]
    %v309 = vld [vmem:[#allocation9 + $0x6c0] sm:$0xff]
    %v310 = vld [vmem:[#allocation9 + $0x6d0] sm:$0xff]
    %v311 = vld [vmem:[#allocation9 + $0x6e0] sm:$0xff]
    %v312 = vld [vmem:[#allocation9 + $0x6f0] sm:$0xff]
    %v313 = vld [vmem:[#allocation9 + $0x700] sm:$0xff]
    %v314 = vld [vmem:[#allocation9 + $0x710] sm:$0xff]
    %v315 = vld [vmem:[#allocation9 + $0x720] sm:$0xff]
    %v316 = vld [vmem:[#allocation9 + $0x730] sm:$0xff]
    %v317 = vld [vmem:[#allocation9 + $0x740] sm:$0xff]
    %v318 = vld [vmem:[#allocation9 + $0x750] sm:$0xff]
    %v319 = vld [vmem:[#allocation9 + $0x760] sm:$0xff]
    %v320 = vld [vmem:[#allocation9 + $0x770] sm:$0xff]
    %v321 = vld [vmem:[#allocation9 + $0x780] sm:$0xff]
    %v322 = vld [vmem:[#allocation9 + $0x790] sm:$0xff]
    %v323 = vld [vmem:[#allocation9 + $0x7a0] sm:$0xff]
    %v324 = vld [vmem:[#allocation9 + $0x7b0] sm:$0xff]
    %v325 = vld [vmem:[#allocation9 + $0x7c0] sm:$0xff]
    %v326 = vld [vmem:[#allocation9 + $0x7d0] sm:$0xff]
    %v327 = vld [vmem:[#allocation9 + $0x7e0] sm:$0xff]
    %v328 = vld [vmem:[#allocation9 + $0x7f0] sm:$0xff]
    %v329 = vld [vmem:[#allocation9 + $0x800] sm:$0xff]
    %v330 = vld [vmem:[#allocation9 + $0x810] sm:$0xff]
    %v331 = vld [vmem:[#allocation9 + $0x820] sm:$0xff]
    %v332 = vld [vmem:[#allocation9 + $0x830] sm:$0xff]
    %v333 = vld [vmem:[#allocation9 + $0x840] sm:$0xff]
    %v334 = vld [vmem:[#allocation9 + $0x850] sm:$0xff]
    %v335 = vld [vmem:[#allocation9 + $0x860] sm:$0xff]
    %v336 = vld [vmem:[#allocation9 + $0x870] sm:$0xff]
    %v337 = vld [vmem:[#allocation9 + $0x880] sm:$0xff]
    %v338 = vld [vmem:[#allocation9 + $0x890] sm:$0xff]
    %v339 = vld [vmem:[#allocation9 + $0x8a0] sm:$0xff]
    %v340 = vld [vmem:[#allocation9 + $0x8b0] sm:$0xff]
    %v341 = vld [vmem:[#allocation9 + $0x8c0] sm:$0xff]
    %v342 = vld [vmem:[#allocation9 + $0x8d0] sm:$0xff]
    %v343 = vld [vmem:[#allocation9 + $0x8e0] sm:$0xff]
    %v344 = vld [vmem:[#allocation9 + $0x8f0] sm:$0xff]
    %v345 = vld [vmem:[#allocation9 + $0x900] sm:$0xff]
    %v346 = vld [vmem:[#allocation9 + $0x910] sm:$0xff]
    %v347 = vld [vmem:[#allocation9 + $0x920] sm:$0xff]
    %v348 = vld [vmem:[#allocation9 + $0x930] sm:$0xff]
    %v349 = vld [vmem:[#allocation9 + $0x940] sm:$0xff]
    %v350 = vld [vmem:[#allocation9 + $0x950] sm:$0xff]
    %v351 = vld [vmem:[#allocation9 + $0x960] sm:$0xff]
    %v352 = vld [vmem:[#allocation9 + $0x970] sm:$0xff]
    %v353 = vld [vmem:[#allocation9 + $0x980] sm:$0xff]
    %v354 = vld [vmem:[#allocation9 + $0x990] sm:$0xff]
    %v355 = vld [vmem:[#allocation9 + $0x9a0] sm:$0xff]
    %v356 = vld [vmem:[#allocation9 + $0x9b0] sm:$0xff]
    %v357 = vld [vmem:[#allocation9 + $0x9c0] sm:$0xff]
    %v358 = vld [vmem:[#allocation9 + $0x9d0] sm:$0xff]
    %v359 = vld [vmem:[#allocation9 + $0x9e0] sm:$0xff]
    %v360 = vld [vmem:[#allocation9 + $0x9f0] sm:$0xff]
    %v361 = vld [vmem:[#allocation9 + $0xa00] sm:$0xff]
    %v362 = vld [vmem:[#allocation9 + $0xa10] sm:$0xff]
    %v363 = vld [vmem:[#allocation9 + $0xa20] sm:$0xff]
    %v364 = vld [vmem:[#allocation9 + $0xa30] sm:$0xff]
    %v365 = vld [vmem:[#allocation9 + $0xa40] sm:$0xff]
    %v366 = vld [vmem:[#allocation9 + $0xa50] sm:$0xff]
    %v367 = vld [vmem:[#allocation9 + $0xa60] sm:$0xff]
    %v368 = vld [vmem:[#allocation9 + $0xa70] sm:$0xff]
    %v369 = vld [vmem:[#allocation9 + $0xa80] sm:$0xff]
    %v370 = vld [vmem:[#allocation9 + $0xa90] sm:$0xff]
    %v371 = vld [vmem:[#allocation9 + $0xaa0] sm:$0xff]
    %v372 = vld [vmem:[#allocation9 + $0xab0] sm:$0xff]
    %v373 = vld [vmem:[#allocation9 + $0xac0] sm:$0xff]
    %v374 = vld [vmem:[#allocation9 + $0xad0] sm:$0xff]
    %v375 = vld [vmem:[#allocation9 + $0xae0] sm:$0xff]
    %v376 = vld [vmem:[#allocation9 + $0xaf0] sm:$0xff]
    %v377 = vld [vmem:[#allocation9 + $0xb00] sm:$0xff]
    %v378 = vld [vmem:[#allocation9 + $0xb10] sm:$0xff]
    %v379 = vld [vmem:[#allocation9 + $0xb20] sm:$0xff]
    %v380 = vld [vmem:[#allocation9 + $0xb30] sm:$0xff]
    %v381 = vld [vmem:[#allocation9 + $0xb40] sm:$0xff]
    %v382 = vld [vmem:[#allocation9 + $0xb50] sm:$0xff]
    %v383 = vld [vmem:[#allocation9 + $0xb60] sm:$0xff]
    %v384 = vld [vmem:[#allocation9 + $0xb70] sm:$0xff]
    %v385 = vld [vmem:[#allocation9 + $0xb80] sm:$0xff]
    %v386 = vld [vmem:[#allocation9 + $0xb90] sm:$0xff]
    %v387 = vld [vmem:[#allocation9 + $0xba0] sm:$0xff]
    %v388 = vld [vmem:[#allocation9 + $0xbb0] sm:$0xff]
    %v389 = vld [vmem:[#allocation9 + $0xbc0] sm:$0xff]
    %v390 = vld [vmem:[#allocation9 + $0xbd0] sm:$0xff]
    %v391 = vld [vmem:[#allocation9 + $0xbe0] sm:$0xff]
    %v392 = vld [vmem:[#allocation9 + $0xbf0] sm:$0xff]
    %v393 = vld [vmem:[#allocation9 + $0xc00] sm:$0xff]
    %v394 = vld [vmem:[#allocation9 + $0xc10] sm:$0xff]
    %v395 = vld [vmem:[#allocation9 + $0xc20] sm:$0xff]
    %v396 = vld [vmem:[#allocation9 + $0xc30] sm:$0xff]
    %v397 = vld [vmem:[#allocation9 + $0xc40] sm:$0xff]
    %v398 = vld [vmem:[#allocation9 + $0xc50] sm:$0xff]
    %v399 = vld [vmem:[#allocation9 + $0xc60] sm:$0xff]
    %v400 = vld [vmem:[#allocation9 + $0xc70] sm:$0xff]
    %v401 = vld [vmem:[#allocation9 + $0xc80] sm:$0xff]
    %v402 = vld [vmem:[#allocation9 + $0xc90] sm:$0xff]
    %v403 = vld [vmem:[#allocation9 + $0xca0] sm:$0xff]
    %v404 = vld [vmem:[#allocation9 + $0xcb0] sm:$0xff]
    %v405 = vld [vmem:[#allocation9 + $0xcc0] sm:$0xff]
    %v406 = vld [vmem:[#allocation9 + $0xcd0] sm:$0xff]
    %v407 = vld [vmem:[#allocation9 + $0xce0] sm:$0xff]
    %v408 = vld [vmem:[#allocation9 + $0xcf0] sm:$0xff]
    %v409 = vld [vmem:[#allocation9 + $0xd00] sm:$0xff]
    %v410 = vld [vmem:[#allocation9 + $0xd10] sm:$0xff]
    %v411 = vld [vmem:[#allocation9 + $0xd20] sm:$0xff]
    %v412 = vld [vmem:[#allocation9 + $0xd30] sm:$0xff]
    %v413 = vld [vmem:[#allocation9 + $0xd40] sm:$0xff]
    %v414 = vld [vmem:[#allocation9 + $0xd50] sm:$0xff]
    %v415 = vld [vmem:[#allocation9 + $0xd60] sm:$0xff]
    %v416 = vld [vmem:[#allocation9 + $0xd70] sm:$0xff]
    %v417 = vld [vmem:[#allocation9 + $0xd80] sm:$0xff]
    %v418 = vld [vmem:[#allocation9 + $0xd90] sm:$0xff]
    %v419 = vld [vmem:[#allocation9 + $0xda0] sm:$0xff]
    %v420 = vld [vmem:[#allocation9 + $0xdb0] sm:$0xff]
    %v421 = vld [vmem:[#allocation9 + $0xdc0] sm:$0xff]
    %v422 = vld [vmem:[#allocation9 + $0xdd0] sm:$0xff]
    %v423 = vld [vmem:[#allocation9 + $0xde0] sm:$0xff]
    %v424 = vld [vmem:[#allocation9 + $0xdf0] sm:$0xff]
    %v425 = vld [vmem:[#allocation9 + $0xe00] sm:$0xff]
    %v426 = vld [vmem:[#allocation9 + $0xe10] sm:$0xff]
    %v427 = vld [vmem:[#allocation9 + $0xe20] sm:$0xff]
    %v428 = vld [vmem:[#allocation9 + $0xe30] sm:$0xff]
    %v429 = vld [vmem:[#allocation9 + $0xe40] sm:$0xff]
    %v430 = vld [vmem:[#allocation9 + $0xe50] sm:$0xff]
    %v431 = vld [vmem:[#allocation9 + $0xe60] sm:$0xff]
    %v432 = vld [vmem:[#allocation9 + $0xe70] sm:$0xff]
    %v433 = vld [vmem:[#allocation9 + $0xe80] sm:$0xff]
    %v434 = vld [vmem:[#allocation9 + $0xe90] sm:$0xff]
    %v435 = vld [vmem:[#allocation9 + $0xea0] sm:$0xff]
    %v436 = vld [vmem:[#allocation9 + $0xeb0] sm:$0xff]
    %v437 = vld [vmem:[#allocation9 + $0xec0] sm:$0xff]
    %v438 = vld [vmem:[#allocation9 + $0xed0] sm:$0xff]
    %v439 = vld [vmem:[#allocation9 + $0xee0] sm:$0xff]
    %v440 = vld [vmem:[#allocation9 + $0xef0] sm:$0xff]
    %v441 = vld [vmem:[#allocation9 + $0xf00] sm:$0xff]
    %v442 = vld [vmem:[#allocation9 + $0xf10] sm:$0xff]
    %v443 = vld [vmem:[#allocation9 + $0xf20] sm:$0xff]
    %v444 = vld [vmem:[#allocation9 + $0xf30] sm:$0xff]
    %v445 = vld [vmem:[#allocation9 + $0xf40] sm:$0xff]
    %v446 = vld [vmem:[#allocation9 + $0xf50] sm:$0xff]
    %v447 = vld [vmem:[#allocation9 + $0xf60] sm:$0xff]
    %v448 = vld [vmem:[#allocation9 + $0xf70] sm:$0xff]
    %v449 = vld [vmem:[#allocation9 + $0xf80] sm:$0xff]
    %v450 = vld [vmem:[#allocation9 + $0xf90] sm:$0xff]
    %v451 = vld [vmem:[#allocation9 + $0xfa0] sm:$0xff]
    %v452 = vld [vmem:[#allocation9 + $0xfb0] sm:$0xff]
    %v453 = vld [vmem:[#allocation9 + $0xfc0] sm:$0xff]
    %v454 = vld [vmem:[#allocation9 + $0xfd0] sm:$0xff]
    %v455 = vld [vmem:[#allocation9 + $0xfe0] sm:$0xff]
    %v456 = vld [vmem:[#allocation9 + $0xff0] sm:$0xff]
    %v457 = vunpack.c.l.s8.bf16 %v201
    %v458 = vunpack.c.h.s8.bf16 %v201
    %v459 = vunpack.c.l.s8.bf16 %v202
    %v460 = vunpack.c.h.s8.bf16 %v202
    %v461 = vunpack.c.l.s8.bf16 %v203
    %v462 = vunpack.c.h.s8.bf16 %v203
    %v463 = vunpack.c.l.s8.bf16 %v204
    %v464 = vunpack.c.h.s8.bf16 %v204
    %v465 = vunpack.c.l.s8.bf16 %v205
    %v466 = vunpack.c.h.s8.bf16 %v205
    %v467 = vunpack.c.l.s8.bf16 %v206
    %v468 = vunpack.c.h.s8.bf16 %v206
    %v469 = vunpack.c.l.s8.bf16 %v207
    %v470 = vunpack.c.h.s8.bf16 %v207
    %v471 = vunpack.c.l.s8.bf16 %v208
    %v472 = vunpack.c.h.s8.bf16 %v208
    %v473 = vunpack.c.l.s8.bf16 %v209
    %v474 = vunpack.c.h.s8.bf16 %v209
    %v475 = vunpack.c.l.s8.bf16 %v210
    %v476 = vunpack.c.h.s8.bf16 %v210
    %v477 = vunpack.c.l.s8.bf16 %v211
    %v478 = vunpack.c.h.s8.bf16 %v211
    %v479 = vunpack.c.l.s8.bf16 %v212
    %v480 = vunpack.c.h.s8.bf16 %v212
    %v481 = vunpack.c.l.s8.bf16 %v213
    %v482 = vunpack.c.h.s8.bf16 %v213
    %v483 = vunpack.c.l.s8.bf16 %v214
    %v484 = vunpack.c.h.s8.bf16 %v214
    %v485 = vunpack.c.l.s8.bf16 %v215
    %v486 = vunpack.c.h.s8.bf16 %v215
    %v487 = vunpack.c.l.s8.bf16 %v216
    %v488 = vunpack.c.h.s8.bf16 %v216
    %v489 = vunpack.c.l.s8.bf16 %v217
    %v490 = vunpack.c.h.s8.bf16 %v217
    %v491 = vunpack.c.l.s8.bf16 %v218
    %v492 = vunpack.c.h.s8.bf16 %v218
    %v493 = vunpack.c.l.s8.bf16 %v219
    %v494 = vunpack.c.h.s8.bf16 %v219
    %v495 = vunpack.c.l.s8.bf16 %v220
    %v496 = vunpack.c.h.s8.bf16 %v220
    %v497 = vunpack.c.l.s8.bf16 %v221
    %v498 = vunpack.c.h.s8.bf16 %v221
    %v499 = vunpack.c.l.s8.bf16 %v222
    %v500 = vunpack.c.h.s8.bf16 %v222
    %v501 = vunpack.c.l.s8.bf16 %v223
    %v502 = vunpack.c.h.s8.bf16 %v223
    %v503 = vunpack.c.l.s8.bf16 %v224
    %v504 = vunpack.c.h.s8.bf16 %v224
    %v505 = vunpack.c.l.s8.bf16 %v225
    %v506 = vunpack.c.h.s8.bf16 %v225
    %v507 = vunpack.c.l.s8.bf16 %v226
    %v508 = vunpack.c.h.s8.bf16 %v226
    %v509 = vunpack.c.l.s8.bf16 %v227
    %v510 = vunpack.c.h.s8.bf16 %v227
    %v511 = vunpack.c.l.s8.bf16 %v228
    %v512 = vunpack.c.h.s8.bf16 %v228
    %v513 = vunpack.c.l.s8.bf16 %v229
    %v514 = vunpack.c.h.s8.bf16 %v229
    %v515 = vunpack.c.l.s8.bf16 %v230
    %v516 = vunpack.c.h.s8.bf16 %v230
    %v517 = vunpack.c.l.s8.bf16 %v231
    %v518 = vunpack.c.h.s8.bf16 %v231
    %v519 = vunpack.c.l.s8.bf16 %v232
    %v520 = vunpack.c.h.s8.bf16 %v232
    %v521 = vunpack.c.l.s8.bf16 %v233
    %v522 = vunpack.c.h.s8.bf16 %v233
    %v523 = vunpack.c.l.s8.bf16 %v234
    %v524 = vunpack.c.h.s8.bf16 %v234
    %v525 = vunpack.c.l.s8.bf16 %v235
    %v526 = vunpack.c.h.s8.bf16 %v235
    %v527 = vunpack.c.l.s8.bf16 %v236
    %v528 = vunpack.c.h.s8.bf16 %v236
    %v529 = vunpack.c.l.s8.bf16 %v237
    %v530 = vunpack.c.h.s8.bf16 %v237
    %v531 = vunpack.c.l.s8.bf16 %v238
    %v532 = vunpack.c.h.s8.bf16 %v238
    %v533 = vunpack.c.l.s8.bf16 %v239
    %v534 = vunpack.c.h.s8.bf16 %v239
    %v535 = vunpack.c.l.s8.bf16 %v240
    %v536 = vunpack.c.h.s8.bf16 %v240
    %v537 = vunpack.c.l.s8.bf16 %v241
    %v538 = vunpack.c.h.s8.bf16 %v241
    %v539 = vunpack.c.l.s8.bf16 %v242
    %v540 = vunpack.c.h.s8.bf16 %v242
    %v541 = vunpack.c.l.s8.bf16 %v243
    %v542 = vunpack.c.h.s8.bf16 %v243
    %v543 = vunpack.c.l.s8.bf16 %v244
    %v544 = vunpack.c.h.s8.bf16 %v244
    %v545 = vunpack.c.l.s8.bf16 %v245
    %v546 = vunpack.c.h.s8.bf16 %v245
    %v547 = vunpack.c.l.s8.bf16 %v246
    %v548 = vunpack.c.h.s8.bf16 %v246
    %v549 = vunpack.c.l.s8.bf16 %v247
    %v550 = vunpack.c.h.s8.bf16 %v247
    %v551 = vunpack.c.l.s8.bf16 %v248
    %v552 = vunpack.c.h.s8.bf16 %v248
    %v553 = vunpack.c.l.s8.bf16 %v249
    %v554 = vunpack.c.h.s8.bf16 %v249
    %v555 = vunpack.c.l.s8.bf16 %v250
    %v556 = vunpack.c.h.s8.bf16 %v250
    %v557 = vunpack.c.l.s8.bf16 %v251
    %v558 = vunpack.c.h.s8.bf16 %v251
    %v559 = vunpack.c.l.s8.bf16 %v252
    %v560 = vunpack.c.h.s8.bf16 %v252
    %v561 = vunpack.c.l.s8.bf16 %v253
    %v562 = vunpack.c.h.s8.bf16 %v253
    %v563 = vunpack.c.l.s8.bf16 %v254
    %v564 = vunpack.c.h.s8.bf16 %v254
    %v565 = vunpack.c.l.s8.bf16 %v255
    %v566 = vunpack.c.h.s8.bf16 %v255
    %v567 = vunpack.c.l.s8.bf16 %v256
    %v568 = vunpack.c.h.s8.bf16 %v256
    %v569 = vunpack.c.l.s8.bf16 %v257
    %v570 = vunpack.c.h.s8.bf16 %v257
    %v571 = vunpack.c.l.s8.bf16 %v258
    %v572 = vunpack.c.h.s8.bf16 %v258
    %v573 = vunpack.c.l.s8.bf16 %v259
    %v574 = vunpack.c.h.s8.bf16 %v259
    %v575 = vunpack.c.l.s8.bf16 %v260
    %v576 = vunpack.c.h.s8.bf16 %v260
    %v577 = vunpack.c.l.s8.bf16 %v261
    %v578 = vunpack.c.h.s8.bf16 %v261
    %v579 = vunpack.c.l.s8.bf16 %v262
    %v580 = vunpack.c.h.s8.bf16 %v262
    %v581 = vunpack.c.l.s8.bf16 %v263
    %v582 = vunpack.c.h.s8.bf16 %v263
    %v583 = vunpack.c.l.s8.bf16 %v264
    %v584 = vunpack.c.h.s8.bf16 %v264
    %v585 = vunpack.c.l.s8.bf16 %v265
    %v586 = vunpack.c.h.s8.bf16 %v265
    %v587 = vunpack.c.l.s8.bf16 %v266
    %v588 = vunpack.c.h.s8.bf16 %v266
    %v589 = vunpack.c.l.s8.bf16 %v267
    %v590 = vunpack.c.h.s8.bf16 %v267
    %v591 = vunpack.c.l.s8.bf16 %v268
    %v592 = vunpack.c.h.s8.bf16 %v268
    %v593 = vunpack.c.l.s8.bf16 %v269
    %v594 = vunpack.c.h.s8.bf16 %v269
    %v595 = vunpack.c.l.s8.bf16 %v270
    %v596 = vunpack.c.h.s8.bf16 %v270
    %v597 = vunpack.c.l.s8.bf16 %v271
    %v598 = vunpack.c.h.s8.bf16 %v271
    %v599 = vunpack.c.l.s8.bf16 %v272
    %v600 = vunpack.c.h.s8.bf16 %v272
    %v601 = vunpack.c.l.s8.bf16 %v273
    %v602 = vunpack.c.h.s8.bf16 %v273
    %v603 = vunpack.c.l.s8.bf16 %v274
    %v604 = vunpack.c.h.s8.bf16 %v274
    %v605 = vunpack.c.l.s8.bf16 %v275
    %v606 = vunpack.c.h.s8.bf16 %v275
    %v607 = vunpack.c.l.s8.bf16 %v276
    %v608 = vunpack.c.h.s8.bf16 %v276
    %v609 = vunpack.c.l.s8.bf16 %v277
    %v610 = vunpack.c.h.s8.bf16 %v277
    %v611 = vunpack.c.l.s8.bf16 %v278
    %v612 = vunpack.c.h.s8.bf16 %v278
    %v613 = vunpack.c.l.s8.bf16 %v279
    %v614 = vunpack.c.h.s8.bf16 %v279
    %v615 = vunpack.c.l.s8.bf16 %v280
    %v616 = vunpack.c.h.s8.bf16 %v280
    %v617 = vunpack.c.l.s8.bf16 %v281
    %v618 = vunpack.c.h.s8.bf16 %v281
    %v619 = vunpack.c.l.s8.bf16 %v282
    %v620 = vunpack.c.h.s8.bf16 %v282
    %v621 = vunpack.c.l.s8.bf16 %v283
    %v622 = vunpack.c.h.s8.bf16 %v283
    %v623 = vunpack.c.l.s8.bf16 %v284
    %v624 = vunpack.c.h.s8.bf16 %v284
    %v625 = vunpack.c.l.s8.bf16 %v285
    %v626 = vunpack.c.h.s8.bf16 %v285
    %v627 = vunpack.c.l.s8.bf16 %v286
    %v628 = vunpack.c.h.s8.bf16 %v286
    %v629 = vunpack.c.l.s8.bf16 %v287
    %v630 = vunpack.c.h.s8.bf16 %v287
    %v631 = vunpack.c.l.s8.bf16 %v288
    %v632 = vunpack.c.h.s8.bf16 %v288
    %v633 = vunpack.c.l.s8.bf16 %v289
    %v634 = vunpack.c.h.s8.bf16 %v289
    %v635 = vunpack.c.l.s8.bf16 %v290
    %v636 = vunpack.c.h.s8.bf16 %v290
    %v637 = vunpack.c.l.s8.bf16 %v291
    %v638 = vunpack.c.h.s8.bf16 %v291
    %v639 = vunpack.c.l.s8.bf16 %v292
    %v640 = vunpack.c.h.s8.bf16 %v292
    %v641 = vunpack.c.l.s8.bf16 %v293
    %v642 = vunpack.c.h.s8.bf16 %v293
    %v643 = vunpack.c.l.s8.bf16 %v294
    %v644 = vunpack.c.h.s8.bf16 %v294
    %v645 = vunpack.c.l.s8.bf16 %v295
    %v646 = vunpack.c.h.s8.bf16 %v295
    %v647 = vunpack.c.l.s8.bf16 %v296
    %v648 = vunpack.c.h.s8.bf16 %v296
    %v649 = vunpack.c.l.s8.bf16 %v297
    %v650 = vunpack.c.h.s8.bf16 %v297
    %v651 = vunpack.c.l.s8.bf16 %v298
    %v652 = vunpack.c.h.s8.bf16 %v298
    %v653 = vunpack.c.l.s8.bf16 %v299
    %v654 = vunpack.c.h.s8.bf16 %v299
    %v655 = vunpack.c.l.s8.bf16 %v300
    %v656 = vunpack.c.h.s8.bf16 %v300
    %v657 = vunpack.c.l.s8.bf16 %v301
    %v658 = vunpack.c.h.s8.bf16 %v301
    %v659 = vunpack.c.l.s8.bf16 %v302
    %v660 = vunpack.c.h.s8.bf16 %v302
    %v661 = vunpack.c.l.s8.bf16 %v303
    %v662 = vunpack.c.h.s8.bf16 %v303
    %v663 = vunpack.c.l.s8.bf16 %v304
    %v664 = vunpack.c.h.s8.bf16 %v304
    %v665 = vunpack.c.l.s8.bf16 %v305
    %v666 = vunpack.c.h.s8.bf16 %v305
    %v667 = vunpack.c.l.s8.bf16 %v306
    %v668 = vunpack.c.h.s8.bf16 %v306
    %v669 = vunpack.c.l.s8.bf16 %v307
    %v670 = vunpack.c.h.s8.bf16 %v307
    %v671 = vunpack.c.l.s8.bf16 %v308
    %v672 = vunpack.c.h.s8.bf16 %v308
    %v673 = vunpack.c.l.s8.bf16 %v309
    %v674 = vunpack.c.h.s8.bf16 %v309
    %v675 = vunpack.c.l.s8.bf16 %v310
    %v676 = vunpack.c.h.s8.bf16 %v310
    %v677 = vunpack.c.l.s8.bf16 %v311
    %v678 = vunpack.c.h.s8.bf16 %v311
    %v679 = vunpack.c.l.s8.bf16 %v312
    %v680 = vunpack.c.h.s8.bf16 %v312
    %v681 = vunpack.c.l.s8.bf16 %v313
    %v682 = vunpack.c.h.s8.bf16 %v313
    %v683 = vunpack.c.l.s8.bf16 %v314
    %v684 = vunpack.c.h.s8.bf16 %v314
    %v685 = vunpack.c.l.s8.bf16 %v315
    %v686 = vunpack.c.h.s8.bf16 %v315
    %v687 = vunpack.c.l.s8.bf16 %v316
    %v688 = vunpack.c.h.s8.bf16 %v316
    %v689 = vunpack.c.l.s8.bf16 %v317
    %v690 = vunpack.c.h.s8.bf16 %v317
    %v691 = vunpack.c.l.s8.bf16 %v318
    %v692 = vunpack.c.h.s8.bf16 %v318
    %v693 = vunpack.c.l.s8.bf16 %v319
    %v694 = vunpack.c.h.s8.bf16 %v319
    %v695 = vunpack.c.l.s8.bf16 %v320
    %v696 = vunpack.c.h.s8.bf16 %v320
    %v697 = vunpack.c.l.s8.bf16 %v321
    %v698 = vunpack.c.h.s8.bf16 %v321
    %v699 = vunpack.c.l.s8.bf16 %v322
    %v700 = vunpack.c.h.s8.bf16 %v322
    %v701 = vunpack.c.l.s8.bf16 %v323
    %v702 = vunpack.c.h.s8.bf16 %v323
    %v703 = vunpack.c.l.s8.bf16 %v324
    %v704 = vunpack.c.h.s8.bf16 %v324
    %v705 = vunpack.c.l.s8.bf16 %v325
    %v706 = vunpack.c.h.s8.bf16 %v325
    %v707 = vunpack.c.l.s8.bf16 %v326
    %v708 = vunpack.c.h.s8.bf16 %v326
    %v709 = vunpack.c.l.s8.bf16 %v327
    %v710 = vunpack.c.h.s8.bf16 %v327
    %v711 = vunpack.c.l.s8.bf16 %v328
    %v712 = vunpack.c.h.s8.bf16 %v328
    %v713 = vunpack.c.l.s8.bf16 %v329
    %v714 = vunpack.c.h.s8.bf16 %v329
    %v715 = vunpack.c.l.s8.bf16 %v330
    %v716 = vunpack.c.h.s8.bf16 %v330
    %v717 = vunpack.c.l.s8.bf16 %v331
    %v718 = vunpack.c.h.s8.bf16 %v331
    %v719 = vunpack.c.l.s8.bf16 %v332
    %v720 = vunpack.c.h.s8.bf16 %v332
    %v721 = vunpack.c.l.s8.bf16 %v333
    %v722 = vunpack.c.h.s8.bf16 %v333
    %v723 = vunpack.c.l.s8.bf16 %v334
    %v724 = vunpack.c.h.s8.bf16 %v334
    %v725 = vunpack.c.l.s8.bf16 %v335
    %v726 = vunpack.c.h.s8.bf16 %v335
    %v727 = vunpack.c.l.s8.bf16 %v336
    %v728 = vunpack.c.h.s8.bf16 %v336
    %v729 = vunpack.c.l.s8.bf16 %v337
    %v730 = vunpack.c.h.s8.bf16 %v337
    %v731 = vunpack.c.l.s8.bf16 %v338
    %v732 = vunpack.c.h.s8.bf16 %v338
    %v733 = vunpack.c.l.s8.bf16 %v339
    %v734 = vunpack.c.h.s8.bf16 %v339
    %v735 = vunpack.c.l.s8.bf16 %v340
    %v736 = vunpack.c.h.s8.bf16 %v340
    %v737 = vunpack.c.l.s8.bf16 %v341
    %v738 = vunpack.c.h.s8.bf16 %v341
    %v739 = vunpack.c.l.s8.bf16 %v342
    %v740 = vunpack.c.h.s8.bf16 %v342
    %v741 = vunpack.c.l.s8.bf16 %v343
    %v742 = vunpack.c.h.s8.bf16 %v343
    %v743 = vunpack.c.l.s8.bf16 %v344
    %v744 = vunpack.c.h.s8.bf16 %v344
    %v745 = vunpack.c.l.s8.bf16 %v345
    %v746 = vunpack.c.h.s8.bf16 %v345
    %v747 = vunpack.c.l.s8.bf16 %v346
    %v748 = vunpack.c.h.s8.bf16 %v346
    %v749 = vunpack.c.l.s8.bf16 %v347
    %v750 = vunpack.c.h.s8.bf16 %v347
    %v751 = vunpack.c.l.s8.bf16 %v348
    %v752 = vunpack.c.h.s8.bf16 %v348
    %v753 = vunpack.c.l.s8.bf16 %v349
    %v754 = vunpack.c.h.s8.bf16 %v349
    %v755 = vunpack.c.l.s8.bf16 %v350
    %v756 = vunpack.c.h.s8.bf16 %v350
    %v757 = vunpack.c.l.s8.bf16 %v351
    %v758 = vunpack.c.h.s8.bf16 %v351
    %v759 = vunpack.c.l.s8.bf16 %v352
    %v760 = vunpack.c.h.s8.bf16 %v352
    %v761 = vunpack.c.l.s8.bf16 %v353
    %v762 = vunpack.c.h.s8.bf16 %v353
    %v763 = vunpack.c.l.s8.bf16 %v354
    %v764 = vunpack.c.h.s8.bf16 %v354
    %v765 = vunpack.c.l.s8.bf16 %v355
    %v766 = vunpack.c.h.s8.bf16 %v355
    %v767 = vunpack.c.l.s8.bf16 %v356
    %v768 = vunpack.c.h.s8.bf16 %v356
    %v769 = vunpack.c.l.s8.bf16 %v357
    %v770 = vunpack.c.h.s8.bf16 %v357
    %v771 = vunpack.c.l.s8.bf16 %v358
    %v772 = vunpack.c.h.s8.bf16 %v358
    %v773 = vunpack.c.l.s8.bf16 %v359
    %v774 = vunpack.c.h.s8.bf16 %v359
    %v775 = vunpack.c.l.s8.bf16 %v360
    %v776 = vunpack.c.h.s8.bf16 %v360
    %v777 = vunpack.c.l.s8.bf16 %v361
    %v778 = vunpack.c.h.s8.bf16 %v361
    %v779 = vunpack.c.l.s8.bf16 %v362
    %v780 = vunpack.c.h.s8.bf16 %v362
    %v781 = vunpack.c.l.s8.bf16 %v363
    %v782 = vunpack.c.h.s8.bf16 %v363
    %v783 = vunpack.c.l.s8.bf16 %v364
    %v784 = vunpack.c.h.s8.bf16 %v364
    %v785 = vunpack.c.l.s8.bf16 %v365
    %v786 = vunpack.c.h.s8.bf16 %v365
    %v787 = vunpack.c.l.s8.bf16 %v366
    %v788 = vunpack.c.h.s8.bf16 %v366
    %v789 = vunpack.c.l.s8.bf16 %v367
    %v790 = vunpack.c.h.s8.bf16 %v367
    %v791 = vunpack.c.l.s8.bf16 %v368
    %v792 = vunpack.c.h.s8.bf16 %v368
    %v793 = vunpack.c.l.s8.bf16 %v369
    %v794 = vunpack.c.h.s8.bf16 %v369
    %v795 = vunpack.c.l.s8.bf16 %v370
    %v796 = vunpack.c.h.s8.bf16 %v370
    %v797 = vunpack.c.l.s8.bf16 %v371
    %v798 = vunpack.c.h.s8.bf16 %v371
    %v799 = vunpack.c.l.s8.bf16 %v372
    %v800 = vunpack.c.h.s8.bf16 %v372
    %v801 = vunpack.c.l.s8.bf16 %v373
    %v802 = vunpack.c.h.s8.bf16 %v373
    %v803 = vunpack.c.l.s8.bf16 %v374
    %v804 = vunpack.c.h.s8.bf16 %v374
    %v805 = vunpack.c.l.s8.bf16 %v375
    %v806 = vunpack.c.h.s8.bf16 %v375
    %v807 = vunpack.c.l.s8.bf16 %v376
    %v808 = vunpack.c.h.s8.bf16 %v376
    %v809 = vunpack.c.l.s8.bf16 %v377
    %v810 = vunpack.c.h.s8.bf16 %v377
    %v811 = vunpack.c.l.s8.bf16 %v378
    %v812 = vunpack.c.h.s8.bf16 %v378
    %v813 = vunpack.c.l.s8.bf16 %v379
    %v814 = vunpack.c.h.s8.bf16 %v379
    %v815 = vunpack.c.l.s8.bf16 %v380
    %v816 = vunpack.c.h.s8.bf16 %v380
    %v817 = vunpack.c.l.s8.bf16 %v381
    %v818 = vunpack.c.h.s8.bf16 %v381
    %v819 = vunpack.c.l.s8.bf16 %v382
    %v820 = vunpack.c.h.s8.bf16 %v382
    %v821 = vunpack.c.l.s8.bf16 %v383
    %v822 = vunpack.c.h.s8.bf16 %v383
    %v823 = vunpack.c.l.s8.bf16 %v384
    %v824 = vunpack.c.h.s8.bf16 %v384
    %v825 = vunpack.c.l.s8.bf16 %v385
    %v826 = vunpack.c.h.s8.bf16 %v385
    %v827 = vunpack.c.l.s8.bf16 %v386
    %v828 = vunpack.c.h.s8.bf16 %v386
    %v829 = vunpack.c.l.s8.bf16 %v387
    %v830 = vunpack.c.h.s8.bf16 %v387
    %v831 = vunpack.c.l.s8.bf16 %v388
    %v832 = vunpack.c.h.s8.bf16 %v388
    %v833 = vunpack.c.l.s8.bf16 %v389
    %v834 = vunpack.c.h.s8.bf16 %v389
    %v835 = vunpack.c.l.s8.bf16 %v390
    %v836 = vunpack.c.h.s8.bf16 %v390
    %v837 = vunpack.c.l.s8.bf16 %v391
    %v838 = vunpack.c.h.s8.bf16 %v391
    %v839 = vunpack.c.l.s8.bf16 %v392
    %v840 = vunpack.c.h.s8.bf16 %v392
    %v841 = vunpack.c.l.s8.bf16 %v393
    %v842 = vunpack.c.h.s8.bf16 %v393
    %v843 = vunpack.c.l.s8.bf16 %v394
    %v844 = vunpack.c.h.s8.bf16 %v394
    %v845 = vunpack.c.l.s8.bf16 %v395
    %v846 = vunpack.c.h.s8.bf16 %v395
    %v847 = vunpack.c.l.s8.bf16 %v396
    %v848 = vunpack.c.h.s8.bf16 %v396
    %v849 = vunpack.c.l.s8.bf16 %v397
    %v850 = vunpack.c.h.s8.bf16 %v397
    %v851 = vunpack.c.l.s8.bf16 %v398
    %v852 = vunpack.c.h.s8.bf16 %v398
    %v853 = vunpack.c.l.s8.bf16 %v399
    %v854 = vunpack.c.h.s8.bf16 %v399
    %v855 = vunpack.c.l.s8.bf16 %v400
    %v856 = vunpack.c.h.s8.bf16 %v400
    %v857 = vunpack.c.l.s8.bf16 %v401
    %v858 = vunpack.c.h.s8.bf16 %v401
    %v859 = vunpack.c.l.s8.bf16 %v402
    %v860 = vunpack.c.h.s8.bf16 %v402
    %v861 = vunpack.c.l.s8.bf16 %v403
    %v862 = vunpack.c.h.s8.bf16 %v403
    %v863 = vunpack.c.l.s8.bf16 %v404
    %v864 = vunpack.c.h.s8.bf16 %v404
    %v865 = vunpack.c.l.s8.bf16 %v405
    %v866 = vunpack.c.h.s8.bf16 %v405
    %v867 = vunpack.c.l.s8.bf16 %v406
    %v868 = vunpack.c.h.s8.bf16 %v406
    %v869 = vunpack.c.l.s8.bf16 %v407
    %v870 = vunpack.c.h.s8.bf16 %v407
    %v871 = vunpack.c.l.s8.bf16 %v408
    %v872 = vunpack.c.h.s8.bf16 %v408
    %v873 = vunpack.c.l.s8.bf16 %v409
    %v874 = vunpack.c.h.s8.bf16 %v409
    %v875 = vunpack.c.l.s8.bf16 %v410
    %v876 = vunpack.c.h.s8.bf16 %v410
    %v877 = vunpack.c.l.s8.bf16 %v411
    %v878 = vunpack.c.h.s8.bf16 %v411
    %v879 = vunpack.c.l.s8.bf16 %v412
    %v880 = vunpack.c.h.s8.bf16 %v412
    %v881 = vunpack.c.l.s8.bf16 %v413
    %v882 = vunpack.c.h.s8.bf16 %v413
    %v883 = vunpack.c.l.s8.bf16 %v414
    %v884 = vunpack.c.h.s8.bf16 %v414
    %v885 = vunpack.c.l.s8.bf16 %v415
    %v886 = vunpack.c.h.s8.bf16 %v415
    %v887 = vunpack.c.l.s8.bf16 %v416
    %v888 = vunpack.c.h.s8.bf16 %v416
    %v889 = vunpack.c.l.s8.bf16 %v417
    %v890 = vunpack.c.h.s8.bf16 %v417
    %v891 = vunpack.c.l.s8.bf16 %v418
    %v892 = vunpack.c.h.s8.bf16 %v418
    %v893 = vunpack.c.l.s8.bf16 %v419
    %v894 = vunpack.c.h.s8.bf16 %v419
    %v895 = vunpack.c.l.s8.bf16 %v420
    %v896 = vunpack.c.h.s8.bf16 %v420
    %v897 = vunpack.c.l.s8.bf16 %v421
    %v898 = vunpack.c.h.s8.bf16 %v421
    %v899 = vunpack.c.l.s8.bf16 %v422
    %v900 = vunpack.c.h.s8.bf16 %v422
    %v901 = vunpack.c.l.s8.bf16 %v423
    %v902 = vunpack.c.h.s8.bf16 %v423
    %v903 = vunpack.c.l.s8.bf16 %v424
    %v904 = vunpack.c.h.s8.bf16 %v424
    %v905 = vunpack.c.l.s8.bf16 %v425
    %v906 = vunpack.c.h.s8.bf16 %v425
    %v907 = vunpack.c.l.s8.bf16 %v426
    %v908 = vunpack.c.h.s8.bf16 %v426
    %v909 = vunpack.c.l.s8.bf16 %v427
    %v910 = vunpack.c.h.s8.bf16 %v427
    %v911 = vunpack.c.l.s8.bf16 %v428
    %v912 = vunpack.c.h.s8.bf16 %v428
    %v913 = vunpack.c.l.s8.bf16 %v429
    %v914 = vunpack.c.h.s8.bf16 %v429
    %v915 = vunpack.c.l.s8.bf16 %v430
    %v916 = vunpack.c.h.s8.bf16 %v430
    %v917 = vunpack.c.l.s8.bf16 %v431
    %v918 = vunpack.c.h.s8.bf16 %v431
    %v919 = vunpack.c.l.s8.bf16 %v432
    %v920 = vunpack.c.h.s8.bf16 %v432
    %v921 = vunpack.c.l.s8.bf16 %v433
    %v922 = vunpack.c.h.s8.bf16 %v433
    %v923 = vunpack.c.l.s8.bf16 %v434
    %v924 = vunpack.c.h.s8.bf16 %v434
    %v925 = vunpack.c.l.s8.bf16 %v435
    %v926 = vunpack.c.h.s8.bf16 %v435
    %v927 = vunpack.c.l.s8.bf16 %v436
    %v928 = vunpack.c.h.s8.bf16 %v436
    %v929 = vunpack.c.l.s8.bf16 %v437
    %v930 = vunpack.c.h.s8.bf16 %v437
    %v931 = vunpack.c.l.s8.bf16 %v438
    %v932 = vunpack.c.h.s8.bf16 %v438
    %v933 = vunpack.c.l.s8.bf16 %v439
    %v934 = vunpack.c.h.s8.bf16 %v439
    %v935 = vunpack.c.l.s8.bf16 %v440
    %v936 = vunpack.c.h.s8.bf16 %v440
    %v937 = vunpack.c.l.s8.bf16 %v441
    %v938 = vunpack.c.h.s8.bf16 %v441
    %v939 = vunpack.c.l.s8.bf16 %v442
    %v940 = vunpack.c.h.s8.bf16 %v442
    %v941 = vunpack.c.l.s8.bf16 %v443
    %v942 = vunpack.c.h.s8.bf16 %v443
    %v943 = vunpack.c.l.s8.bf16 %v444
    %v944 = vunpack.c.h.s8.bf16 %v444
    %v945 = vunpack.c.l.s8.bf16 %v445
    %v946 = vunpack.c.h.s8.bf16 %v445
    %v947 = vunpack.c.l.s8.bf16 %v446
    %v948 = vunpack.c.h.s8.bf16 %v446
    %v949 = vunpack.c.l.s8.bf16 %v447
    %v950 = vunpack.c.h.s8.bf16 %v447
    %v951 = vunpack.c.l.s8.bf16 %v448
    %v952 = vunpack.c.h.s8.bf16 %v448
    %v953 = vunpack.c.l.s8.bf16 %v449
    %v954 = vunpack.c.h.s8.bf16 %v449
    %v955 = vunpack.c.l.s8.bf16 %v450
    %v956 = vunpack.c.h.s8.bf16 %v450
    %v957 = vunpack.c.l.s8.bf16 %v451
    %v958 = vunpack.c.h.s8.bf16 %v451
    %v959 = vunpack.c.l.s8.bf16 %v452
    %v960 = vunpack.c.h.s8.bf16 %v452
    %v961 = vunpack.c.l.s8.bf16 %v453
    %v962 = vunpack.c.h.s8.bf16 %v453
    %v963 = vunpack.c.l.s8.bf16 %v454
    %v964 = vunpack.c.h.s8.bf16 %v454
    %v965 = vunpack.c.l.s8.bf16 %v455
    %v966 = vunpack.c.h.s8.bf16 %v455
    %v967 = vunpack.c.l.s8.bf16 %v456
    %v968 = vunpack.c.h.s8.bf16 %v456
    %v969 = vld [vmem:[#allocation3] sm:$0xff]
    %v970 = vld [vmem:[#allocation3 + $0x8] sm:$0xff]
    %v971 = vld [vmem:[#allocation3 + $0x10] sm:$0xff]
    %v972 = vld [vmem:[#allocation3 + $0x18] sm:$0xff]
    %v973 = vld [vmem:[#allocation3 + $0x20] sm:$0xff]
    %v974 = vld [vmem:[#allocation3 + $0x28] sm:$0xff]
    %v975 = vld [vmem:[#allocation3 + $0x30] sm:$0xff]
    %v976 = vld [vmem:[#allocation3 + $0x38] sm:$0xff]
    %v985 = vcombine.high %v969, %v969
    %v987 = vunpack.c.l.s4 1966171168
    %v988 = vunpack.c.0.s8 %v987
    %v989 = vlaneseq
    %v990 = vshrl.u32 %v989, 7
    %v991 = vsub.s32 %v988, %v990
    %v992 = vrot.slane %v969, %v991
    %v994 = vunpack.c.l.s4 1966171168
    %v995 = vunpack.c.0.s8 %v994
    %v996 = vlaneseq
    %v997 = vshrl.u32 %v996, 7
    %v998 = vsub.s32 %v995, %v997
    %v999 = vrot.slane %v985, %v998
    %v1000 = vcombine.high %v992, %v992
    %v1001 = vcombine.high %v999, %v999
    %v1003 = vunpack.c.l.s4 1966171168
    %v1004 = vunpack.c.0.s8 %v1003
    %v1005 = vlaneseq
    %v1006 = vshrl.u32 %v1005, 7
    %v1007 = vsub.s32 %v1004, %v1006
    %v1008 = vrot.slane %v992, %v1007
    %v1010 = vunpack.c.l.s4 1966171168
    %v1011 = vunpack.c.0.s8 %v1010
    %v1012 = vlaneseq
    %v1013 = vshrl.u32 %v1012, 7
    %v1014 = vsub.s32 %v1011, %v1013
    %v1015 = vrot.slane %v999, %v1014
    %v1017 = vunpack.c.l.s4 1966171168
    %v1018 = vunpack.c.0.s8 %v1017
    %v1019 = vlaneseq
    %v1020 = vshrl.u32 %v1019, 7
    %v1021 = vsub.s32 %v1018, %v1020
    %v1022 = vrot.slane %v1000, %v1021
    %v1024 = vunpack.c.l.s4 1966171168
    %v1025 = vunpack.c.0.s8 %v1024
    %v1026 = vlaneseq
    %v1027 = vshrl.u32 %v1026, 7
    %v1028 = vsub.s32 %v1025, %v1027
    %v1029 = vrot.slane %v1001, %v1028
    %v1030 = vcombine.high %v1008, %v1008
    %v1031 = vcombine.high %v1015, %v1015
    %v1032 = vcombine.high %v1022, %v1022
    %v1033 = vcombine.high %v1029, %v1029
    %v1034 = vcombine.high %v970, %v970
    %v1036 = vunpack.c.l.s4 1966171168
    %v1037 = vunpack.c.0.s8 %v1036
    %v1038 = vlaneseq
    %v1039 = vshrl.u32 %v1038, 7
    %v1040 = vsub.s32 %v1037, %v1039
    %v1041 = vrot.slane %v970, %v1040
    %v1043 = vunpack.c.l.s4 1966171168
    %v1044 = vunpack.c.0.s8 %v1043
    %v1045 = vlaneseq
    %v1046 = vshrl.u32 %v1045, 7
    %v1047 = vsub.s32 %v1044, %v1046
    %v1048 = vrot.slane %v1034, %v1047
    %v1049 = vcombine.high %v1041, %v1041
    %v1050 = vcombine.high %v1048, %v1048
    %v1052 = vunpack.c.l.s4 1966171168
    %v1053 = vunpack.c.0.s8 %v1052
    %v1054 = vlaneseq
    %v1055 = vshrl.u32 %v1054, 7
    %v1056 = vsub.s32 %v1053, %v1055
    %v1057 = vrot.slane %v1041, %v1056
    %v1059 = vunpack.c.l.s4 1966171168
    %v1060 = vunpack.c.0.s8 %v1059
    %v1061 = vlaneseq
    %v1062 = vshrl.u32 %v1061, 7
    %v1063 = vsub.s32 %v1060, %v1062
    %v1064 = vrot.slane %v1048, %v1063
    %v1066 = vunpack.c.l.s4 1966171168
    %v1067 = vunpack.c.0.s8 %v1066
    %v1068 = vlaneseq
    %v1069 = vshrl.u32 %v1068, 7
    %v1070 = vsub.s32 %v1067, %v1069
    %v1071 = vrot.slane %v1049, %v1070
    %v1073 = vunpack.c.l.s4 1966171168
    %v1074 = vunpack.c.0.s8 %v1073
    %v1075 = vlaneseq
    %v1076 = vshrl.u32 %v1075, 7
    %v1077 = vsub.s32 %v1074, %v1076
    %v1078 = vrot.slane %v1050, %v1077
    %v1079 = vcombine.high %v1057, %v1057
    %v1080 = vcombine.high %v1064, %v1064
    %v1081 = vcombine.high %v1071, %v1071
    %v1082 = vcombine.high %v1078, %v1078
    %v1083 = vcombine.high %v971, %v971
    %v1085 = vunpack.c.l.s4 1966171168
    %v1086 = vunpack.c.0.s8 %v1085
    %v1087 = vlaneseq
    %v1088 = vshrl.u32 %v1087, 7
    %v1089 = vsub.s32 %v1086, %v1088
    %v1090 = vrot.slane %v971, %v1089
    %v1092 = vunpack.c.l.s4 1966171168
    %v1093 = vunpack.c.0.s8 %v1092
    %v1094 = vlaneseq
    %v1095 = vshrl.u32 %v1094, 7
    %v1096 = vsub.s32 %v1093, %v1095
    %v1097 = vrot.slane %v1083, %v1096
    %v1098 = vcombine.high %v1090, %v1090
    %v1099 = vcombine.high %v1097, %v1097
    %v1101 = vunpack.c.l.s4 1966171168
    %v1102 = vunpack.c.0.s8 %v1101
    %v1103 = vlaneseq
    %v1104 = vshrl.u32 %v1103, 7
    %v1105 = vsub.s32 %v1102, %v1104
    %v1106 = vrot.slane %v1090, %v1105
    %v1108 = vunpack.c.l.s4 1966171168
    %v1109 = vunpack.c.0.s8 %v1108
    %v1110 = vlaneseq
    %v1111 = vshrl.u32 %v1110, 7
    %v1112 = vsub.s32 %v1109, %v1111
    %v1113 = vrot.slane %v1097, %v1112
    %v1115 = vunpack.c.l.s4 1966171168
    %v1116 = vunpack.c.0.s8 %v1115
    %v1117 = vlaneseq
    %v1118 = vshrl.u32 %v1117, 7
    %v1119 = vsub.s32 %v1116, %v1118
    %v1120 = vrot.slane %v1098, %v1119
    %v1122 = vunpack.c.l.s4 1966171168
    %v1123 = vunpack.c.0.s8 %v1122
    %v1124 = vlaneseq
    %v1125 = vshrl.u32 %v1124, 7
    %v1126 = vsub.s32 %v1123, %v1125
    %v1127 = vrot.slane %v1099, %v1126
    %v1128 = vcombine.high %v1106, %v1106
    %v1129 = vcombine.high %v1113, %v1113
    %v1130 = vcombine.high %v1120, %v1120
    %v1131 = vcombine.high %v1127, %v1127
    %v1132 = vcombine.high %v972, %v972
    %v1134 = vunpack.c.l.s4 1966171168
    %v1135 = vunpack.c.0.s8 %v1134
    %v1136 = vlaneseq
    %v1137 = vshrl.u32 %v1136, 7
    %v1138 = vsub.s32 %v1135, %v1137
    %v1139 = vrot.slane %v972, %v1138
    %v1141 = vunpack.c.l.s4 1966171168
    %v1142 = vunpack.c.0.s8 %v1141
    %v1143 = vlaneseq
    %v1144 = vshrl.u32 %v1143, 7
    %v1145 = vsub.s32 %v1142, %v1144
    %v1146 = vrot.slane %v1132, %v1145
    %v1147 = vcombine.high %v1139, %v1139
    %v1148 = vcombine.high %v1146, %v1146
    %v1150 = vunpack.c.l.s4 1966171168
    %v1151 = vunpack.c.0.s8 %v1150
    %v1152 = vlaneseq
    %v1153 = vshrl.u32 %v1152, 7
    %v1154 = vsub.s32 %v1151, %v1153
    %v1155 = vrot.slane %v1139, %v1154
    %v1157 = vunpack.c.l.s4 1966171168
    %v1158 = vunpack.c.0.s8 %v1157
    %v1159 = vlaneseq
    %v1160 = vshrl.u32 %v1159, 7
    %v1161 = vsub.s32 %v1158, %v1160
    %v1162 = vrot.slane %v1146, %v1161
    %v1164 = vunpack.c.l.s4 1966171168
    %v1165 = vunpack.c.0.s8 %v1164
    %v1166 = vlaneseq
    %v1167 = vshrl.u32 %v1166, 7
    %v1168 = vsub.s32 %v1165, %v1167
    %v1169 = vrot.slane %v1147, %v1168
    %v1171 = vunpack.c.l.s4 1966171168
    %v1172 = vunpack.c.0.s8 %v1171
    %v1173 = vlaneseq
    %v1174 = vshrl.u32 %v1173, 7
    %v1175 = vsub.s32 %v1172, %v1174
    %v1176 = vrot.slane %v1148, %v1175
    %v1177 = vcombine.high %v1155, %v1155
    %v1178 = vcombine.high %v1162, %v1162
    %v1179 = vcombine.high %v1169, %v1169
    %v1180 = vcombine.high %v1176, %v1176
    %v1181 = vcombine.high %v973, %v973
    %v1183 = vunpack.c.l.s4 1966171168
    %v1184 = vunpack.c.0.s8 %v1183
    %v1185 = vlaneseq
    %v1186 = vshrl.u32 %v1185, 7
    %v1187 = vsub.s32 %v1184, %v1186
    %v1188 = vrot.slane %v973, %v1187
    %v1190 = vunpack.c.l.s4 1966171168
    %v1191 = vunpack.c.0.s8 %v1190
    %v1192 = vlaneseq
    %v1193 = vshrl.u32 %v1192, 7
    %v1194 = vsub.s32 %v1191, %v1193
    %v1195 = vrot.slane %v1181, %v1194
    %v1196 = vcombine.high %v1188, %v1188
    %v1197 = vcombine.high %v1195, %v1195
    %v1199 = vunpack.c.l.s4 1966171168
    %v1200 = vunpack.c.0.s8 %v1199
    %v1201 = vlaneseq
    %v1202 = vshrl.u32 %v1201, 7
    %v1203 = vsub.s32 %v1200, %v1202
    %v1204 = vrot.slane %v1188, %v1203
    %v1206 = vunpack.c.l.s4 1966171168
    %v1207 = vunpack.c.0.s8 %v1206
    %v1208 = vlaneseq
    %v1209 = vshrl.u32 %v1208, 7
    %v1210 = vsub.s32 %v1207, %v1209
    %v1211 = vrot.slane %v1195, %v1210
    %v1213 = vunpack.c.l.s4 1966171168
    %v1214 = vunpack.c.0.s8 %v1213
    %v1215 = vlaneseq
    %v1216 = vshrl.u32 %v1215, 7
    %v1217 = vsub.s32 %v1214, %v1216
    %v1218 = vrot.slane %v1196, %v1217
    %v1220 = vunpack.c.l.s4 1966171168
    %v1221 = vunpack.c.0.s8 %v1220
    %v1222 = vlaneseq
    %v1223 = vshrl.u32 %v1222, 7
    %v1224 = vsub.s32 %v1221, %v1223
    %v1225 = vrot.slane %v1197, %v1224
    %v1226 = vcombine.high %v1204, %v1204
    %v1227 = vcombine.high %v1211, %v1211
    %v1228 = vcombine.high %v1218, %v1218
    %v1229 = vcombine.high %v1225, %v1225
    %v1230 = vcombine.high %v974, %v974
    %v1232 = vunpack.c.l.s4 1966171168
    %v1233 = vunpack.c.0.s8 %v1232
    %v1234 = vlaneseq
    %v1235 = vshrl.u32 %v1234, 7
    %v1236 = vsub.s32 %v1233, %v1235
    %v1237 = vrot.slane %v974, %v1236
    %v1239 = vunpack.c.l.s4 1966171168
    %v1240 = vunpack.c.0.s8 %v1239
    %v1241 = vlaneseq
    %v1242 = vshrl.u32 %v1241, 7
    %v1243 = vsub.s32 %v1240, %v1242
    %v1244 = vrot.slane %v1230, %v1243
    %v1245 = vcombine.high %v1237, %v1237
    %v1246 = vcombine.high %v1244, %v1244
    %v1248 = vunpack.c.l.s4 1966171168
    %v1249 = vunpack.c.0.s8 %v1248
    %v1250 = vlaneseq
    %v1251 = vshrl.u32 %v1250, 7
    %v1252 = vsub.s32 %v1249, %v1251
    %v1253 = vrot.slane %v1237, %v1252
    %v1255 = vunpack.c.l.s4 1966171168
    %v1256 = vunpack.c.0.s8 %v1255
    %v1257 = vlaneseq
    %v1258 = vshrl.u32 %v1257, 7
    %v1259 = vsub.s32 %v1256, %v1258
    %v1260 = vrot.slane %v1244, %v1259
    %v1262 = vunpack.c.l.s4 1966171168
    %v1263 = vunpack.c.0.s8 %v1262
    %v1264 = vlaneseq
    %v1265 = vshrl.u32 %v1264, 7
    %v1266 = vsub.s32 %v1263, %v1265
    %v1267 = vrot.slane %v1245, %v1266
    %v1269 = vunpack.c.l.s4 1966171168
    %v1270 = vunpack.c.0.s8 %v1269
    %v1271 = vlaneseq
    %v1272 = vshrl.u32 %v1271, 7
    %v1273 = vsub.s32 %v1270, %v1272
    %v1274 = vrot.slane %v1246, %v1273
    %v1275 = vcombine.high %v1253, %v1253
    %v1276 = vcombine.high %v1260, %v1260
    %v1277 = vcombine.high %v1267, %v1267
    %v1278 = vcombine.high %v1274, %v1274
    %v1279 = vcombine.high %v975, %v975
    %v1281 = vunpack.c.l.s4 1966171168
    %v1282 = vunpack.c.0.s8 %v1281
    %v1283 = vlaneseq
    %v1284 = vshrl.u32 %v1283, 7
    %v1285 = vsub.s32 %v1282, %v1284
    %v1286 = vrot.slane %v975, %v1285
    %v1288 = vunpack.c.l.s4 1966171168
    %v1289 = vunpack.c.0.s8 %v1288
    %v1290 = vlaneseq
    %v1291 = vshrl.u32 %v1290, 7
    %v1292 = vsub.s32 %v1289, %v1291
    %v1293 = vrot.slane %v1279, %v1292
    %v1294 = vcombine.high %v1286, %v1286
    %v1295 = vcombine.high %v1293, %v1293
    %v1297 = vunpack.c.l.s4 1966171168
    %v1298 = vunpack.c.0.s8 %v1297
    %v1299 = vlaneseq
    %v1300 = vshrl.u32 %v1299, 7
    %v1301 = vsub.s32 %v1298, %v1300
    %v1302 = vrot.slane %v1286, %v1301
    %v1304 = vunpack.c.l.s4 1966171168
    %v1305 = vunpack.c.0.s8 %v1304
    %v1306 = vlaneseq
    %v1307 = vshrl.u32 %v1306, 7
    %v1308 = vsub.s32 %v1305, %v1307
    %v1309 = vrot.slane %v1293, %v1308
    %v1311 = vunpack.c.l.s4 1966171168
    %v1312 = vunpack.c.0.s8 %v1311
    %v1313 = vlaneseq
    %v1314 = vshrl.u32 %v1313, 7
    %v1315 = vsub.s32 %v1312, %v1314
    %v1316 = vrot.slane %v1294, %v1315
    %v1318 = vunpack.c.l.s4 1966171168
    %v1319 = vunpack.c.0.s8 %v1318
    %v1320 = vlaneseq
    %v1321 = vshrl.u32 %v1320, 7
    %v1322 = vsub.s32 %v1319, %v1321
    %v1323 = vrot.slane %v1295, %v1322
    %v1324 = vcombine.high %v1302, %v1302
    %v1325 = vcombine.high %v1309, %v1309
    %v1326 = vcombine.high %v1316, %v1316
    %v1327 = vcombine.high %v1323, %v1323
    %v1328 = vcombine.high %v976, %v976
    %v1330 = vunpack.c.l.s4 1966171168
    %v1331 = vunpack.c.0.s8 %v1330
    %v1332 = vlaneseq
    %v1333 = vshrl.u32 %v1332, 7
    %v1334 = vsub.s32 %v1331, %v1333
    %v1335 = vrot.slane %v976, %v1334
    %v1337 = vunpack.c.l.s4 1966171168
    %v1338 = vunpack.c.0.s8 %v1337
    %v1339 = vlaneseq
    %v1340 = vshrl.u32 %v1339, 7
    %v1341 = vsub.s32 %v1338, %v1340
    %v1342 = vrot.slane %v1328, %v1341
    %v1343 = vcombine.high %v1335, %v1335
    %v1344 = vcombine.high %v1342, %v1342
    %v1346 = vunpack.c.l.s4 1966171168
    %v1347 = vunpack.c.0.s8 %v1346
    %v1348 = vlaneseq
    %v1349 = vshrl.u32 %v1348, 7
    %v1350 = vsub.s32 %v1347, %v1349
    %v1351 = vrot.slane %v1335, %v1350
    %v1353 = vunpack.c.l.s4 1966171168
    %v1354 = vunpack.c.0.s8 %v1353
    %v1355 = vlaneseq
    %v1356 = vshrl.u32 %v1355, 7
    %v1357 = vsub.s32 %v1354, %v1356
    %v1358 = vrot.slane %v1342, %v1357
    %v1360 = vunpack.c.l.s4 1966171168
    %v1361 = vunpack.c.0.s8 %v1360
    %v1362 = vlaneseq
    %v1363 = vshrl.u32 %v1362, 7
    %v1364 = vsub.s32 %v1361, %v1363
    %v1365 = vrot.slane %v1343, %v1364
    %v1367 = vunpack.c.l.s4 1966171168
    %v1368 = vunpack.c.0.s8 %v1367
    %v1369 = vlaneseq
    %v1370 = vshrl.u32 %v1369, 7
    %v1371 = vsub.s32 %v1368, %v1370
    %v1372 = vrot.slane %v1344, %v1371
    %v1373 = vcombine.high %v1351, %v1351
    %v1374 = vcombine.high %v1358, %v1358
    %v1375 = vcombine.high %v1365, %v1365
    %v1376 = vcombine.high %v1372, %v1372
    %1441 = vmatprep.subr.bf16.mxu0 0
    %1442 = vmatpush1.bf16.msra.mxu0 %v464
    %1443 = vmatprep.subr.bf16.mxu0 0
    %1444 = vmatpush1.bf16.msra.mxu0 %v463
    %1445 = vmatprep.subr.bf16.mxu0 0
    %1446 = vmatpush1.bf16.msra.mxu0 %v462
    %1447 = vmatprep.subr.bf16.mxu0 0
    %1448 = vmatpush1.bf16.msra.mxu0 %v461
    %1449 = vmatprep.subr.bf16.mxu0 0
    %1450 = vmatpush1.bf16.msra.mxu0 %v460
    %1451 = vmatprep.subr.bf16.mxu0 0
    %1452 = vmatpush1.bf16.msra.mxu0 %v459
    %1453 = vmatprep.subr.bf16.mxu0 0
    %1454 = vmatpush1.bf16.msra.mxu0 %v458
    %1455 = vmatprep.subr.bf16.mxu0 0
    %1456 = vmatpush1.bf16.msra.mxu0 %v457
    %1457 = vmatprep.subr.bf16.mxu0 0
    %1458 = vmatpush2.bf16.msra.mxu0 %v472
    %1459 = vmatprep.subr.bf16.mxu0 0
    %1460 = vmatpush2.bf16.msra.mxu0 %v471
    %1461 = vmatprep.subr.bf16.mxu0 0
    %1462 = vmatpush2.bf16.msra.mxu0 %v470
    %1463 = vmatprep.subr.bf16.mxu0 0
    %1464 = vmatpush2.bf16.msra.mxu0 %v469
    %1465 = vmatprep.subr.bf16.mxu0 0
    %1466 = vmatpush2.bf16.msra.mxu0 %v468
    %1467 = vmatprep.subr.bf16.mxu0 0
    %1468 = vmatpush2.bf16.msra.mxu0 %v467
    %1469 = vmatprep.subr.bf16.mxu0 0
    %1470 = vmatpush2.bf16.msra.mxu0 %v466
    %1471 = vmatprep.subr.bf16.mxu0 0
    %1472 = vmatpush2.bf16.msra.mxu0 %v465
    %1473 = vmatprep.mubr.bf16.mxu0 %v1022
    %1474 = vmatmul.mubr.bf16.gmra.mxu0 %v1008
    %v1475 = vpop.f32.mrf.mxu0
    %v1476 = vadd.f32 0.0, %v1475
    %v1477 = vpop.f32.mrf.mxu0
    %v1478 = vpop.f32.mrf.mxu0
    %v1479 = vpop.f32.mrf.mxu0
    %1480 = vdwg.mxu0
    %1481 = vmatprep.subr.bf16.mxu0 0
    %1482 = vmatpush1.bf16.msra.mxu0 %v480
    %1483 = vmatprep.subr.bf16.mxu0 0
    %1484 = vmatpush1.bf16.msra.mxu0 %v479
    %1485 = vmatprep.subr.bf16.mxu0 0
    %1486 = vmatpush1.bf16.msra.mxu0 %v478
    %1487 = vmatprep.subr.bf16.mxu0 0
    %1488 = vmatpush1.bf16.msra.mxu0 %v477
    %1489 = vmatprep.subr.bf16.mxu0 0
    %1490 = vmatpush1.bf16.msra.mxu0 %v476
    %1491 = vmatprep.subr.bf16.mxu0 0
    %1492 = vmatpush1.bf16.msra.mxu0 %v475
    %1493 = vmatprep.subr.bf16.mxu0 0
    %1494 = vmatpush1.bf16.msra.mxu0 %v474
    %1495 = vmatprep.subr.bf16.mxu0 0
    %1496 = vmatpush1.bf16.msra.mxu0 %v473
    %1497 = vmatprep.subr.bf16.mxu0 0
    %1498 = vmatpush2.bf16.msra.mxu0 %v488
    %1499 = vmatprep.subr.bf16.mxu0 0
    %1500 = vmatpush2.bf16.msra.mxu0 %v487
    %1501 = vmatprep.subr.bf16.mxu0 0
    %1502 = vmatpush2.bf16.msra.mxu0 %v486
    %1503 = vmatprep.subr.bf16.mxu0 0
    %1504 = vmatpush2.bf16.msra.mxu0 %v485
    %1505 = vmatprep.subr.bf16.mxu0 0
    %1506 = vmatpush2.bf16.msra.mxu0 %v484
    %1507 = vmatprep.subr.bf16.mxu0 0
    %1508 = vmatpush2.bf16.msra.mxu0 %v483
    %1509 = vmatprep.subr.bf16.mxu0 0
    %1510 = vmatpush2.bf16.msra.mxu0 %v482
    %1511 = vmatprep.subr.bf16.mxu0 0
    %1512 = vmatpush2.bf16.msra.mxu0 %v481
    %1513 = vmatprep.mubr.bf16.mxu0 %v1032
    %1514 = vmatmul.mubr.bf16.gmra.mxu0 %v1030
    %v1515 = vpop.f32.mrf.mxu0
    %v1516 = vadd.f32 %v1476, %v1515
    %v1517 = vpop.f32.mrf.mxu0
    %v1518 = vpop.f32.mrf.mxu0
    %v1519 = vpop.f32.mrf.mxu0
    %1520 = vdwg.mxu0
    %1521 = vmatprep.subr.bf16.mxu0 0
    %1522 = vmatpush1.bf16.msra.mxu0 %v496
    %1523 = vmatprep.subr.bf16.mxu0 0
    %1524 = vmatpush1.bf16.msra.mxu0 %v495
    %1525 = vmatprep.subr.bf16.mxu0 0
    %1526 = vmatpush1.bf16.msra.mxu0 %v494
    %1527 = vmatprep.subr.bf16.mxu0 0
    %1528 = vmatpush1.bf16.msra.mxu0 %v493
    %1529 = vmatprep.subr.bf16.mxu0 0
    %1530 = vmatpush1.bf16.msra.mxu0 %v492
    %1531 = vmatprep.subr.bf16.mxu0 0
    %1532 = vmatpush1.bf16.msra.mxu0 %v491
    %1533 = vmatprep.subr.bf16.mxu0 0
    %1534 = vmatpush1.bf16.msra.mxu0 %v490
    %1535 = vmatprep.subr.bf16.mxu0 0
    %1536 = vmatpush1.bf16.msra.mxu0 %v489
    %1537 = vmatprep.subr.bf16.mxu0 0
    %1538 = vmatpush2.bf16.msra.mxu0 %v504
    %1539 = vmatprep.subr.bf16.mxu0 0
    %1540 = vmatpush2.bf16.msra.mxu0 %v503
    %1541 = vmatprep.subr.bf16.mxu0 0
    %1542 = vmatpush2.bf16.msra.mxu0 %v502
    %1543 = vmatprep.subr.bf16.mxu0 0
    %1544 = vmatpush2.bf16.msra.mxu0 %v501
    %1545 = vmatprep.subr.bf16.mxu0 0
    %1546 = vmatpush2.bf16.msra.mxu0 %v500
    %1547 = vmatprep.subr.bf16.mxu0 0
    %1548 = vmatpush2.bf16.msra.mxu0 %v499
    %1549 = vmatprep.subr.bf16.mxu0 0
    %1550 = vmatpush2.bf16.msra.mxu0 %v498
    %1551 = vmatprep.subr.bf16.mxu0 0
    %1552 = vmatpush2.bf16.msra.mxu0 %v497
    %1553 = vmatprep.mubr.bf16.mxu0 %v1029
    %1554 = vmatmul.mubr.bf16.gmra.mxu0 %v1015
    %v1555 = vpop.f32.mrf.mxu0
    %v1556 = vadd.f32 %v1516, %v1555
    %v1557 = vpop.f32.mrf.mxu0
    %v1558 = vpop.f32.mrf.mxu0
    %v1559 = vpop.f32.mrf.mxu0
    %1560 = vdwg.mxu0
    %1561 = vmatprep.subr.bf16.mxu0 0
    %1562 = vmatpush1.bf16.msra.mxu0 %v512
    %1563 = vmatprep.subr.bf16.mxu0 0
    %1564 = vmatpush1.bf16.msra.mxu0 %v511
    %1565 = vmatprep.subr.bf16.mxu0 0
    %1566 = vmatpush1.bf16.msra.mxu0 %v510
    %1567 = vmatprep.subr.bf16.mxu0 0
    %1568 = vmatpush1.bf16.msra.mxu0 %v509
    %1569 = vmatprep.subr.bf16.mxu0 0
    %1570 = vmatpush1.bf16.msra.mxu0 %v508
    %1571 = vmatprep.subr.bf16.mxu0 0
    %1572 = vmatpush1.bf16.msra.mxu0 %v507
    %1573 = vmatprep.subr.bf16.mxu0 0
    %1574 = vmatpush1.bf16.msra.mxu0 %v506
    %1575 = vmatprep.subr.bf16.mxu0 0
    %1576 = vmatpush1.bf16.msra.mxu0 %v505
    %1577 = vmatprep.subr.bf16.mxu0 0
    %1578 = vmatpush2.bf16.msra.mxu0 %v520
    %1579 = vmatprep.subr.bf16.mxu0 0
    %1580 = vmatpush2.bf16.msra.mxu0 %v519
    %1581 = vmatprep.subr.bf16.mxu0 0
    %1582 = vmatpush2.bf16.msra.mxu0 %v518
    %1583 = vmatprep.subr.bf16.mxu0 0
    %1584 = vmatpush2.bf16.msra.mxu0 %v517
    %1585 = vmatprep.subr.bf16.mxu0 0
    %1586 = vmatpush2.bf16.msra.mxu0 %v516
    %1587 = vmatprep.subr.bf16.mxu0 0
    %1588 = vmatpush2.bf16.msra.mxu0 %v515
    %1589 = vmatprep.subr.bf16.mxu0 0
    %1590 = vmatpush2.bf16.msra.mxu0 %v514
    %1591 = vmatprep.subr.bf16.mxu0 0
    %1592 = vmatpush2.bf16.msra.mxu0 %v513
    %1593 = vmatprep.mubr.bf16.mxu0 %v1033
    %1594 = vmatmul.mubr.bf16.gmra.mxu0 %v1031
    %v1595 = vpop.f32.mrf.mxu0
    %v1596 = vadd.f32 %v1556, %v1595
    %v1597 = vpop.f32.mrf.mxu0
    %v1598 = vpop.f32.mrf.mxu0
    %v1599 = vpop.f32.mrf.mxu0
    %1600 = vdwg.mxu0
    %1601 = vmatprep.subr.bf16.mxu0 0
    %1602 = vmatpush1.bf16.msra.mxu0 %v528
    %1603 = vmatprep.subr.bf16.mxu0 0
    %1604 = vmatpush1.bf16.msra.mxu0 %v527
    %1605 = vmatprep.subr.bf16.mxu0 0
    %1606 = vmatpush1.bf16.msra.mxu0 %v526
    %1607 = vmatprep.subr.bf16.mxu0 0
    %1608 = vmatpush1.bf16.msra.mxu0 %v525
    %1609 = vmatprep.subr.bf16.mxu0 0
    %1610 = vmatpush1.bf16.msra.mxu0 %v524
    %1611 = vmatprep.subr.bf16.mxu0 0
    %1612 = vmatpush1.bf16.msra.mxu0 %v523
    %1613 = vmatprep.subr.bf16.mxu0 0
    %1614 = vmatpush1.bf16.msra.mxu0 %v522
    %1615 = vmatprep.subr.bf16.mxu0 0
    %1616 = vmatpush1.bf16.msra.mxu0 %v521
    %1617 = vmatprep.subr.bf16.mxu0 0
    %1618 = vmatpush2.bf16.msra.mxu0 %v536
    %1619 = vmatprep.subr.bf16.mxu0 0
    %1620 = vmatpush2.bf16.msra.mxu0 %v535
    %1621 = vmatprep.subr.bf16.mxu0 0
    %1622 = vmatpush2.bf16.msra.mxu0 %v534
    %1623 = vmatprep.subr.bf16.mxu0 0
    %1624 = vmatpush2.bf16.msra.mxu0 %v533
    %1625 = vmatprep.subr.bf16.mxu0 0
    %1626 = vmatpush2.bf16.msra.mxu0 %v532
    %1627 = vmatprep.subr.bf16.mxu0 0
    %1628 = vmatpush2.bf16.msra.mxu0 %v531
    %1629 = vmatprep.subr.bf16.mxu0 0
    %1630 = vmatpush2.bf16.msra.mxu0 %v530
    %1631 = vmatprep.subr.bf16.mxu0 0
    %1632 = vmatpush2.bf16.msra.mxu0 %v529
    %1633 = vmatprep.mubr.bf16.mxu0 %v1071
    %1634 = vmatmul.mubr.bf16.gmra.mxu0 %v1057
    %v1635 = vpop.f32.mrf.mxu0
    %v1636 = vadd.f32 %v1596, %v1635
    %v1637 = vpop.f32.mrf.mxu0
    %v1638 = vpop.f32.mrf.mxu0
    %v1639 = vpop.f32.mrf.mxu0
    %1640 = vdwg.mxu0
    %1641 = vmatprep.subr.bf16.mxu0 0
    %1642 = vmatpush1.bf16.msra.mxu0 %v544
    %1643 = vmatprep.subr.bf16.mxu0 0
    %1644 = vmatpush1.bf16.msra.mxu0 %v543
    %1645 = vmatprep.subr.bf16.mxu0 0
    %1646 = vmatpush1.bf16.msra.mxu0 %v542
    %1647 = vmatprep.subr.bf16.mxu0 0
    %1648 = vmatpush1.bf16.msra.mxu0 %v541
    %1649 = vmatprep.subr.bf16.mxu0 0
    %1650 = vmatpush1.bf16.msra.mxu0 %v540
    %1651 = vmatprep.subr.bf16.mxu0 0
    %1652 = vmatpush1.bf16.msra.mxu0 %v539
    %1653 = vmatprep.subr.bf16.mxu0 0
    %1654 = vmatpush1.bf16.msra.mxu0 %v538
    %1655 = vmatprep.subr.bf16.mxu0 0
    %1656 = vmatpush1.bf16.msra.mxu0 %v537
    %1657 = vmatprep.subr.bf16.mxu0 0
    %1658 = vmatpush2.bf16.msra.mxu0 %v552
    %1659 = vmatprep.subr.bf16.mxu0 0
    %1660 = vmatpush2.bf16.msra.mxu0 %v551
    %1661 = vmatprep.subr.bf16.mxu0 0
    %1662 = vmatpush2.bf16.msra.mxu0 %v550
    %1663 = vmatprep.subr.bf16.mxu0 0
    %1664 = vmatpush2.bf16.msra.mxu0 %v549
    %1665 = vmatprep.subr.bf16.mxu0 0
    %1666 = vmatpush2.bf16.msra.mxu0 %v548
    %1667 = vmatprep.subr.bf16.mxu0 0
    %1668 = vmatpush2.bf16.msra.mxu0 %v547
    %1669 = vmatprep.subr.bf16.mxu0 0
    %1670 = vmatpush2.bf16.msra.mxu0 %v546
    %1671 = vmatprep.subr.bf16.mxu0 0
    %1672 = vmatpush2.bf16.msra.mxu0 %v545
    %1673 = vmatprep.mubr.bf16.mxu0 %v1081
    %1674 = vmatmul.mubr.bf16.gmra.mxu0 %v1079
    %v1675 = vpop.f32.mrf.mxu0
    %v1676 = vadd.f32 %v1636, %v1675
    %v1677 = vpop.f32.mrf.mxu0
    %v1678 = vpop.f32.mrf.mxu0
    %v1679 = vpop.f32.mrf.mxu0
    %1680 = vdwg.mxu0
    %1681 = vmatprep.subr.bf16.mxu0 0
    %1682 = vmatpush1.bf16.msra.mxu0 %v560
    %1683 = vmatprep.subr.bf16.mxu0 0
    %1684 = vmatpush1.bf16.msra.mxu0 %v559
    %1685 = vmatprep.subr.bf16.mxu0 0
    %1686 = vmatpush1.bf16.msra.mxu0 %v558
    %1687 = vmatprep.subr.bf16.mxu0 0
    %1688 = vmatpush1.bf16.msra.mxu0 %v557
    %1689 = vmatprep.subr.bf16.mxu0 0
    %1690 = vmatpush1.bf16.msra.mxu0 %v556
    %1691 = vmatprep.subr.bf16.mxu0 0
    %1692 = vmatpush1.bf16.msra.mxu0 %v555
    %1693 = vmatprep.subr.bf16.mxu0 0
    %1694 = vmatpush1.bf16.msra.mxu0 %v554
    %1695 = vmatprep.subr.bf16.mxu0 0
    %1696 = vmatpush1.bf16.msra.mxu0 %v553
    %1697 = vmatprep.subr.bf16.mxu0 0
    %1698 = vmatpush2.bf16.msra.mxu0 %v568
    %1699 = vmatprep.subr.bf16.mxu0 0
    %1700 = vmatpush2.bf16.msra.mxu0 %v567
    %1701 = vmatprep.subr.bf16.mxu0 0
    %1702 = vmatpush2.bf16.msra.mxu0 %v566
    %1703 = vmatprep.subr.bf16.mxu0 0
    %1704 = vmatpush2.bf16.msra.mxu0 %v565
    %1705 = vmatprep.subr.bf16.mxu0 0
    %1706 = vmatpush2.bf16.msra.mxu0 %v564
    %1707 = vmatprep.subr.bf16.mxu0 0
    %1708 = vmatpush2.bf16.msra.mxu0 %v563
    %1709 = vmatprep.subr.bf16.mxu0 0
    %1710 = vmatpush2.bf16.msra.mxu0 %v562
    %1711 = vmatprep.subr.bf16.mxu0 0
    %1712 = vmatpush2.bf16.msra.mxu0 %v561
    %1713 = vmatprep.mubr.bf16.mxu0 %v1078
    %1714 = vmatmul.mubr.bf16.gmra.mxu0 %v1064
    %v1715 = vpop.f32.mrf.mxu0
    %v1716 = vadd.f32 %v1676, %v1715
    %v1717 = vpop.f32.mrf.mxu0
    %v1718 = vpop.f32.mrf.mxu0
    %v1719 = vpop.f32.mrf.mxu0
    %1720 = vdwg.mxu0
    %1721 = vmatprep.subr.bf16.mxu0 0
    %1722 = vmatpush1.bf16.msra.mxu0 %v576
    %1723 = vmatprep.subr.bf16.mxu0 0
    %1724 = vmatpush1.bf16.msra.mxu0 %v575
    %1725 = vmatprep.subr.bf16.mxu0 0
    %1726 = vmatpush1.bf16.msra.mxu0 %v574
    %1727 = vmatprep.subr.bf16.mxu0 0
    %1728 = vmatpush1.bf16.msra.mxu0 %v573
    %1729 = vmatprep.subr.bf16.mxu0 0
    %1730 = vmatpush1.bf16.msra.mxu0 %v572
    %1731 = vmatprep.subr.bf16.mxu0 0
    %1732 = vmatpush1.bf16.msra.mxu0 %v571
    %1733 = vmatprep.subr.bf16.mxu0 0
    %1734 = vmatpush1.bf16.msra.mxu0 %v570
    %1735 = vmatprep.subr.bf16.mxu0 0
    %1736 = vmatpush1.bf16.msra.mxu0 %v569
    %1737 = vmatprep.subr.bf16.mxu0 0
    %1738 = vmatpush2.bf16.msra.mxu0 %v584
    %1739 = vmatprep.subr.bf16.mxu0 0
    %1740 = vmatpush2.bf16.msra.mxu0 %v583
    %1741 = vmatprep.subr.bf16.mxu0 0
    %1742 = vmatpush2.bf16.msra.mxu0 %v582
    %1743 = vmatprep.subr.bf16.mxu0 0
    %1744 = vmatpush2.bf16.msra.mxu0 %v581
    %1745 = vmatprep.subr.bf16.mxu0 0
    %1746 = vmatpush2.bf16.msra.mxu0 %v580
    %1747 = vmatprep.subr.bf16.mxu0 0
    %1748 = vmatpush2.bf16.msra.mxu0 %v579
    %1749 = vmatprep.subr.bf16.mxu0 0
    %1750 = vmatpush2.bf16.msra.mxu0 %v578
    %1751 = vmatprep.subr.bf16.mxu0 0
    %1752 = vmatpush2.bf16.msra.mxu0 %v577
    %1753 = vmatprep.mubr.bf16.mxu0 %v1082
    %1754 = vmatmul.mubr.bf16.gmra.mxu0 %v1080
    %v1755 = vpop.f32.mrf.mxu0
    %v1756 = vadd.f32 %v1716, %v1755
    %v1757 = vpop.f32.mrf.mxu0
    %v1758 = vpop.f32.mrf.mxu0
    %v1759 = vpop.f32.mrf.mxu0
    %1760 = vdwg.mxu0
    %1761 = vmatprep.subr.bf16.mxu0 0
    %1762 = vmatpush1.bf16.msra.mxu0 %v592
    %1763 = vmatprep.subr.bf16.mxu0 0
    %1764 = vmatpush1.bf16.msra.mxu0 %v591
    %1765 = vmatprep.subr.bf16.mxu0 0
    %1766 = vmatpush1.bf16.msra.mxu0 %v590
    %1767 = vmatprep.subr.bf16.mxu0 0
    %1768 = vmatpush1.bf16.msra.mxu0 %v589
    %1769 = vmatprep.subr.bf16.mxu0 0
    %1770 = vmatpush1.bf16.msra.mxu0 %v588
    %1771 = vmatprep.subr.bf16.mxu0 0
    %1772 = vmatpush1.bf16.msra.mxu0 %v587
    %1773 = vmatprep.subr.bf16.mxu0 0
    %1774 = vmatpush1.bf16.msra.mxu0 %v586
    %1775 = vmatprep.subr.bf16.mxu0 0
    %1776 = vmatpush1.bf16.msra.mxu0 %v585
    %1777 = vmatprep.subr.bf16.mxu0 0
    %1778 = vmatpush2.bf16.msra.mxu0 %v600
    %1779 = vmatprep.subr.bf16.mxu0 0
    %1780 = vmatpush2.bf16.msra.mxu0 %v599
    %1781 = vmatprep.subr.bf16.mxu0 0
    %1782 = vmatpush2.bf16.msra.mxu0 %v598
    %1783 = vmatprep.subr.bf16.mxu0 0
    %1784 = vmatpush2.bf16.msra.mxu0 %v597
    %1785 = vmatprep.subr.bf16.mxu0 0
    %1786 = vmatpush2.bf16.msra.mxu0 %v596
    %1787 = vmatprep.subr.bf16.mxu0 0
    %1788 = vmatpush2.bf16.msra.mxu0 %v595
    %1789 = vmatprep.subr.bf16.mxu0 0
    %1790 = vmatpush2.bf16.msra.mxu0 %v594
    %1791 = vmatprep.subr.bf16.mxu0 0
    %1792 = vmatpush2.bf16.msra.mxu0 %v593
    %1793 = vmatprep.mubr.bf16.mxu0 %v1120
    %1794 = vmatmul.mubr.bf16.gmra.mxu0 %v1106
    %v1795 = vpop.f32.mrf.mxu0
    %v1796 = vadd.f32 %v1756, %v1795
    %v1797 = vpop.f32.mrf.mxu0
    %v1798 = vpop.f32.mrf.mxu0
    %v1799 = vpop.f32.mrf.mxu0
    %1800 = vdwg.mxu0
    %1801 = vmatprep.subr.bf16.mxu0 0
    %1802 = vmatpush1.bf16.msra.mxu0 %v608
    %1803 = vmatprep.subr.bf16.mxu0 0
    %1804 = vmatpush1.bf16.msra.mxu0 %v607
    %1805 = vmatprep.subr.bf16.mxu0 0
    %1806 = vmatpush1.bf16.msra.mxu0 %v606
    %1807 = vmatprep.subr.bf16.mxu0 0
    %1808 = vmatpush1.bf16.msra.mxu0 %v605
    %1809 = vmatprep.subr.bf16.mxu0 0
    %1810 = vmatpush1.bf16.msra.mxu0 %v604
    %1811 = vmatprep.subr.bf16.mxu0 0
    %1812 = vmatpush1.bf16.msra.mxu0 %v603
    %1813 = vmatprep.subr.bf16.mxu0 0
    %1814 = vmatpush1.bf16.msra.mxu0 %v602
    %1815 = vmatprep.subr.bf16.mxu0 0
    %1816 = vmatpush1.bf16.msra.mxu0 %v601
    %1817 = vmatprep.subr.bf16.mxu0 0
    %1818 = vmatpush2.bf16.msra.mxu0 %v616
    %1819 = vmatprep.subr.bf16.mxu0 0
    %1820 = vmatpush2.bf16.msra.mxu0 %v615
    %1821 = vmatprep.subr.bf16.mxu0 0
    %1822 = vmatpush2.bf16.msra.mxu0 %v614
    %1823 = vmatprep.subr.bf16.mxu0 0
    %1824 = vmatpush2.bf16.msra.mxu0 %v613
    %1825 = vmatprep.subr.bf16.mxu0 0
    %1826 = vmatpush2.bf16.msra.mxu0 %v612
    %1827 = vmatprep.subr.bf16.mxu0 0
    %1828 = vmatpush2.bf16.msra.mxu0 %v611
    %1829 = vmatprep.subr.bf16.mxu0 0
    %1830 = vmatpush2.bf16.msra.mxu0 %v610
    %1831 = vmatprep.subr.bf16.mxu0 0
    %1832 = vmatpush2.bf16.msra.mxu0 %v609
    %1833 = vmatprep.mubr.bf16.mxu0 %v1130
    %1834 = vmatmul.mubr.bf16.gmra.mxu0 %v1128
    %v1835 = vpop.f32.mrf.mxu0
    %v1836 = vadd.f32 %v1796, %v1835
    %v1837 = vpop.f32.mrf.mxu0
    %v1838 = vpop.f32.mrf.mxu0
    %v1839 = vpop.f32.mrf.mxu0
    %1840 = vdwg.mxu0
    %1841 = vmatprep.subr.bf16.mxu0 0
    %1842 = vmatpush1.bf16.msra.mxu0 %v624
    %1843 = vmatprep.subr.bf16.mxu0 0
    %1844 = vmatpush1.bf16.msra.mxu0 %v623
    %1845 = vmatprep.subr.bf16.mxu0 0
    %1846 = vmatpush1.bf16.msra.mxu0 %v622
    %1847 = vmatprep.subr.bf16.mxu0 0
    %1848 = vmatpush1.bf16.msra.mxu0 %v621
    %1849 = vmatprep.subr.bf16.mxu0 0
    %1850 = vmatpush1.bf16.msra.mxu0 %v620
    %1851 = vmatprep.subr.bf16.mxu0 0
    %1852 = vmatpush1.bf16.msra.mxu0 %v619
    %1853 = vmatprep.subr.bf16.mxu0 0
    %1854 = vmatpush1.bf16.msra.mxu0 %v618
    %1855 = vmatprep.subr.bf16.mxu0 0
    %1856 = vmatpush1.bf16.msra.mxu0 %v617
    %1857 = vmatprep.subr.bf16.mxu0 0
    %1858 = vmatpush2.bf16.msra.mxu0 %v632
    %1859 = vmatprep.subr.bf16.mxu0 0
    %1860 = vmatpush2.bf16.msra.mxu0 %v631
    %1861 = vmatprep.subr.bf16.mxu0 0
    %1862 = vmatpush2.bf16.msra.mxu0 %v630
    %1863 = vmatprep.subr.bf16.mxu0 0
    %1864 = vmatpush2.bf16.msra.mxu0 %v629
    %1865 = vmatprep.subr.bf16.mxu0 0
    %1866 = vmatpush2.bf16.msra.mxu0 %v628
    %1867 = vmatprep.subr.bf16.mxu0 0
    %1868 = vmatpush2.bf16.msra.mxu0 %v627
    %1869 = vmatprep.subr.bf16.mxu0 0
    %1870 = vmatpush2.bf16.msra.mxu0 %v626
    %1871 = vmatprep.subr.bf16.mxu0 0
    %1872 = vmatpush2.bf16.msra.mxu0 %v625
    %1873 = vmatprep.mubr.bf16.mxu0 %v1127
    %1874 = vmatmul.mubr.bf16.gmra.mxu0 %v1113
    %v1875 = vpop.f32.mrf.mxu0
    %v1876 = vadd.f32 %v1836, %v1875
    %v1877 = vpop.f32.mrf.mxu0
    %v1878 = vpop.f32.mrf.mxu0
    %v1879 = vpop.f32.mrf.mxu0
    %1880 = vdwg.mxu0
    %1881 = vmatprep.subr.bf16.mxu0 0
    %1882 = vmatpush1.bf16.msra.mxu0 %v640
    %1883 = vmatprep.subr.bf16.mxu0 0
    %1884 = vmatpush1.bf16.msra.mxu0 %v639
    %1885 = vmatprep.subr.bf16.mxu0 0
    %1886 = vmatpush1.bf16.msra.mxu0 %v638
    %1887 = vmatprep.subr.bf16.mxu0 0
    %1888 = vmatpush1.bf16.msra.mxu0 %v637
    %1889 = vmatprep.subr.bf16.mxu0 0
    %1890 = vmatpush1.bf16.msra.mxu0 %v636
    %1891 = vmatprep.subr.bf16.mxu0 0
    %1892 = vmatpush1.bf16.msra.mxu0 %v635
    %1893 = vmatprep.subr.bf16.mxu0 0
    %1894 = vmatpush1.bf16.msra.mxu0 %v634
    %1895 = vmatprep.subr.bf16.mxu0 0
    %1896 = vmatpush1.bf16.msra.mxu0 %v633
    %1897 = vmatprep.subr.bf16.mxu0 0
    %1898 = vmatpush2.bf16.msra.mxu0 %v648
    %1899 = vmatprep.subr.bf16.mxu0 0
    %1900 = vmatpush2.bf16.msra.mxu0 %v647
    %1901 = vmatprep.subr.bf16.mxu0 0
    %1902 = vmatpush2.bf16.msra.mxu0 %v646
    %1903 = vmatprep.subr.bf16.mxu0 0
    %1904 = vmatpush2.bf16.msra.mxu0 %v645
    %1905 = vmatprep.subr.bf16.mxu0 0
    %1906 = vmatpush2.bf16.msra.mxu0 %v644
    %1907 = vmatprep.subr.bf16.mxu0 0
    %1908 = vmatpush2.bf16.msra.mxu0 %v643
    %1909 = vmatprep.subr.bf16.mxu0 0
    %1910 = vmatpush2.bf16.msra.mxu0 %v642
    %1911 = vmatprep.subr.bf16.mxu0 0
    %1912 = vmatpush2.bf16.msra.mxu0 %v641
    %1913 = vmatprep.mubr.bf16.mxu0 %v1131
    %1914 = vmatmul.mubr.bf16.gmra.mxu0 %v1129
    %v1915 = vpop.f32.mrf.mxu0
    %v1916 = vadd.f32 %v1876, %v1915
    %v1917 = vpop.f32.mrf.mxu0
    %v1918 = vpop.f32.mrf.mxu0
    %v1919 = vpop.f32.mrf.mxu0
    %1920 = vdwg.mxu0
    %1921 = vmatprep.subr.bf16.mxu0 0
    %1922 = vmatpush1.bf16.msra.mxu0 %v656
    %1923 = vmatprep.subr.bf16.mxu0 0
    %1924 = vmatpush1.bf16.msra.mxu0 %v655
    %1925 = vmatprep.subr.bf16.mxu0 0
    %1926 = vmatpush1.bf16.msra.mxu0 %v654
    %1927 = vmatprep.subr.bf16.mxu0 0
    %1928 = vmatpush1.bf16.msra.mxu0 %v653
    %1929 = vmatprep.subr.bf16.mxu0 0
    %1930 = vmatpush1.bf16.msra.mxu0 %v652
    %1931 = vmatprep.subr.bf16.mxu0 0
    %1932 = vmatpush1.bf16.msra.mxu0 %v651
    %1933 = vmatprep.subr.bf16.mxu0 0
    %1934 = vmatpush1.bf16.msra.mxu0 %v650
    %1935 = vmatprep.subr.bf16.mxu0 0
    %1936 = vmatpush1.bf16.msra.mxu0 %v649
    %1937 = vmatprep.subr.bf16.mxu0 0
    %1938 = vmatpush2.bf16.msra.mxu0 %v664
    %1939 = vmatprep.subr.bf16.mxu0 0
    %1940 = vmatpush2.bf16.msra.mxu0 %v663
    %1941 = vmatprep.subr.bf16.mxu0 0
    %1942 = vmatpush2.bf16.msra.mxu0 %v662
    %1943 = vmatprep.subr.bf16.mxu0 0
    %1944 = vmatpush2.bf16.msra.mxu0 %v661
    %1945 = vmatprep.subr.bf16.mxu0 0
    %1946 = vmatpush2.bf16.msra.mxu0 %v660
    %1947 = vmatprep.subr.bf16.mxu0 0
    %1948 = vmatpush2.bf16.msra.mxu0 %v659
    %1949 = vmatprep.subr.bf16.mxu0 0
    %1950 = vmatpush2.bf16.msra.mxu0 %v658
    %1951 = vmatprep.subr.bf16.mxu0 0
    %1952 = vmatpush2.bf16.msra.mxu0 %v657
    %1953 = vmatprep.mubr.bf16.mxu0 %v1169
    %1954 = vmatmul.mubr.bf16.gmra.mxu0 %v1155
    %v1955 = vpop.f32.mrf.mxu0
    %v1956 = vadd.f32 %v1916, %v1955
    %v1957 = vpop.f32.mrf.mxu0
    %v1958 = vpop.f32.mrf.mxu0
    %v1959 = vpop.f32.mrf.mxu0
    %1960 = vdwg.mxu0
    %1961 = vmatprep.subr.bf16.mxu0 0
    %1962 = vmatpush1.bf16.msra.mxu0 %v672
    %1963 = vmatprep.subr.bf16.mxu0 0
    %1964 = vmatpush1.bf16.msra.mxu0 %v671
    %1965 = vmatprep.subr.bf16.mxu0 0
    %1966 = vmatpush1.bf16.msra.mxu0 %v670
    %1967 = vmatprep.subr.bf16.mxu0 0
    %1968 = vmatpush1.bf16.msra.mxu0 %v669
    %1969 = vmatprep.subr.bf16.mxu0 0
    %1970 = vmatpush1.bf16.msra.mxu0 %v668
    %1971 = vmatprep.subr.bf16.mxu0 0
    %1972 = vmatpush1.bf16.msra.mxu0 %v667
    %1973 = vmatprep.subr.bf16.mxu0 0
    %1974 = vmatpush1.bf16.msra.mxu0 %v666
    %1975 = vmatprep.subr.bf16.mxu0 0
    %1976 = vmatpush1.bf16.msra.mxu0 %v665
    %1977 = vmatprep.subr.bf16.mxu0 0
    %1978 = vmatpush2.bf16.msra.mxu0 %v680
    %1979 = vmatprep.subr.bf16.mxu0 0
    %1980 = vmatpush2.bf16.msra.mxu0 %v679
    %1981 = vmatprep.subr.bf16.mxu0 0
    %1982 = vmatpush2.bf16.msra.mxu0 %v678
    %1983 = vmatprep.subr.bf16.mxu0 0
    %1984 = vmatpush2.bf16.msra.mxu0 %v677
    %1985 = vmatprep.subr.bf16.mxu0 0
    %1986 = vmatpush2.bf16.msra.mxu0 %v676
    %1987 = vmatprep.subr.bf16.mxu0 0
    %1988 = vmatpush2.bf16.msra.mxu0 %v675
    %1989 = vmatprep.subr.bf16.mxu0 0
    %1990 = vmatpush2.bf16.msra.mxu0 %v674
    %1991 = vmatprep.subr.bf16.mxu0 0
    %1992 = vmatpush2.bf16.msra.mxu0 %v673
    %1993 = vmatprep.mubr.bf16.mxu0 %v1179
    %1994 = vmatmul.mubr.bf16.gmra.mxu0 %v1177
    %v1995 = vpop.f32.mrf.mxu0
    %v1996 = vadd.f32 %v1956, %v1995
    %v1997 = vpop.f32.mrf.mxu0
    %v1998 = vpop.f32.mrf.mxu0
    %v1999 = vpop.f32.mrf.mxu0
    %2000 = vdwg.mxu0
    %2001 = vmatprep.subr.bf16.mxu0 0
    %2002 = vmatpush1.bf16.msra.mxu0 %v688
    %2003 = vmatprep.subr.bf16.mxu0 0
    %2004 = vmatpush1.bf16.msra.mxu0 %v687
    %2005 = vmatprep.subr.bf16.mxu0 0
    %2006 = vmatpush1.bf16.msra.mxu0 %v686
    %2007 = vmatprep.subr.bf16.mxu0 0
    %2008 = vmatpush1.bf16.msra.mxu0 %v685
    %2009 = vmatprep.subr.bf16.mxu0 0
    %2010 = vmatpush1.bf16.msra.mxu0 %v684
    %2011 = vmatprep.subr.bf16.mxu0 0
    %2012 = vmatpush1.bf16.msra.mxu0 %v683
    %2013 = vmatprep.subr.bf16.mxu0 0
    %2014 = vmatpush1.bf16.msra.mxu0 %v682
    %2015 = vmatprep.subr.bf16.mxu0 0
    %2016 = vmatpush1.bf16.msra.mxu0 %v681
    %2017 = vmatprep.subr.bf16.mxu0 0
    %2018 = vmatpush2.bf16.msra.mxu0 %v696
    %2019 = vmatprep.subr.bf16.mxu0 0
    %2020 = vmatpush2.bf16.msra.mxu0 %v695
    %2021 = vmatprep.subr.bf16.mxu0 0
    %2022 = vmatpush2.bf16.msra.mxu0 %v694
    %2023 = vmatprep.subr.bf16.mxu0 0
    %2024 = vmatpush2.bf16.msra.mxu0 %v693
    %2025 = vmatprep.subr.bf16.mxu0 0
    %2026 = vmatpush2.bf16.msra.mxu0 %v692
    %2027 = vmatprep.subr.bf16.mxu0 0
    %2028 = vmatpush2.bf16.msra.mxu0 %v691
    %2029 = vmatprep.subr.bf16.mxu0 0
    %2030 = vmatpush2.bf16.msra.mxu0 %v690
    %2031 = vmatprep.subr.bf16.mxu0 0
    %2032 = vmatpush2.bf16.msra.mxu0 %v689
    %2033 = vmatprep.mubr.bf16.mxu0 %v1176
    %2034 = vmatmul.mubr.bf16.gmra.mxu0 %v1162
    %v2035 = vpop.f32.mrf.mxu0
    %v2036 = vadd.f32 %v1996, %v2035
    %v2037 = vpop.f32.mrf.mxu0
    %v2038 = vpop.f32.mrf.mxu0
    %v2039 = vpop.f32.mrf.mxu0
    %2040 = vdwg.mxu0
    %2041 = vmatprep.subr.bf16.mxu0 0
    %2042 = vmatpush1.bf16.msra.mxu0 %v704
    %2043 = vmatprep.subr.bf16.mxu0 0
    %2044 = vmatpush1.bf16.msra.mxu0 %v703
    %2045 = vmatprep.subr.bf16.mxu0 0
    %2046 = vmatpush1.bf16.msra.mxu0 %v702
    %2047 = vmatprep.subr.bf16.mxu0 0
    %2048 = vmatpush1.bf16.msra.mxu0 %v701
    %2049 = vmatprep.subr.bf16.mxu0 0
    %2050 = vmatpush1.bf16.msra.mxu0 %v700
    %2051 = vmatprep.subr.bf16.mxu0 0
    %2052 = vmatpush1.bf16.msra.mxu0 %v699
    %2053 = vmatprep.subr.bf16.mxu0 0
    %2054 = vmatpush1.bf16.msra.mxu0 %v698
    %2055 = vmatprep.subr.bf16.mxu0 0
    %2056 = vmatpush1.bf16.msra.mxu0 %v697
    %2057 = vmatprep.subr.bf16.mxu0 0
    %2058 = vmatpush2.bf16.msra.mxu0 %v712
    %2059 = vmatprep.subr.bf16.mxu0 0
    %2060 = vmatpush2.bf16.msra.mxu0 %v711
    %2061 = vmatprep.subr.bf16.mxu0 0
    %2062 = vmatpush2.bf16.msra.mxu0 %v710
    %2063 = vmatprep.subr.bf16.mxu0 0
    %2064 = vmatpush2.bf16.msra.mxu0 %v709
    %2065 = vmatprep.subr.bf16.mxu0 0
    %2066 = vmatpush2.bf16.msra.mxu0 %v708
    %2067 = vmatprep.subr.bf16.mxu0 0
    %2068 = vmatpush2.bf16.msra.mxu0 %v707
    %2069 = vmatprep.subr.bf16.mxu0 0
    %2070 = vmatpush2.bf16.msra.mxu0 %v706
    %2071 = vmatprep.subr.bf16.mxu0 0
    %2072 = vmatpush2.bf16.msra.mxu0 %v705
    %2073 = vmatprep.mubr.bf16.mxu0 %v1180
    %2074 = vmatmul.mubr.bf16.gmra.mxu0 %v1178
    %v2075 = vpop.f32.mrf.mxu0
    %v2076 = vadd.f32 %v2036, %v2075
    %v2077 = vpop.f32.mrf.mxu0
    %v2078 = vpop.f32.mrf.mxu0
    %v2079 = vpop.f32.mrf.mxu0
    %2080 = vdwg.mxu0
    %2081 = vmatprep.subr.bf16.mxu0 0
    %2082 = vmatpush1.bf16.msra.mxu0 %v720
    %2083 = vmatprep.subr.bf16.mxu0 0
    %2084 = vmatpush1.bf16.msra.mxu0 %v719
    %2085 = vmatprep.subr.bf16.mxu0 0
    %2086 = vmatpush1.bf16.msra.mxu0 %v718
    %2087 = vmatprep.subr.bf16.mxu0 0
    %2088 = vmatpush1.bf16.msra.mxu0 %v717
    %2089 = vmatprep.subr.bf16.mxu0 0
    %2090 = vmatpush1.bf16.msra.mxu0 %v716
    %2091 = vmatprep.subr.bf16.mxu0 0
    %2092 = vmatpush1.bf16.msra.mxu0 %v715
    %2093 = vmatprep.subr.bf16.mxu0 0
    %2094 = vmatpush1.bf16.msra.mxu0 %v714
    %2095 = vmatprep.subr.bf16.mxu0 0
    %2096 = vmatpush1.bf16.msra.mxu0 %v713
    %2097 = vmatprep.subr.bf16.mxu0 0
    %2098 = vmatpush2.bf16.msra.mxu0 %v728
    %2099 = vmatprep.subr.bf16.mxu0 0
    %2100 = vmatpush2.bf16.msra.mxu0 %v727
    %2101 = vmatprep.subr.bf16.mxu0 0
    %2102 = vmatpush2.bf16.msra.mxu0 %v726
    %2103 = vmatprep.subr.bf16.mxu0 0
    %2104 = vmatpush2.bf16.msra.mxu0 %v725
    %2105 = vmatprep.subr.bf16.mxu0 0
    %2106 = vmatpush2.bf16.msra.mxu0 %v724
    %2107 = vmatprep.subr.bf16.mxu0 0
    %2108 = vmatpush2.bf16.msra.mxu0 %v723
    %2109 = vmatprep.subr.bf16.mxu0 0
    %2110 = vmatpush2.bf16.msra.mxu0 %v722
    %2111 = vmatprep.subr.bf16.mxu0 0
    %2112 = vmatpush2.bf16.msra.mxu0 %v721
    %2113 = vmatprep.mubr.bf16.mxu0 %v1218
    %2114 = vmatmul.mubr.bf16.gmra.mxu0 %v1204
    %v2115 = vpop.f32.mrf.mxu0
    %v2116 = vadd.f32 %v2076, %v2115
    %v2117 = vpop.f32.mrf.mxu0
    %v2118 = vpop.f32.mrf.mxu0
    %v2119 = vpop.f32.mrf.mxu0
    %2120 = vdwg.mxu0
    %2121 = vmatprep.subr.bf16.mxu0 0
    %2122 = vmatpush1.bf16.msra.mxu0 %v736
    %2123 = vmatprep.subr.bf16.mxu0 0
    %2124 = vmatpush1.bf16.msra.mxu0 %v735
    %2125 = vmatprep.subr.bf16.mxu0 0
    %2126 = vmatpush1.bf16.msra.mxu0 %v734
    %2127 = vmatprep.subr.bf16.mxu0 0
    %2128 = vmatpush1.bf16.msra.mxu0 %v733
    %2129 = vmatprep.subr.bf16.mxu0 0
    %2130 = vmatpush1.bf16.msra.mxu0 %v732
    %2131 = vmatprep.subr.bf16.mxu0 0
    %2132 = vmatpush1.bf16.msra.mxu0 %v731
    %2133 = vmatprep.subr.bf16.mxu0 0
    %2134 = vmatpush1.bf16.msra.mxu0 %v730
    %2135 = vmatprep.subr.bf16.mxu0 0
    %2136 = vmatpush1.bf16.msra.mxu0 %v729
    %2137 = vmatprep.subr.bf16.mxu0 0
    %2138 = vmatpush2.bf16.msra.mxu0 %v744
    %2139 = vmatprep.subr.bf16.mxu0 0
    %2140 = vmatpush2.bf16.msra.mxu0 %v743
    %2141 = vmatprep.subr.bf16.mxu0 0
    %2142 = vmatpush2.bf16.msra.mxu0 %v742
    %2143 = vmatprep.subr.bf16.mxu0 0
    %2144 = vmatpush2.bf16.msra.mxu0 %v741
    %2145 = vmatprep.subr.bf16.mxu0 0
    %2146 = vmatpush2.bf16.msra.mxu0 %v740
    %2147 = vmatprep.subr.bf16.mxu0 0
    %2148 = vmatpush2.bf16.msra.mxu0 %v739
    %2149 = vmatprep.subr.bf16.mxu0 0
    %2150 = vmatpush2.bf16.msra.mxu0 %v738
    %2151 = vmatprep.subr.bf16.mxu0 0
    %2152 = vmatpush2.bf16.msra.mxu0 %v737
    %2153 = vmatprep.mubr.bf16.mxu0 %v1228
    %2154 = vmatmul.mubr.bf16.gmra.mxu0 %v1226
    %v2155 = vpop.f32.mrf.mxu0
    %v2156 = vadd.f32 %v2116, %v2155
    %v2157 = vpop.f32.mrf.mxu0
    %v2158 = vpop.f32.mrf.mxu0
    %v2159 = vpop.f32.mrf.mxu0
    %2160 = vdwg.mxu0
    %2161 = vmatprep.subr.bf16.mxu0 0
    %2162 = vmatpush1.bf16.msra.mxu0 %v752
    %2163 = vmatprep.subr.bf16.mxu0 0
    %2164 = vmatpush1.bf16.msra.mxu0 %v751
    %2165 = vmatprep.subr.bf16.mxu0 0
    %2166 = vmatpush1.bf16.msra.mxu0 %v750
    %2167 = vmatprep.subr.bf16.mxu0 0
    %2168 = vmatpush1.bf16.msra.mxu0 %v749
    %2169 = vmatprep.subr.bf16.mxu0 0
    %2170 = vmatpush1.bf16.msra.mxu0 %v748
    %2171 = vmatprep.subr.bf16.mxu0 0
    %2172 = vmatpush1.bf16.msra.mxu0 %v747
    %2173 = vmatprep.subr.bf16.mxu0 0
    %2174 = vmatpush1.bf16.msra.mxu0 %v746
    %2175 = vmatprep.subr.bf16.mxu0 0
    %2176 = vmatpush1.bf16.msra.mxu0 %v745
    %2177 = vmatprep.subr.bf16.mxu0 0
    %2178 = vmatpush2.bf16.msra.mxu0 %v760
    %2179 = vmatprep.subr.bf16.mxu0 0
    %2180 = vmatpush2.bf16.msra.mxu0 %v759
    %2181 = vmatprep.subr.bf16.mxu0 0
    %2182 = vmatpush2.bf16.msra.mxu0 %v758
    %2183 = vmatprep.subr.bf16.mxu0 0
    %2184 = vmatpush2.bf16.msra.mxu0 %v757
    %2185 = vmatprep.subr.bf16.mxu0 0
    %2186 = vmatpush2.bf16.msra.mxu0 %v756
    %2187 = vmatprep.subr.bf16.mxu0 0
    %2188 = vmatpush2.bf16.msra.mxu0 %v755
    %2189 = vmatprep.subr.bf16.mxu0 0
    %2190 = vmatpush2.bf16.msra.mxu0 %v754
    %2191 = vmatprep.subr.bf16.mxu0 0
    %2192 = vmatpush2.bf16.msra.mxu0 %v753
    %2193 = vmatprep.mubr.bf16.mxu0 %v1225
    %2194 = vmatmul.mubr.bf16.gmra.mxu0 %v1211
    %v2195 = vpop.f32.mrf.mxu0
    %v2196 = vadd.f32 %v2156, %v2195
    %v2197 = vpop.f32.mrf.mxu0
    %v2198 = vpop.f32.mrf.mxu0
    %v2199 = vpop.f32.mrf.mxu0
    %2200 = vdwg.mxu0
    %2201 = vmatprep.subr.bf16.mxu0 0
    %2202 = vmatpush1.bf16.msra.mxu0 %v768
    %2203 = vmatprep.subr.bf16.mxu0 0
    %2204 = vmatpush1.bf16.msra.mxu0 %v767
    %2205 = vmatprep.subr.bf16.mxu0 0
    %2206 = vmatpush1.bf16.msra.mxu0 %v766
    %2207 = vmatprep.subr.bf16.mxu0 0
    %2208 = vmatpush1.bf16.msra.mxu0 %v765
    %2209 = vmatprep.subr.bf16.mxu0 0
    %2210 = vmatpush1.bf16.msra.mxu0 %v764
    %2211 = vmatprep.subr.bf16.mxu0 0
    %2212 = vmatpush1.bf16.msra.mxu0 %v763
    %2213 = vmatprep.subr.bf16.mxu0 0
    %2214 = vmatpush1.bf16.msra.mxu0 %v762
    %2215 = vmatprep.subr.bf16.mxu0 0
    %2216 = vmatpush1.bf16.msra.mxu0 %v761
    %2217 = vmatprep.subr.bf16.mxu0 0
    %2218 = vmatpush2.bf16.msra.mxu0 %v776
    %2219 = vmatprep.subr.bf16.mxu0 0
    %2220 = vmatpush2.bf16.msra.mxu0 %v775
    %2221 = vmatprep.subr.bf16.mxu0 0
    %2222 = vmatpush2.bf16.msra.mxu0 %v774
    %2223 = vmatprep.subr.bf16.mxu0 0
    %2224 = vmatpush2.bf16.msra.mxu0 %v773
    %2225 = vmatprep.subr.bf16.mxu0 0
    %2226 = vmatpush2.bf16.msra.mxu0 %v772
    %2227 = vmatprep.subr.bf16.mxu0 0
    %2228 = vmatpush2.bf16.msra.mxu0 %v771
    %2229 = vmatprep.subr.bf16.mxu0 0
    %2230 = vmatpush2.bf16.msra.mxu0 %v770
    %2231 = vmatprep.subr.bf16.mxu0 0
    %2232 = vmatpush2.bf16.msra.mxu0 %v769
    %2233 = vmatprep.mubr.bf16.mxu0 %v1229
    %2234 = vmatmul.mubr.bf16.gmra.mxu0 %v1227
    %v2235 = vpop.f32.mrf.mxu0
    %v2236 = vadd.f32 %v2196, %v2235
    %v2237 = vpop.f32.mrf.mxu0
    %v2238 = vpop.f32.mrf.mxu0
    %v2239 = vpop.f32.mrf.mxu0
    %2240 = vdwg.mxu0
    %2241 = vmatprep.subr.bf16.mxu0 0
    %2242 = vmatpush1.bf16.msra.mxu0 %v784
    %2243 = vmatprep.subr.bf16.mxu0 0
    %2244 = vmatpush1.bf16.msra.mxu0 %v783
    %2245 = vmatprep.subr.bf16.mxu0 0
    %2246 = vmatpush1.bf16.msra.mxu0 %v782
    %2247 = vmatprep.subr.bf16.mxu0 0
    %2248 = vmatpush1.bf16.msra.mxu0 %v781
    %2249 = vmatprep.subr.bf16.mxu0 0
    %2250 = vmatpush1.bf16.msra.mxu0 %v780
    %2251 = vmatprep.subr.bf16.mxu0 0
    %2252 = vmatpush1.bf16.msra.mxu0 %v779
    %2253 = vmatprep.subr.bf16.mxu0 0
    %2254 = vmatpush1.bf16.msra.mxu0 %v778
    %2255 = vmatprep.subr.bf16.mxu0 0
    %2256 = vmatpush1.bf16.msra.mxu0 %v777
    %2257 = vmatprep.subr.bf16.mxu0 0
    %2258 = vmatpush2.bf16.msra.mxu0 %v792
    %2259 = vmatprep.subr.bf16.mxu0 0
    %2260 = vmatpush2.bf16.msra.mxu0 %v791
    %2261 = vmatprep.subr.bf16.mxu0 0
    %2262 = vmatpush2.bf16.msra.mxu0 %v790
    %2263 = vmatprep.subr.bf16.mxu0 0
    %2264 = vmatpush2.bf16.msra.mxu0 %v789
    %2265 = vmatprep.subr.bf16.mxu0 0
    %2266 = vmatpush2.bf16.msra.mxu0 %v788
    %2267 = vmatprep.subr.bf16.mxu0 0
    %2268 = vmatpush2.bf16.msra.mxu0 %v787
    %2269 = vmatprep.subr.bf16.mxu0 0
    %2270 = vmatpush2.bf16.msra.mxu0 %v786
    %2271 = vmatprep.subr.bf16.mxu0 0
    %2272 = vmatpush2.bf16.msra.mxu0 %v785
    %2273 = vmatprep.mubr.bf16.mxu0 %v1267
    %2274 = vmatmul.mubr.bf16.gmra.mxu0 %v1253
    %v2275 = vpop.f32.mrf.mxu0
    %v2276 = vadd.f32 %v2236, %v2275
    %v2277 = vpop.f32.mrf.mxu0
    %v2278 = vpop.f32.mrf.mxu0
    %v2279 = vpop.f32.mrf.mxu0
    %2280 = vdwg.mxu0
    %2281 = vmatprep.subr.bf16.mxu0 0
    %2282 = vmatpush1.bf16.msra.mxu0 %v800
    %2283 = vmatprep.subr.bf16.mxu0 0
    %2284 = vmatpush1.bf16.msra.mxu0 %v799
    %2285 = vmatprep.subr.bf16.mxu0 0
    %2286 = vmatpush1.bf16.msra.mxu0 %v798
    %2287 = vmatprep.subr.bf16.mxu0 0
    %2288 = vmatpush1.bf16.msra.mxu0 %v797
    %2289 = vmatprep.subr.bf16.mxu0 0
    %2290 = vmatpush1.bf16.msra.mxu0 %v796
    %2291 = vmatprep.subr.bf16.mxu0 0
    %2292 = vmatpush1.bf16.msra.mxu0 %v795
    %2293 = vmatprep.subr.bf16.mxu0 0
    %2294 = vmatpush1.bf16.msra.mxu0 %v794
    %2295 = vmatprep.subr.bf16.mxu0 0
    %2296 = vmatpush1.bf16.msra.mxu0 %v793
    %2297 = vmatprep.subr.bf16.mxu0 0
    %2298 = vmatpush2.bf16.msra.mxu0 %v808
    %2299 = vmatprep.subr.bf16.mxu0 0
    %2300 = vmatpush2.bf16.msra.mxu0 %v807
    %2301 = vmatprep.subr.bf16.mxu0 0
    %2302 = vmatpush2.bf16.msra.mxu0 %v806
    %2303 = vmatprep.subr.bf16.mxu0 0
    %2304 = vmatpush2.bf16.msra.mxu0 %v805
    %2305 = vmatprep.subr.bf16.mxu0 0
    %2306 = vmatpush2.bf16.msra.mxu0 %v804
    %2307 = vmatprep.subr.bf16.mxu0 0
    %2308 = vmatpush2.bf16.msra.mxu0 %v803
    %2309 = vmatprep.subr.bf16.mxu0 0
    %2310 = vmatpush2.bf16.msra.mxu0 %v802
    %2311 = vmatprep.subr.bf16.mxu0 0
    %2312 = vmatpush2.bf16.msra.mxu0 %v801
    %2313 = vmatprep.mubr.bf16.mxu0 %v1277
    %2314 = vmatmul.mubr.bf16.gmra.mxu0 %v1275
    %v2315 = vpop.f32.mrf.mxu0
    %v2316 = vadd.f32 %v2276, %v2315
    %v2317 = vpop.f32.mrf.mxu0
    %v2318 = vpop.f32.mrf.mxu0
    %v2319 = vpop.f32.mrf.mxu0
    %2320 = vdwg.mxu0
    %2321 = vmatprep.subr.bf16.mxu0 0
    %2322 = vmatpush1.bf16.msra.mxu0 %v816
    %2323 = vmatprep.subr.bf16.mxu0 0
    %2324 = vmatpush1.bf16.msra.mxu0 %v815
    %2325 = vmatprep.subr.bf16.mxu0 0
    %2326 = vmatpush1.bf16.msra.mxu0 %v814
    %2327 = vmatprep.subr.bf16.mxu0 0
    %2328 = vmatpush1.bf16.msra.mxu0 %v813
    %2329 = vmatprep.subr.bf16.mxu0 0
    %2330 = vmatpush1.bf16.msra.mxu0 %v812
    %2331 = vmatprep.subr.bf16.mxu0 0
    %2332 = vmatpush1.bf16.msra.mxu0 %v811
    %2333 = vmatprep.subr.bf16.mxu0 0
    %2334 = vmatpush1.bf16.msra.mxu0 %v810
    %2335 = vmatprep.subr.bf16.mxu0 0
    %2336 = vmatpush1.bf16.msra.mxu0 %v809
    %2337 = vmatprep.subr.bf16.mxu0 0
    %2338 = vmatpush2.bf16.msra.mxu0 %v824
    %2339 = vmatprep.subr.bf16.mxu0 0
    %2340 = vmatpush2.bf16.msra.mxu0 %v823
    %2341 = vmatprep.subr.bf16.mxu0 0
    %2342 = vmatpush2.bf16.msra.mxu0 %v822
    %2343 = vmatprep.subr.bf16.mxu0 0
    %2344 = vmatpush2.bf16.msra.mxu0 %v821
    %2345 = vmatprep.subr.bf16.mxu0 0
    %2346 = vmatpush2.bf16.msra.mxu0 %v820
    %2347 = vmatprep.subr.bf16.mxu0 0
    %2348 = vmatpush2.bf16.msra.mxu0 %v819
    %2349 = vmatprep.subr.bf16.mxu0 0
    %2350 = vmatpush2.bf16.msra.mxu0 %v818
    %2351 = vmatprep.subr.bf16.mxu0 0
    %2352 = vmatpush2.bf16.msra.mxu0 %v817
    %2353 = vmatprep.mubr.bf16.mxu0 %v1274
    %2354 = vmatmul.mubr.bf16.gmra.mxu0 %v1260
    %v2355 = vpop.f32.mrf.mxu0
    %v2356 = vadd.f32 %v2316, %v2355
    %v2357 = vpop.f32.mrf.mxu0
    %v2358 = vpop.f32.mrf.mxu0
    %v2359 = vpop.f32.mrf.mxu0
    %2360 = vdwg.mxu0
    %2361 = vmatprep.subr.bf16.mxu0 0
    %2362 = vmatpush1.bf16.msra.mxu0 %v832
    %2363 = vmatprep.subr.bf16.mxu0 0
    %2364 = vmatpush1.bf16.msra.mxu0 %v831
    %2365 = vmatprep.subr.bf16.mxu0 0
    %2366 = vmatpush1.bf16.msra.mxu0 %v830
    %2367 = vmatprep.subr.bf16.mxu0 0
    %2368 = vmatpush1.bf16.msra.mxu0 %v829
    %2369 = vmatprep.subr.bf16.mxu0 0
    %2370 = vmatpush1.bf16.msra.mxu0 %v828
    %2371 = vmatprep.subr.bf16.mxu0 0
    %2372 = vmatpush1.bf16.msra.mxu0 %v827
    %2373 = vmatprep.subr.bf16.mxu0 0
    %2374 = vmatpush1.bf16.msra.mxu0 %v826
    %2375 = vmatprep.subr.bf16.mxu0 0
    %2376 = vmatpush1.bf16.msra.mxu0 %v825
    %2377 = vmatprep.subr.bf16.mxu0 0
    %2378 = vmatpush2.bf16.msra.mxu0 %v840
    %2379 = vmatprep.subr.bf16.mxu0 0
    %2380 = vmatpush2.bf16.msra.mxu0 %v839
    %2381 = vmatprep.subr.bf16.mxu0 0
    %2382 = vmatpush2.bf16.msra.mxu0 %v838
    %2383 = vmatprep.subr.bf16.mxu0 0
    %2384 = vmatpush2.bf16.msra.mxu0 %v837
    %2385 = vmatprep.subr.bf16.mxu0 0
    %2386 = vmatpush2.bf16.msra.mxu0 %v836
    %2387 = vmatprep.subr.bf16.mxu0 0
    %2388 = vmatpush2.bf16.msra.mxu0 %v835
    %2389 = vmatprep.subr.bf16.mxu0 0
    %2390 = vmatpush2.bf16.msra.mxu0 %v834
    %2391 = vmatprep.subr.bf16.mxu0 0
    %2392 = vmatpush2.bf16.msra.mxu0 %v833
    %2393 = vmatprep.mubr.bf16.mxu0 %v1278
    %2394 = vmatmul.mubr.bf16.gmra.mxu0 %v1276
    %v2395 = vpop.f32.mrf.mxu0
    %v2396 = vadd.f32 %v2356, %v2395
    %v2397 = vpop.f32.mrf.mxu0
    %v2398 = vpop.f32.mrf.mxu0
    %v2399 = vpop.f32.mrf.mxu0
    %2400 = vdwg.mxu0
    %2401 = vmatprep.subr.bf16.mxu0 0
    %2402 = vmatpush1.bf16.msra.mxu0 %v848
    %2403 = vmatprep.subr.bf16.mxu0 0
    %2404 = vmatpush1.bf16.msra.mxu0 %v847
    %2405 = vmatprep.subr.bf16.mxu0 0
    %2406 = vmatpush1.bf16.msra.mxu0 %v846
    %2407 = vmatprep.subr.bf16.mxu0 0
    %2408 = vmatpush1.bf16.msra.mxu0 %v845
    %2409 = vmatprep.subr.bf16.mxu0 0
    %2410 = vmatpush1.bf16.msra.mxu0 %v844
    %2411 = vmatprep.subr.bf16.mxu0 0
    %2412 = vmatpush1.bf16.msra.mxu0 %v843
    %2413 = vmatprep.subr.bf16.mxu0 0
    %2414 = vmatpush1.bf16.msra.mxu0 %v842
    %2415 = vmatprep.subr.bf16.mxu0 0
    %2416 = vmatpush1.bf16.msra.mxu0 %v841
    %2417 = vmatprep.subr.bf16.mxu0 0
    %2418 = vmatpush2.bf16.msra.mxu0 %v856
    %2419 = vmatprep.subr.bf16.mxu0 0
    %2420 = vmatpush2.bf16.msra.mxu0 %v855
    %2421 = vmatprep.subr.bf16.mxu0 0
    %2422 = vmatpush2.bf16.msra.mxu0 %v854
    %2423 = vmatprep.subr.bf16.mxu0 0
    %2424 = vmatpush2.bf16.msra.mxu0 %v853
    %2425 = vmatprep.subr.bf16.mxu0 0
    %2426 = vmatpush2.bf16.msra.mxu0 %v852
    %2427 = vmatprep.subr.bf16.mxu0 0
    %2428 = vmatpush2.bf16.msra.mxu0 %v851
    %2429 = vmatprep.subr.bf16.mxu0 0
    %2430 = vmatpush2.bf16.msra.mxu0 %v850
    %2431 = vmatprep.subr.bf16.mxu0 0
    %2432 = vmatpush2.bf16.msra.mxu0 %v849
    %2433 = vmatprep.mubr.bf16.mxu0 %v1316
    %2434 = vmatmul.mubr.bf16.gmra.mxu0 %v1302
    %v2435 = vpop.f32.mrf.mxu0
    %v2436 = vadd.f32 %v2396, %v2435
    %v2437 = vpop.f32.mrf.mxu0
    %v2438 = vpop.f32.mrf.mxu0
    %v2439 = vpop.f32.mrf.mxu0
    %2440 = vdwg.mxu0
    %2441 = vmatprep.subr.bf16.mxu0 0
    %2442 = vmatpush1.bf16.msra.mxu0 %v864
    %2443 = vmatprep.subr.bf16.mxu0 0
    %2444 = vmatpush1.bf16.msra.mxu0 %v863
    %2445 = vmatprep.subr.bf16.mxu0 0
    %2446 = vmatpush1.bf16.msra.mxu0 %v862
    %2447 = vmatprep.subr.bf16.mxu0 0
    %2448 = vmatpush1.bf16.msra.mxu0 %v861
    %2449 = vmatprep.subr.bf16.mxu0 0
    %2450 = vmatpush1.bf16.msra.mxu0 %v860
    %2451 = vmatprep.subr.bf16.mxu0 0
    %2452 = vmatpush1.bf16.msra.mxu0 %v859
    %2453 = vmatprep.subr.bf16.mxu0 0
    %2454 = vmatpush1.bf16.msra.mxu0 %v858
    %2455 = vmatprep.subr.bf16.mxu0 0
    %2456 = vmatpush1.bf16.msra.mxu0 %v857
    %2457 = vmatprep.subr.bf16.mxu0 0
    %2458 = vmatpush2.bf16.msra.mxu0 %v872
    %2459 = vmatprep.subr.bf16.mxu0 0
    %2460 = vmatpush2.bf16.msra.mxu0 %v871
    %2461 = vmatprep.subr.bf16.mxu0 0
    %2462 = vmatpush2.bf16.msra.mxu0 %v870
    %2463 = vmatprep.subr.bf16.mxu0 0
    %2464 = vmatpush2.bf16.msra.mxu0 %v869
    %2465 = vmatprep.subr.bf16.mxu0 0
    %2466 = vmatpush2.bf16.msra.mxu0 %v868
    %2467 = vmatprep.subr.bf16.mxu0 0
    %2468 = vmatpush2.bf16.msra.mxu0 %v867
    %2469 = vmatprep.subr.bf16.mxu0 0
    %2470 = vmatpush2.bf16.msra.mxu0 %v866
    %2471 = vmatprep.subr.bf16.mxu0 0
    %2472 = vmatpush2.bf16.msra.mxu0 %v865
    %2473 = vmatprep.mubr.bf16.mxu0 %v1326
    %2474 = vmatmul.mubr.bf16.gmra.mxu0 %v1324
    %v2475 = vpop.f32.mrf.mxu0
    %v2476 = vadd.f32 %v2436, %v2475
    %v2477 = vpop.f32.mrf.mxu0
    %v2478 = vpop.f32.mrf.mxu0
    %v2479 = vpop.f32.mrf.mxu0
    %2480 = vdwg.mxu0
    %2481 = vmatprep.subr.bf16.mxu0 0
    %2482 = vmatpush1.bf16.msra.mxu0 %v880
    %2483 = vmatprep.subr.bf16.mxu0 0
    %2484 = vmatpush1.bf16.msra.mxu0 %v879
    %2485 = vmatprep.subr.bf16.mxu0 0
    %2486 = vmatpush1.bf16.msra.mxu0 %v878
    %2487 = vmatprep.subr.bf16.mxu0 0
    %2488 = vmatpush1.bf16.msra.mxu0 %v877
    %2489 = vmatprep.subr.bf16.mxu0 0
    %2490 = vmatpush1.bf16.msra.mxu0 %v876
    %2491 = vmatprep.subr.bf16.mxu0 0
    %2492 = vmatpush1.bf16.msra.mxu0 %v875
    %2493 = vmatprep.subr.bf16.mxu0 0
    %2494 = vmatpush1.bf16.msra.mxu0 %v874
    %2495 = vmatprep.subr.bf16.mxu0 0
    %2496 = vmatpush1.bf16.msra.mxu0 %v873
    %2497 = vmatprep.subr.bf16.mxu0 0
    %2498 = vmatpush2.bf16.msra.mxu0 %v888
    %2499 = vmatprep.subr.bf16.mxu0 0
    %2500 = vmatpush2.bf16.msra.mxu0 %v887
    %2501 = vmatprep.subr.bf16.mxu0 0
    %2502 = vmatpush2.bf16.msra.mxu0 %v886
    %2503 = vmatprep.subr.bf16.mxu0 0
    %2504 = vmatpush2.bf16.msra.mxu0 %v885
    %2505 = vmatprep.subr.bf16.mxu0 0
    %2506 = vmatpush2.bf16.msra.mxu0 %v884
    %2507 = vmatprep.subr.bf16.mxu0 0
    %2508 = vmatpush2.bf16.msra.mxu0 %v883
    %2509 = vmatprep.subr.bf16.mxu0 0
    %2510 = vmatpush2.bf16.msra.mxu0 %v882
    %2511 = vmatprep.subr.bf16.mxu0 0
    %2512 = vmatpush2.bf16.msra.mxu0 %v881
    %2513 = vmatprep.mubr.bf16.mxu0 %v1323
    %2514 = vmatmul.mubr.bf16.gmra.mxu0 %v1309
    %v2515 = vpop.f32.mrf.mxu0
    %v2516 = vadd.f32 %v2476, %v2515
    %v2517 = vpop.f32.mrf.mxu0
    %v2518 = vpop.f32.mrf.mxu0
    %v2519 = vpop.f32.mrf.mxu0
    %2520 = vdwg.mxu0
    %2521 = vmatprep.subr.bf16.mxu0 0
    %2522 = vmatpush1.bf16.msra.mxu0 %v896
    %2523 = vmatprep.subr.bf16.mxu0 0
    %2524 = vmatpush1.bf16.msra.mxu0 %v895
    %2525 = vmatprep.subr.bf16.mxu0 0
    %2526 = vmatpush1.bf16.msra.mxu0 %v894
    %2527 = vmatprep.subr.bf16.mxu0 0
    %2528 = vmatpush1.bf16.msra.mxu0 %v893
    %2529 = vmatprep.subr.bf16.mxu0 0
    %2530 = vmatpush1.bf16.msra.mxu0 %v892
    %2531 = vmatprep.subr.bf16.mxu0 0
    %2532 = vmatpush1.bf16.msra.mxu0 %v891
    %2533 = vmatprep.subr.bf16.mxu0 0
    %2534 = vmatpush1.bf16.msra.mxu0 %v890
    %2535 = vmatprep.subr.bf16.mxu0 0
    %2536 = vmatpush1.bf16.msra.mxu0 %v889
    %2537 = vmatprep.subr.bf16.mxu0 0
    %2538 = vmatpush2.bf16.msra.mxu0 %v904
    %2539 = vmatprep.subr.bf16.mxu0 0
    %2540 = vmatpush2.bf16.msra.mxu0 %v903
    %2541 = vmatprep.subr.bf16.mxu0 0
    %2542 = vmatpush2.bf16.msra.mxu0 %v902
    %2543 = vmatprep.subr.bf16.mxu0 0
    %2544 = vmatpush2.bf16.msra.mxu0 %v901
    %2545 = vmatprep.subr.bf16.mxu0 0
    %2546 = vmatpush2.bf16.msra.mxu0 %v900
    %2547 = vmatprep.subr.bf16.mxu0 0
    %2548 = vmatpush2.bf16.msra.mxu0 %v899
    %2549 = vmatprep.subr.bf16.mxu0 0
    %2550 = vmatpush2.bf16.msra.mxu0 %v898
    %2551 = vmatprep.subr.bf16.mxu0 0
    %2552 = vmatpush2.bf16.msra.mxu0 %v897
    %2553 = vmatprep.mubr.bf16.mxu0 %v1327
    %2554 = vmatmul.mubr.bf16.gmra.mxu0 %v1325
    %v2555 = vpop.f32.mrf.mxu0
    %v2556 = vadd.f32 %v2516, %v2555
    %v2557 = vpop.f32.mrf.mxu0
    %v2558 = vpop.f32.mrf.mxu0
    %v2559 = vpop.f32.mrf.mxu0
    %2560 = vdwg.mxu0
    %2561 = vmatprep.subr.bf16.mxu0 0
    %2562 = vmatpush1.bf16.msra.mxu0 %v912
    %2563 = vmatprep.subr.bf16.mxu0 0
    %2564 = vmatpush1.bf16.msra.mxu0 %v911
    %2565 = vmatprep.subr.bf16.mxu0 0
    %2566 = vmatpush1.bf16.msra.mxu0 %v910
    %2567 = vmatprep.subr.bf16.mxu0 0
    %2568 = vmatpush1.bf16.msra.mxu0 %v909
    %2569 = vmatprep.subr.bf16.mxu0 0
    %2570 = vmatpush1.bf16.msra.mxu0 %v908
    %2571 = vmatprep.subr.bf16.mxu0 0
    %2572 = vmatpush1.bf16.msra.mxu0 %v907
    %2573 = vmatprep.subr.bf16.mxu0 0
    %2574 = vmatpush1.bf16.msra.mxu0 %v906
    %2575 = vmatprep.subr.bf16.mxu0 0
    %2576 = vmatpush1.bf16.msra.mxu0 %v905
    %2577 = vmatprep.subr.bf16.mxu0 0
    %2578 = vmatpush2.bf16.msra.mxu0 %v920
    %2579 = vmatprep.subr.bf16.mxu0 0
    %2580 = vmatpush2.bf16.msra.mxu0 %v919
    %2581 = vmatprep.subr.bf16.mxu0 0
    %2582 = vmatpush2.bf16.msra.mxu0 %v918
    %2583 = vmatprep.subr.bf16.mxu0 0
    %2584 = vmatpush2.bf16.msra.mxu0 %v917
    %2585 = vmatprep.subr.bf16.mxu0 0
    %2586 = vmatpush2.bf16.msra.mxu0 %v916
    %2587 = vmatprep.subr.bf16.mxu0 0
    %2588 = vmatpush2.bf16.msra.mxu0 %v915
    %2589 = vmatprep.subr.bf16.mxu0 0
    %2590 = vmatpush2.bf16.msra.mxu0 %v914
    %2591 = vmatprep.subr.bf16.mxu0 0
    %2592 = vmatpush2.bf16.msra.mxu0 %v913
    %2593 = vmatprep.mubr.bf16.mxu0 %v1365
    %2594 = vmatmul.mubr.bf16.gmra.mxu0 %v1351
    %v2595 = vpop.f32.mrf.mxu0
    %v2596 = vadd.f32 %v2556, %v2595
    %v2597 = vpop.f32.mrf.mxu0
    %v2598 = vpop.f32.mrf.mxu0
    %v2599 = vpop.f32.mrf.mxu0
    %2600 = vdwg.mxu0
    %2601 = vmatprep.subr.bf16.mxu0 0
    %2602 = vmatpush1.bf16.msra.mxu0 %v928
    %2603 = vmatprep.subr.bf16.mxu0 0
    %2604 = vmatpush1.bf16.msra.mxu0 %v927
    %2605 = vmatprep.subr.bf16.mxu0 0
    %2606 = vmatpush1.bf16.msra.mxu0 %v926
    %2607 = vmatprep.subr.bf16.mxu0 0
    %2608 = vmatpush1.bf16.msra.mxu0 %v925
    %2609 = vmatprep.subr.bf16.mxu0 0
    %2610 = vmatpush1.bf16.msra.mxu0 %v924
    %2611 = vmatprep.subr.bf16.mxu0 0
    %2612 = vmatpush1.bf16.msra.mxu0 %v923
    %2613 = vmatprep.subr.bf16.mxu0 0
    %2614 = vmatpush1.bf16.msra.mxu0 %v922
    %2615 = vmatprep.subr.bf16.mxu0 0
    %2616 = vmatpush1.bf16.msra.mxu0 %v921
    %2617 = vmatprep.subr.bf16.mxu0 0
    %2618 = vmatpush2.bf16.msra.mxu0 %v936
    %2619 = vmatprep.subr.bf16.mxu0 0
    %2620 = vmatpush2.bf16.msra.mxu0 %v935
    %2621 = vmatprep.subr.bf16.mxu0 0
    %2622 = vmatpush2.bf16.msra.mxu0 %v934
    %2623 = vmatprep.subr.bf16.mxu0 0
    %2624 = vmatpush2.bf16.msra.mxu0 %v933
    %2625 = vmatprep.subr.bf16.mxu0 0
    %2626 = vmatpush2.bf16.msra.mxu0 %v932
    %2627 = vmatprep.subr.bf16.mxu0 0
    %2628 = vmatpush2.bf16.msra.mxu0 %v931
    %2629 = vmatprep.subr.bf16.mxu0 0
    %2630 = vmatpush2.bf16.msra.mxu0 %v930
    %2631 = vmatprep.subr.bf16.mxu0 0
    %2632 = vmatpush2.bf16.msra.mxu0 %v929
    %2633 = vmatprep.mubr.bf16.mxu0 %v1375
    %2634 = vmatmul.mubr.bf16.gmra.mxu0 %v1373
    %v2635 = vpop.f32.mrf.mxu0
    %v2636 = vadd.f32 %v2596, %v2635
    %v2637 = vpop.f32.mrf.mxu0
    %v2638 = vpop.f32.mrf.mxu0
    %v2639 = vpop.f32.mrf.mxu0
    %2640 = vdwg.mxu0
    %2641 = vmatprep.subr.bf16.mxu0 0
    %2642 = vmatpush1.bf16.msra.mxu0 %v944
    %2643 = vmatprep.subr.bf16.mxu0 0
    %2644 = vmatpush1.bf16.msra.mxu0 %v943
    %2645 = vmatprep.subr.bf16.mxu0 0
    %2646 = vmatpush1.bf16.msra.mxu0 %v942
    %2647 = vmatprep.subr.bf16.mxu0 0
    %2648 = vmatpush1.bf16.msra.mxu0 %v941
    %2649 = vmatprep.subr.bf16.mxu0 0
    %2650 = vmatpush1.bf16.msra.mxu0 %v940
    %2651 = vmatprep.subr.bf16.mxu0 0
    %2652 = vmatpush1.bf16.msra.mxu0 %v939
    %2653 = vmatprep.subr.bf16.mxu0 0
    %2654 = vmatpush1.bf16.msra.mxu0 %v938
    %2655 = vmatprep.subr.bf16.mxu0 0
    %2656 = vmatpush1.bf16.msra.mxu0 %v937
    %2657 = vmatprep.subr.bf16.mxu0 0
    %2658 = vmatpush2.bf16.msra.mxu0 %v952
    %2659 = vmatprep.subr.bf16.mxu0 0
    %2660 = vmatpush2.bf16.msra.mxu0 %v951
    %2661 = vmatprep.subr.bf16.mxu0 0
    %2662 = vmatpush2.bf16.msra.mxu0 %v950
    %2663 = vmatprep.subr.bf16.mxu0 0
    %2664 = vmatpush2.bf16.msra.mxu0 %v949
    %2665 = vmatprep.subr.bf16.mxu0 0
    %2666 = vmatpush2.bf16.msra.mxu0 %v948
    %2667 = vmatprep.subr.bf16.mxu0 0
    %2668 = vmatpush2.bf16.msra.mxu0 %v947
    %2669 = vmatprep.subr.bf16.mxu0 0
    %2670 = vmatpush2.bf16.msra.mxu0 %v946
    %2671 = vmatprep.subr.bf16.mxu0 0
    %2672 = vmatpush2.bf16.msra.mxu0 %v945
    %2673 = vmatprep.mubr.bf16.mxu0 %v1372
    %2674 = vmatmul.mubr.bf16.gmra.mxu0 %v1358
    %v2675 = vpop.f32.mrf.mxu0
    %v2676 = vadd.f32 %v2636, %v2675
    %v2677 = vpop.f32.mrf.mxu0
    %v2678 = vpop.f32.mrf.mxu0
    %v2679 = vpop.f32.mrf.mxu0
    %2680 = vdwg.mxu0
    %2681 = vmatprep.subr.bf16.mxu0 0
    %2682 = vmatpush1.bf16.msra.mxu0 %v960
    %2683 = vmatprep.subr.bf16.mxu0 0
    %2684 = vmatpush1.bf16.msra.mxu0 %v959
    %2685 = vmatprep.subr.bf16.mxu0 0
    %2686 = vmatpush1.bf16.msra.mxu0 %v958
    %2687 = vmatprep.subr.bf16.mxu0 0
    %2688 = vmatpush1.bf16.msra.mxu0 %v957
    %2689 = vmatprep.subr.bf16.mxu0 0
    %2690 = vmatpush1.bf16.msra.mxu0 %v956
    %2691 = vmatprep.subr.bf16.mxu0 0
    %2692 = vmatpush1.bf16.msra.mxu0 %v955
    %2693 = vmatprep.subr.bf16.mxu0 0
    %2694 = vmatpush1.bf16.msra.mxu0 %v954
    %2695 = vmatprep.subr.bf16.mxu0 0
    %2696 = vmatpush1.bf16.msra.mxu0 %v953
    %2697 = vmatprep.subr.bf16.mxu0 0
    %2698 = vmatpush2.bf16.msra.mxu0 %v968
    %2699 = vmatprep.subr.bf16.mxu0 0
    %2700 = vmatpush2.bf16.msra.mxu0 %v967
    %2701 = vmatprep.subr.bf16.mxu0 0
    %2702 = vmatpush2.bf16.msra.mxu0 %v966
    %2703 = vmatprep.subr.bf16.mxu0 0
    %2704 = vmatpush2.bf16.msra.mxu0 %v965
    %2705 = vmatprep.subr.bf16.mxu0 0
    %2706 = vmatpush2.bf16.msra.mxu0 %v964
    %2707 = vmatprep.subr.bf16.mxu0 0
    %2708 = vmatpush2.bf16.msra.mxu0 %v963
    %2709 = vmatprep.subr.bf16.mxu0 0
    %2710 = vmatpush2.bf16.msra.mxu0 %v962
    %2711 = vmatprep.subr.bf16.mxu0 0
    %2712 = vmatpush2.bf16.msra.mxu0 %v961
    %2713 = vmatprep.mubr.bf16.mxu0 %v1376
    %2714 = vmatmul.mubr.bf16.gmra.mxu0 %v1374
    %v2715 = vpop.f32.mrf.mxu0
    %v2716 = vadd.f32 %v2676, %v2715
    %v2717 = vpop.f32.mrf.mxu0
    %v2718 = vpop.f32.mrf.mxu0
    %v2719 = vpop.f32.mrf.mxu0
    %2720 = vdwg.mxu0
    %v2721 = vld [vmem:[#allocation9 + $0x8] sm:$0xff]
    %v2722 = vld [vmem:[#allocation9 + $0x18] sm:$0xff]
    %v2723 = vld [vmem:[#allocation9 + $0x28] sm:$0xff]
    %v2724 = vld [vmem:[#allocation9 + $0x38] sm:$0xff]
    %v2725 = vld [vmem:[#allocation9 + $0x48] sm:$0xff]
    %v2726 = vld [vmem:[#allocation9 + $0x58] sm:$0xff]
    %v2727 = vld [vmem:[#allocation9 + $0x68] sm:$0xff]
    %v2728 = vld [vmem:[#allocation9 + $0x78] sm:$0xff]
    %v2729 = vld [vmem:[#allocation9 + $0x88] sm:$0xff]
    %v2730 = vld [vmem:[#allocation9 + $0x98] sm:$0xff]
    %v2731 = vld [vmem:[#allocation9 + $0xa8] sm:$0xff]
    %v2732 = vld [vmem:[#allocation9 + $0xb8] sm:$0xff]
    %v2733 = vld [vmem:[#allocation9 + $0xc8] sm:$0xff]
    %v2734 = vld [vmem:[#allocation9 + $0xd8] sm:$0xff]
    %v2735 = vld [vmem:[#allocation9 + $0xe8] sm:$0xff]
    %v2736 = vld [vmem:[#allocation9 + $0xf8] sm:$0xff]
    %v2737 = vld [vmem:[#allocation9 + $0x108] sm:$0xff]
    %v2738 = vld [vmem:[#allocation9 + $0x118] sm:$0xff]
    %v2739 = vld [vmem:[#allocation9 + $0x128] sm:$0xff]
    %v2740 = vld [vmem:[#allocation9 + $0x138] sm:$0xff]
    %v2741 = vld [vmem:[#allocation9 + $0x148] sm:$0xff]
    %v2742 = vld [vmem:[#allocation9 + $0x158] sm:$0xff]
    %v2743 = vld [vmem:[#allocation9 + $0x168] sm:$0xff]
    %v2744 = vld [vmem:[#allocation9 + $0x178] sm:$0xff]
    %v2745 = vld [vmem:[#allocation9 + $0x188] sm:$0xff]
    %v2746 = vld [vmem:[#allocation9 + $0x198] sm:$0xff]
    %v2747 = vld [vmem:[#allocation9 + $0x1a8] sm:$0xff]
    %v2748 = vld [vmem:[#allocation9 + $0x1b8] sm:$0xff]
    %v2749 = vld [vmem:[#allocation9 + $0x1c8] sm:$0xff]
    %v2750 = vld [vmem:[#allocation9 + $0x1d8] sm:$0xff]
    %v2751 = vld [vmem:[#allocation9 + $0x1e8] sm:$0xff]
    %v2752 = vld [vmem:[#allocation9 + $0x1f8] sm:$0xff]
    %v2753 = vld [vmem:[#allocation9 + $0x208] sm:$0xff]
    %v2754 = vld [vmem:[#allocation9 + $0x218] sm:$0xff]
    %v2755 = vld [vmem:[#allocation9 + $0x228] sm:$0xff]
    %v2756 = vld [vmem:[#allocation9 + $0x238] sm:$0xff]
    %v2757 = vld [vmem:[#allocation9 + $0x248] sm:$0xff]
    %v2758 = vld [vmem:[#allocation9 + $0x258] sm:$0xff]
    %v2759 = vld [vmem:[#allocation9 + $0x268] sm:$0xff]
    %v2760 = vld [vmem:[#allocation9 + $0x278] sm:$0xff]
    %v2761 = vld [vmem:[#allocation9 + $0x288] sm:$0xff]
    %v2762 = vld [vmem:[#allocation9 + $0x298] sm:$0xff]
    %v2763 = vld [vmem:[#allocation9 + $0x2a8] sm:$0xff]
    %v2764 = vld [vmem:[#allocation9 + $0x2b8] sm:$0xff]
    %v2765 = vld [vmem:[#allocation9 + $0x2c8] sm:$0xff]
    %v2766 = vld [vmem:[#allocation9 + $0x2d8] sm:$0xff]
    %v2767 = vld [vmem:[#allocation9 + $0x2e8] sm:$0xff]
    %v2768 = vld [vmem:[#allocation9 + $0x2f8] sm:$0xff]
    %v2769 = vld [vmem:[#allocation9 + $0x308] sm:$0xff]
    %v2770 = vld [vmem:[#allocation9 + $0x318] sm:$0xff]
    %v2771 = vld [vmem:[#allocation9 + $0x328] sm:$0xff]
    %v2772 = vld [vmem:[#allocation9 + $0x338] sm:$0xff]
    %v2773 = vld [vmem:[#allocation9 + $0x348] sm:$0xff]
    %v2774 = vld [vmem:[#allocation9 + $0x358] sm:$0xff]
    %v2775 = vld [vmem:[#allocation9 + $0x368] sm:$0xff]
    %v2776 = vld [vmem:[#allocation9 + $0x378] sm:$0xff]
    %v2777 = vld [vmem:[#allocation9 + $0x388] sm:$0xff]
    %v2778 = vld [vmem:[#allocation9 + $0x398] sm:$0xff]
    %v2779 = vld [vmem:[#allocation9 + $0x3a8] sm:$0xff]
    %v2780 = vld [vmem:[#allocation9 + $0x3b8] sm:$0xff]
    %v2781 = vld [vmem:[#allocation9 + $0x3c8] sm:$0xff]
    %v2782 = vld [vmem:[#allocation9 + $0x3d8] sm:$0xff]
    %v2783 = vld [vmem:[#allocation9 + $0x3e8] sm:$0xff]
    %v2784 = vld [vmem:[#allocation9 + $0x3f8] sm:$0xff]
    %v2785 = vld [vmem:[#allocation9 + $0x408] sm:$0xff]
    %v2786 = vld [vmem:[#allocation9 + $0x418] sm:$0xff]
    %v2787 = vld [vmem:[#allocation9 + $0x428] sm:$0xff]
    %v2788 = vld [vmem:[#allocation9 + $0x438] sm:$0xff]
    %v2789 = vld [vmem:[#allocation9 + $0x448] sm:$0xff]
    %v2790 = vld [vmem:[#allocation9 + $0x458] sm:$0xff]
    %v2791 = vld [vmem:[#allocation9 + $0x468] sm:$0xff]
    %v2792 = vld [vmem:[#allocation9 + $0x478] sm:$0xff]
    %v2793 = vld [vmem:[#allocation9 + $0x488] sm:$0xff]
    %v2794 = vld [vmem:[#allocation9 + $0x498] sm:$0xff]
    %v2795 = vld [vmem:[#allocation9 + $0x4a8] sm:$0xff]
    %v2796 = vld [vmem:[#allocation9 + $0x4b8] sm:$0xff]
    %v2797 = vld [vmem:[#allocation9 + $0x4c8] sm:$0xff]
    %v2798 = vld [vmem:[#allocation9 + $0x4d8] sm:$0xff]
    %v2799 = vld [vmem:[#allocation9 + $0x4e8] sm:$0xff]
    %v2800 = vld [vmem:[#allocation9 + $0x4f8] sm:$0xff]
    %v2801 = vld [vmem:[#allocation9 + $0x508] sm:$0xff]
    %v2802 = vld [vmem:[#allocation9 + $0x518] sm:$0xff]
    %v2803 = vld [vmem:[#allocation9 + $0x528] sm:$0xff]
    %v2804 = vld [vmem:[#allocation9 + $0x538] sm:$0xff]
    %v2805 = vld [vmem:[#allocation9 + $0x548] sm:$0xff]
    %v2806 = vld [vmem:[#allocation9 + $0x558] sm:$0xff]
    %v2807 = vld [vmem:[#allocation9 + $0x568] sm:$0xff]
    %v2808 = vld [vmem:[#allocation9 + $0x578] sm:$0xff]
    %v2809 = vld [vmem:[#allocation9 + $0x588] sm:$0xff]
    %v2810 = vld [vmem:[#allocation9 + $0x598] sm:$0xff]
    %v2811 = vld [vmem:[#allocation9 + $0x5a8] sm:$0xff]
    %v2812 = vld [vmem:[#allocation9 + $0x5b8] sm:$0xff]
    %v2813 = vld [vmem:[#allocation9 + $0x5c8] sm:$0xff]
    %v2814 = vld [vmem:[#allocation9 + $0x5d8] sm:$0xff]
    %v2815 = vld [vmem:[#allocation9 + $0x5e8] sm:$0xff]
    %v2816 = vld [vmem:[#allocation9 + $0x5f8] sm:$0xff]
    %v2817 = vld [vmem:[#allocation9 + $0x608] sm:$0xff]
    %v2818 = vld [vmem:[#allocation9 + $0x618] sm:$0xff]
    %v2819 = vld [vmem:[#allocation9 + $0x628] sm:$0xff]
    %v2820 = vld [vmem:[#allocation9 + $0x638] sm:$0xff]
    %v2821 = vld [vmem:[#allocation9 + $0x648] sm:$0xff]
    %v2822 = vld [vmem:[#allocation9 + $0x658] sm:$0xff]
    %v2823 = vld [vmem:[#allocation9 + $0x668] sm:$0xff]
    %v2824 = vld [vmem:[#allocation9 + $0x678] sm:$0xff]
    %v2825 = vld [vmem:[#allocation9 + $0x688] sm:$0xff]
    %v2826 = vld [vmem:[#allocation9 + $0x698] sm:$0xff]
    %v2827 = vld [vmem:[#allocation9 + $0x6a8] sm:$0xff]
    %v2828 = vld [vmem:[#allocation9 + $0x6b8] sm:$0xff]
    %v2829 = vld [vmem:[#allocation9 + $0x6c8] sm:$0xff]
    %v2830 = vld [vmem:[#allocation9 + $0x6d8] sm:$0xff]
    %v2831 = vld [vmem:[#allocation9 + $0x6e8] sm:$0xff]
    %v2832 = vld [vmem:[#allocation9 + $0x6f8] sm:$0xff]
    %v2833 = vld [vmem:[#allocation9 + $0x708] sm:$0xff]
    %v2834 = vld [vmem:[#allocation9 + $0x718] sm:$0xff]
    %v2835 = vld [vmem:[#allocation9 + $0x728] sm:$0xff]
    %v2836 = vld [vmem:[#allocation9 + $0x738] sm:$0xff]
    %v2837 = vld [vmem:[#allocation9 + $0x748] sm:$0xff]
    %v2838 = vld [vmem:[#allocation9 + $0x758] sm:$0xff]
    %v2839 = vld [vmem:[#allocation9 + $0x768] sm:$0xff]
    %v2840 = vld [vmem:[#allocation9 + $0x778] sm:$0xff]
    %v2841 = vld [vmem:[#allocation9 + $0x788] sm:$0xff]
    %v2842 = vld [vmem:[#allocation9 + $0x798] sm:$0xff]
    %v2843 = vld [vmem:[#allocation9 + $0x7a8] sm:$0xff]
    %v2844 = vld [vmem:[#allocation9 + $0x7b8] sm:$0xff]
    %v2845 = vld [vmem:[#allocation9 + $0x7c8] sm:$0xff]
    %v2846 = vld [vmem:[#allocation9 + $0x7d8] sm:$0xff]
    %v2847 = vld [vmem:[#allocation9 + $0x7e8] sm:$0xff]
    %v2848 = vld [vmem:[#allocation9 + $0x7f8] sm:$0xff]
    %v2849 = vld [vmem:[#allocation9 + $0x808] sm:$0xff]
    %v2850 = vld [vmem:[#allocation9 + $0x818] sm:$0xff]
    %v2851 = vld [vmem:[#allocation9 + $0x828] sm:$0xff]
    %v2852 = vld [vmem:[#allocation9 + $0x838] sm:$0xff]
    %v2853 = vld [vmem:[#allocation9 + $0x848] sm:$0xff]
    %v2854 = vld [vmem:[#allocation9 + $0x858] sm:$0xff]
    %v2855 = vld [vmem:[#allocation9 + $0x868] sm:$0xff]
    %v2856 = vld [vmem:[#allocation9 + $0x878] sm:$0xff]
    %v2857 = vld [vmem:[#allocation9 + $0x888] sm:$0xff]
    %v2858 = vld [vmem:[#allocation9 + $0x898] sm:$0xff]
    %v2859 = vld [vmem:[#allocation9 + $0x8a8] sm:$0xff]
    %v2860 = vld [vmem:[#allocation9 + $0x8b8] sm:$0xff]
    %v2861 = vld [vmem:[#allocation9 + $0x8c8] sm:$0xff]
    %v2862 = vld [vmem:[#allocation9 + $0x8d8] sm:$0xff]
    %v2863 = vld [vmem:[#allocation9 + $0x8e8] sm:$0xff]
    %v2864 = vld [vmem:[#allocation9 + $0x8f8] sm:$0xff]
    %v2865 = vld [vmem:[#allocation9 + $0x908] sm:$0xff]
    %v2866 = vld [vmem:[#allocation9 + $0x918] sm:$0xff]
    %v2867 = vld [vmem:[#allocation9 + $0x928] sm:$0xff]
    %v2868 = vld [vmem:[#allocation9 + $0x938] sm:$0xff]
    %v2869 = vld [vmem:[#allocation9 + $0x948] sm:$0xff]
    %v2870 = vld [vmem:[#allocation9 + $0x958] sm:$0xff]
    %v2871 = vld [vmem:[#allocation9 + $0x968] sm:$0xff]
    %v2872 = vld [vmem:[#allocation9 + $0x978] sm:$0xff]
    %v2873 = vld [vmem:[#allocation9 + $0x988] sm:$0xff]
    %v2874 = vld [vmem:[#allocation9 + $0x998] sm:$0xff]
    %v2875 = vld [vmem:[#allocation9 + $0x9a8] sm:$0xff]
    %v2876 = vld [vmem:[#allocation9 + $0x9b8] sm:$0xff]
    %v2877 = vld [vmem:[#allocation9 + $0x9c8] sm:$0xff]
    %v2878 = vld [vmem:[#allocation9 + $0x9d8] sm:$0xff]
    %v2879 = vld [vmem:[#allocation9 + $0x9e8] sm:$0xff]
    %v2880 = vld [vmem:[#allocation9 + $0x9f8] sm:$0xff]
    %v2881 = vld [vmem:[#allocation9 + $0xa08] sm:$0xff]
    %v2882 = vld [vmem:[#allocation9 + $0xa18] sm:$0xff]
    %v2883 = vld [vmem:[#allocation9 + $0xa28] sm:$0xff]
    %v2884 = vld [vmem:[#allocation9 + $0xa38] sm:$0xff]
    %v2885 = vld [vmem:[#allocation9 + $0xa48] sm:$0xff]
    %v2886 = vld [vmem:[#allocation9 + $0xa58] sm:$0xff]
    %v2887 = vld [vmem:[#allocation9 + $0xa68] sm:$0xff]
    %v2888 = vld [vmem:[#allocation9 + $0xa78] sm:$0xff]
    %v2889 = vld [vmem:[#allocation9 + $0xa88] sm:$0xff]
    %v2890 = vld [vmem:[#allocation9 + $0xa98] sm:$0xff]
    %v2891 = vld [vmem:[#allocation9 + $0xaa8] sm:$0xff]
    %v2892 = vld [vmem:[#allocation9 + $0xab8] sm:$0xff]
    %v2893 = vld [vmem:[#allocation9 + $0xac8] sm:$0xff]
    %v2894 = vld [vmem:[#allocation9 + $0xad8] sm:$0xff]
    %v2895 = vld [vmem:[#allocation9 + $0xae8] sm:$0xff]
    %v2896 = vld [vmem:[#allocation9 + $0xaf8] sm:$0xff]
    %v2897 = vld [vmem:[#allocation9 + $0xb08] sm:$0xff]
    %v2898 = vld [vmem:[#allocation9 + $0xb18] sm:$0xff]
    %v2899 = vld [vmem:[#allocation9 + $0xb28] sm:$0xff]
    %v2900 = vld [vmem:[#allocation9 + $0xb38] sm:$0xff]
    %v2901 = vld [vmem:[#allocation9 + $0xb48] sm:$0xff]
    %v2902 = vld [vmem:[#allocation9 + $0xb58] sm:$0xff]
    %v2903 = vld [vmem:[#allocation9 + $0xb68] sm:$0xff]
    %v2904 = vld [vmem:[#allocation9 + $0xb78] sm:$0xff]
    %v2905 = vld [vmem:[#allocation9 + $0xb88] sm:$0xff]
    %v2906 = vld [vmem:[#allocation9 + $0xb98] sm:$0xff]
    %v2907 = vld [vmem:[#allocation9 + $0xba8] sm:$0xff]
    %v2908 = vld [vmem:[#allocation9 + $0xbb8] sm:$0xff]
    %v2909 = vld [vmem:[#allocation9 + $0xbc8] sm:$0xff]
    %v2910 = vld [vmem:[#allocation9 + $0xbd8] sm:$0xff]
    %v2911 = vld [vmem:[#allocation9 + $0xbe8] sm:$0xff]
    %v2912 = vld [vmem:[#allocation9 + $0xbf8] sm:$0xff]
    %v2913 = vld [vmem:[#allocation9 + $0xc08] sm:$0xff]
    %v2914 = vld [vmem:[#allocation9 + $0xc18] sm:$0xff]
    %v2915 = vld [vmem:[#allocation9 + $0xc28] sm:$0xff]
    %v2916 = vld [vmem:[#allocation9 + $0xc38] sm:$0xff]
    %v2917 = vld [vmem:[#allocation9 + $0xc48] sm:$0xff]
    %v2918 = vld [vmem:[#allocation9 + $0xc58] sm:$0xff]
    %v2919 = vld [vmem:[#allocation9 + $0xc68] sm:$0xff]
    %v2920 = vld [vmem:[#allocation9 + $0xc78] sm:$0xff]
    %v2921 = vld [vmem:[#allocation9 + $0xc88] sm:$0xff]
    %v2922 = vld [vmem:[#allocation9 + $0xc98] sm:$0xff]
    %v2923 = vld [vmem:[#allocation9 + $0xca8] sm:$0xff]
    %v2924 = vld [vmem:[#allocation9 + $0xcb8] sm:$0xff]
    %v2925 = vld [vmem:[#allocation9 + $0xcc8] sm:$0xff]
    %v2926 = vld [vmem:[#allocation9 + $0xcd8] sm:$0xff]
    %v2927 = vld [vmem:[#allocation9 + $0xce8] sm:$0xff]
    %v2928 = vld [vmem:[#allocation9 + $0xcf8] sm:$0xff]
    %v2929 = vld [vmem:[#allocation9 + $0xd08] sm:$0xff]
    %v2930 = vld [vmem:[#allocation9 + $0xd18] sm:$0xff]
    %v2931 = vld [vmem:[#allocation9 + $0xd28] sm:$0xff]
    %v2932 = vld [vmem:[#allocation9 + $0xd38] sm:$0xff]
    %v2933 = vld [vmem:[#allocation9 + $0xd48] sm:$0xff]
    %v2934 = vld [vmem:[#allocation9 + $0xd58] sm:$0xff]
    %v2935 = vld [vmem:[#allocation9 + $0xd68] sm:$0xff]
    %v2936 = vld [vmem:[#allocation9 + $0xd78] sm:$0xff]
    %v2937 = vld [vmem:[#allocation9 + $0xd88] sm:$0xff]
    %v2938 = vld [vmem:[#allocation9 + $0xd98] sm:$0xff]
    %v2939 = vld [vmem:[#allocation9 + $0xda8] sm:$0xff]
    %v2940 = vld [vmem:[#allocation9 + $0xdb8] sm:$0xff]
    %v2941 = vld [vmem:[#allocation9 + $0xdc8] sm:$0xff]
    %v2942 = vld [vmem:[#allocation9 + $0xdd8] sm:$0xff]
    %v2943 = vld [vmem:[#allocation9 + $0xde8] sm:$0xff]
    %v2944 = vld [vmem:[#allocation9 + $0xdf8] sm:$0xff]
    %v2945 = vld [vmem:[#allocation9 + $0xe08] sm:$0xff]
    %v2946 = vld [vmem:[#allocation9 + $0xe18] sm:$0xff]
    %v2947 = vld [vmem:[#allocation9 + $0xe28] sm:$0xff]
    %v2948 = vld [vmem:[#allocation9 + $0xe38] sm:$0xff]
    %v2949 = vld [vmem:[#allocation9 + $0xe48] sm:$0xff]
    %v2950 = vld [vmem:[#allocation9 + $0xe58] sm:$0xff]
    %v2951 = vld [vmem:[#allocation9 + $0xe68] sm:$0xff]
    %v2952 = vld [vmem:[#allocation9 + $0xe78] sm:$0xff]
    %v2953 = vld [vmem:[#allocation9 + $0xe88] sm:$0xff]
    %v2954 = vld [vmem:[#allocation9 + $0xe98] sm:$0xff]
    %v2955 = vld [vmem:[#allocation9 + $0xea8] sm:$0xff]
    %v2956 = vld [vmem:[#allocation9 + $0xeb8] sm:$0xff]
    %v2957 = vld [vmem:[#allocation9 + $0xec8] sm:$0xff]
    %v2958 = vld [vmem:[#allocation9 + $0xed8] sm:$0xff]
    %v2959 = vld [vmem:[#allocation9 + $0xee8] sm:$0xff]
    %v2960 = vld [vmem:[#allocation9 + $0xef8] sm:$0xff]
    %v2961 = vld [vmem:[#allocation9 + $0xf08] sm:$0xff]
    %v2962 = vld [vmem:[#allocation9 + $0xf18] sm:$0xff]
    %v2963 = vld [vmem:[#allocation9 + $0xf28] sm:$0xff]
    %v2964 = vld [vmem:[#allocation9 + $0xf38] sm:$0xff]
    %v2965 = vld [vmem:[#allocation9 + $0xf48] sm:$0xff]
    %v2966 = vld [vmem:[#allocation9 + $0xf58] sm:$0xff]
    %v2967 = vld [vmem:[#allocation9 + $0xf68] sm:$0xff]
    %v2968 = vld [vmem:[#allocation9 + $0xf78] sm:$0xff]
    %v2969 = vld [vmem:[#allocation9 + $0xf88] sm:$0xff]
    %v2970 = vld [vmem:[#allocation9 + $0xf98] sm:$0xff]
    %v2971 = vld [vmem:[#allocation9 + $0xfa8] sm:$0xff]
    %v2972 = vld [vmem:[#allocation9 + $0xfb8] sm:$0xff]
    %v2973 = vld [vmem:[#allocation9 + $0xfc8] sm:$0xff]
    %v2974 = vld [vmem:[#allocation9 + $0xfd8] sm:$0xff]
    %v2975 = vld [vmem:[#allocation9 + $0xfe8] sm:$0xff]
    %v2976 = vld [vmem:[#allocation9 + $0xff8] sm:$0xff]
    %v2977 = vunpack.c.l.s8.bf16 %v2721
    %v2978 = vunpack.c.h.s8.bf16 %v2721
    %v2979 = vunpack.c.l.s8.bf16 %v2722
    %v2980 = vunpack.c.h.s8.bf16 %v2722
    %v2981 = vunpack.c.l.s8.bf16 %v2723
    %v2982 = vunpack.c.h.s8.bf16 %v2723
    %v2983 = vunpack.c.l.s8.bf16 %v2724
    %v2984 = vunpack.c.h.s8.bf16 %v2724
    %v2985 = vunpack.c.l.s8.bf16 %v2725
    %v2986 = vunpack.c.h.s8.bf16 %v2725
    %v2987 = vunpack.c.l.s8.bf16 %v2726
    %v2988 = vunpack.c.h.s8.bf16 %v2726
    %v2989 = vunpack.c.l.s8.bf16 %v2727
    %v2990 = vunpack.c.h.s8.bf16 %v2727
    %v2991 = vunpack.c.l.s8.bf16 %v2728
    %v2992 = vunpack.c.h.s8.bf16 %v2728
    %v2993 = vunpack.c.l.s8.bf16 %v2729
    %v2994 = vunpack.c.h.s8.bf16 %v2729
    %v2995 = vunpack.c.l.s8.bf16 %v2730
    %v2996 = vunpack.c.h.s8.bf16 %v2730
    %v2997 = vunpack.c.l.s8.bf16 %v2731
    %v2998 = vunpack.c.h.s8.bf16 %v2731
    %v2999 = vunpack.c.l.s8.bf16 %v2732
    %v3000 = vunpack.c.h.s8.bf16 %v2732
    %v3001 = vunpack.c.l.s8.bf16 %v2733
    %v3002 = vunpack.c.h.s8.bf16 %v2733
    %v3003 = vunpack.c.l.s8.bf16 %v2734
    %v3004 = vunpack.c.h.s8.bf16 %v2734
    %v3005 = vunpack.c.l.s8.bf16 %v2735
    %v3006 = vunpack.c.h.s8.bf16 %v2735
    %v3007 = vunpack.c.l.s8.bf16 %v2736
    %v3008 = vunpack.c.h.s8.bf16 %v2736
    %v3009 = vunpack.c.l.s8.bf16 %v2737
    %v3010 = vunpack.c.h.s8.bf16 %v2737
    %v3011 = vunpack.c.l.s8.bf16 %v2738
    %v3012 = vunpack.c.h.s8.bf16 %v2738
    %v3013 = vunpack.c.l.s8.bf16 %v2739
    %v3014 = vunpack.c.h.s8.bf16 %v2739
    %v3015 = vunpack.c.l.s8.bf16 %v2740
    %v3016 = vunpack.c.h.s8.bf16 %v2740
    %v3017 = vunpack.c.l.s8.bf16 %v2741
    %v3018 = vunpack.c.h.s8.bf16 %v2741
    %v3019 = vunpack.c.l.s8.bf16 %v2742
    %v3020 = vunpack.c.h.s8.bf16 %v2742
    %v3021 = vunpack.c.l.s8.bf16 %v2743
    %v3022 = vunpack.c.h.s8.bf16 %v2743
    %v3023 = vunpack.c.l.s8.bf16 %v2744
    %v3024 = vunpack.c.h.s8.bf16 %v2744
    %v3025 = vunpack.c.l.s8.bf16 %v2745
    %v3026 = vunpack.c.h.s8.bf16 %v2745
    %v3027 = vunpack.c.l.s8.bf16 %v2746
    %v3028 = vunpack.c.h.s8.bf16 %v2746
    %v3029 = vunpack.c.l.s8.bf16 %v2747
    %v3030 = vunpack.c.h.s8.bf16 %v2747
    %v3031 = vunpack.c.l.s8.bf16 %v2748
    %v3032 = vunpack.c.h.s8.bf16 %v2748
    %v3033 = vunpack.c.l.s8.bf16 %v2749
    %v3034 = vunpack.c.h.s8.bf16 %v2749
    %v3035 = vunpack.c.l.s8.bf16 %v2750
    %v3036 = vunpack.c.h.s8.bf16 %v2750
    %v3037 = vunpack.c.l.s8.bf16 %v2751
    %v3038 = vunpack.c.h.s8.bf16 %v2751
    %v3039 = vunpack.c.l.s8.bf16 %v2752
    %v3040 = vunpack.c.h.s8.bf16 %v2752
    %v3041 = vunpack.c.l.s8.bf16 %v2753
    %v3042 = vunpack.c.h.s8.bf16 %v2753
    %v3043 = vunpack.c.l.s8.bf16 %v2754
    %v3044 = vunpack.c.h.s8.bf16 %v2754
    %v3045 = vunpack.c.l.s8.bf16 %v2755
    %v3046 = vunpack.c.h.s8.bf16 %v2755
    %v3047 = vunpack.c.l.s8.bf16 %v2756
    %v3048 = vunpack.c.h.s8.bf16 %v2756
    %v3049 = vunpack.c.l.s8.bf16 %v2757
    %v3050 = vunpack.c.h.s8.bf16 %v2757
    %v3051 = vunpack.c.l.s8.bf16 %v2758
    %v3052 = vunpack.c.h.s8.bf16 %v2758
    %v3053 = vunpack.c.l.s8.bf16 %v2759
    %v3054 = vunpack.c.h.s8.bf16 %v2759
    %v3055 = vunpack.c.l.s8.bf16 %v2760
    %v3056 = vunpack.c.h.s8.bf16 %v2760
    %v3057 = vunpack.c.l.s8.bf16 %v2761
    %v3058 = vunpack.c.h.s8.bf16 %v2761
    %v3059 = vunpack.c.l.s8.bf16 %v2762
    %v3060 = vunpack.c.h.s8.bf16 %v2762
    %v3061 = vunpack.c.l.s8.bf16 %v2763
    %v3062 = vunpack.c.h.s8.bf16 %v2763
    %v3063 = vunpack.c.l.s8.bf16 %v2764
    %v3064 = vunpack.c.h.s8.bf16 %v2764
    %v3065 = vunpack.c.l.s8.bf16 %v2765
    %v3066 = vunpack.c.h.s8.bf16 %v2765
    %v3067 = vunpack.c.l.s8.bf16 %v2766
    %v3068 = vunpack.c.h.s8.bf16 %v2766
    %v3069 = vunpack.c.l.s8.bf16 %v2767
    %v3070 = vunpack.c.h.s8.bf16 %v2767
    %v3071 = vunpack.c.l.s8.bf16 %v2768
    %v3072 = vunpack.c.h.s8.bf16 %v2768
    %v3073 = vunpack.c.l.s8.bf16 %v2769
    %v3074 = vunpack.c.h.s8.bf16 %v2769
    %v3075 = vunpack.c.l.s8.bf16 %v2770
    %v3076 = vunpack.c.h.s8.bf16 %v2770
    %v3077 = vunpack.c.l.s8.bf16 %v2771
    %v3078 = vunpack.c.h.s8.bf16 %v2771
    %v3079 = vunpack.c.l.s8.bf16 %v2772
    %v3080 = vunpack.c.h.s8.bf16 %v2772
    %v3081 = vunpack.c.l.s8.bf16 %v2773
    %v3082 = vunpack.c.h.s8.bf16 %v2773
    %v3083 = vunpack.c.l.s8.bf16 %v2774
    %v3084 = vunpack.c.h.s8.bf16 %v2774
    %v3085 = vunpack.c.l.s8.bf16 %v2775
    %v3086 = vunpack.c.h.s8.bf16 %v2775
    %v3087 = vunpack.c.l.s8.bf16 %v2776
    %v3088 = vunpack.c.h.s8.bf16 %v2776
    %v3089 = vunpack.c.l.s8.bf16 %v2777
    %v3090 = vunpack.c.h.s8.bf16 %v2777
    %v3091 = vunpack.c.l.s8.bf16 %v2778
    %v3092 = vunpack.c.h.s8.bf16 %v2778
    %v3093 = vunpack.c.l.s8.bf16 %v2779
    %v3094 = vunpack.c.h.s8.bf16 %v2779
    %v3095 = vunpack.c.l.s8.bf16 %v2780
    %v3096 = vunpack.c.h.s8.bf16 %v2780
    %v3097 = vunpack.c.l.s8.bf16 %v2781
    %v3098 = vunpack.c.h.s8.bf16 %v2781
    %v3099 = vunpack.c.l.s8.bf16 %v2782
    %v3100 = vunpack.c.h.s8.bf16 %v2782
    %v3101 = vunpack.c.l.s8.bf16 %v2783
    %v3102 = vunpack.c.h.s8.bf16 %v2783
    %v3103 = vunpack.c.l.s8.bf16 %v2784
    %v3104 = vunpack.c.h.s8.bf16 %v2784
    %v3105 = vunpack.c.l.s8.bf16 %v2785
    %v3106 = vunpack.c.h.s8.bf16 %v2785
    %v3107 = vunpack.c.l.s8.bf16 %v2786
    %v3108 = vunpack.c.h.s8.bf16 %v2786
    %v3109 = vunpack.c.l.s8.bf16 %v2787
    %v3110 = vunpack.c.h.s8.bf16 %v2787
    %v3111 = vunpack.c.l.s8.bf16 %v2788
    %v3112 = vunpack.c.h.s8.bf16 %v2788
    %v3113 = vunpack.c.l.s8.bf16 %v2789
    %v3114 = vunpack.c.h.s8.bf16 %v2789
    %v3115 = vunpack.c.l.s8.bf16 %v2790
    %v3116 = vunpack.c.h.s8.bf16 %v2790
    %v3117 = vunpack.c.l.s8.bf16 %v2791
    %v3118 = vunpack.c.h.s8.bf16 %v2791
    %v3119 = vunpack.c.l.s8.bf16 %v2792
    %v3120 = vunpack.c.h.s8.bf16 %v2792
    %v3121 = vunpack.c.l.s8.bf16 %v2793
    %v3122 = vunpack.c.h.s8.bf16 %v2793
    %v3123 = vunpack.c.l.s8.bf16 %v2794
    %v3124 = vunpack.c.h.s8.bf16 %v2794
    %v3125 = vunpack.c.l.s8.bf16 %v2795
    %v3126 = vunpack.c.h.s8.bf16 %v2795
    %v3127 = vunpack.c.l.s8.bf16 %v2796
    %v3128 = vunpack.c.h.s8.bf16 %v2796
    %v3129 = vunpack.c.l.s8.bf16 %v2797
    %v3130 = vunpack.c.h.s8.bf16 %v2797
    %v3131 = vunpack.c.l.s8.bf16 %v2798
    %v3132 = vunpack.c.h.s8.bf16 %v2798
    %v3133 = vunpack.c.l.s8.bf16 %v2799
    %v3134 = vunpack.c.h.s8.bf16 %v2799
    %v3135 = vunpack.c.l.s8.bf16 %v2800
    %v3136 = vunpack.c.h.s8.bf16 %v2800
    %v3137 = vunpack.c.l.s8.bf16 %v2801
    %v3138 = vunpack.c.h.s8.bf16 %v2801
    %v3139 = vunpack.c.l.s8.bf16 %v2802
    %v3140 = vunpack.c.h.s8.bf16 %v2802
    %v3141 = vunpack.c.l.s8.bf16 %v2803
    %v3142 = vunpack.c.h.s8.bf16 %v2803
    %v3143 = vunpack.c.l.s8.bf16 %v2804
    %v3144 = vunpack.c.h.s8.bf16 %v2804
    %v3145 = vunpack.c.l.s8.bf16 %v2805
    %v3146 = vunpack.c.h.s8.bf16 %v2805
    %v3147 = vunpack.c.l.s8.bf16 %v2806
    %v3148 = vunpack.c.h.s8.bf16 %v2806
    %v3149 = vunpack.c.l.s8.bf16 %v2807
    %v3150 = vunpack.c.h.s8.bf16 %v2807
    %v3151 = vunpack.c.l.s8.bf16 %v2808
    %v3152 = vunpack.c.h.s8.bf16 %v2808
    %v3153 = vunpack.c.l.s8.bf16 %v2809
    %v3154 = vunpack.c.h.s8.bf16 %v2809
    %v3155 = vunpack.c.l.s8.bf16 %v2810
    %v3156 = vunpack.c.h.s8.bf16 %v2810
    %v3157 = vunpack.c.l.s8.bf16 %v2811
    %v3158 = vunpack.c.h.s8.bf16 %v2811
    %v3159 = vunpack.c.l.s8.bf16 %v2812
    %v3160 = vunpack.c.h.s8.bf16 %v2812
    %v3161 = vunpack.c.l.s8.bf16 %v2813
    %v3162 = vunpack.c.h.s8.bf16 %v2813
    %v3163 = vunpack.c.l.s8.bf16 %v2814
    %v3164 = vunpack.c.h.s8.bf16 %v2814
    %v3165 = vunpack.c.l.s8.bf16 %v2815
    %v3166 = vunpack.c.h.s8.bf16 %v2815
    %v3167 = vunpack.c.l.s8.bf16 %v2816
    %v3168 = vunpack.c.h.s8.bf16 %v2816
    %v3169 = vunpack.c.l.s8.bf16 %v2817
    %v3170 = vunpack.c.h.s8.bf16 %v2817
    %v3171 = vunpack.c.l.s8.bf16 %v2818
    %v3172 = vunpack.c.h.s8.bf16 %v2818
    %v3173 = vunpack.c.l.s8.bf16 %v2819
    %v3174 = vunpack.c.h.s8.bf16 %v2819
    %v3175 = vunpack.c.l.s8.bf16 %v2820
    %v3176 = vunpack.c.h.s8.bf16 %v2820
    %v3177 = vunpack.c.l.s8.bf16 %v2821
    %v3178 = vunpack.c.h.s8.bf16 %v2821
    %v3179 = vunpack.c.l.s8.bf16 %v2822
    %v3180 = vunpack.c.h.s8.bf16 %v2822
    %v3181 = vunpack.c.l.s8.bf16 %v2823
    %v3182 = vunpack.c.h.s8.bf16 %v2823
    %v3183 = vunpack.c.l.s8.bf16 %v2824
    %v3184 = vunpack.c.h.s8.bf16 %v2824
    %v3185 = vunpack.c.l.s8.bf16 %v2825
    %v3186 = vunpack.c.h.s8.bf16 %v2825
    %v3187 = vunpack.c.l.s8.bf16 %v2826
    %v3188 = vunpack.c.h.s8.bf16 %v2826
    %v3189 = vunpack.c.l.s8.bf16 %v2827
    %v3190 = vunpack.c.h.s8.bf16 %v2827
    %v3191 = vunpack.c.l.s8.bf16 %v2828
    %v3192 = vunpack.c.h.s8.bf16 %v2828
    %v3193 = vunpack.c.l.s8.bf16 %v2829
    %v3194 = vunpack.c.h.s8.bf16 %v2829
    %v3195 = vunpack.c.l.s8.bf16 %v2830
    %v3196 = vunpack.c.h.s8.bf16 %v2830
    %v3197 = vunpack.c.l.s8.bf16 %v2831
    %v3198 = vunpack.c.h.s8.bf16 %v2831
    %v3199 = vunpack.c.l.s8.bf16 %v2832
    %v3200 = vunpack.c.h.s8.bf16 %v2832
    %v3201 = vunpack.c.l.s8.bf16 %v2833
    %v3202 = vunpack.c.h.s8.bf16 %v2833
    %v3203 = vunpack.c.l.s8.bf16 %v2834
    %v3204 = vunpack.c.h.s8.bf16 %v2834
    %v3205 = vunpack.c.l.s8.bf16 %v2835
    %v3206 = vunpack.c.h.s8.bf16 %v2835
    %v3207 = vunpack.c.l.s8.bf16 %v2836
    %v3208 = vunpack.c.h.s8.bf16 %v2836
    %v3209 = vunpack.c.l.s8.bf16 %v2837
    %v3210 = vunpack.c.h.s8.bf16 %v2837
    %v3211 = vunpack.c.l.s8.bf16 %v2838
    %v3212 = vunpack.c.h.s8.bf16 %v2838
    %v3213 = vunpack.c.l.s8.bf16 %v2839
    %v3214 = vunpack.c.h.s8.bf16 %v2839
    %v3215 = vunpack.c.l.s8.bf16 %v2840
    %v3216 = vunpack.c.h.s8.bf16 %v2840
    %v3217 = vunpack.c.l.s8.bf16 %v2841
    %v3218 = vunpack.c.h.s8.bf16 %v2841
    %v3219 = vunpack.c.l.s8.bf16 %v2842
    %v3220 = vunpack.c.h.s8.bf16 %v2842
    %v3221 = vunpack.c.l.s8.bf16 %v2843
    %v3222 = vunpack.c.h.s8.bf16 %v2843
    %v3223 = vunpack.c.l.s8.bf16 %v2844
    %v3224 = vunpack.c.h.s8.bf16 %v2844
    %v3225 = vunpack.c.l.s8.bf16 %v2845
    %v3226 = vunpack.c.h.s8.bf16 %v2845
    %v3227 = vunpack.c.l.s8.bf16 %v2846
    %v3228 = vunpack.c.h.s8.bf16 %v2846
    %v3229 = vunpack.c.l.s8.bf16 %v2847
    %v3230 = vunpack.c.h.s8.bf16 %v2847
    %v3231 = vunpack.c.l.s8.bf16 %v2848
    %v3232 = vunpack.c.h.s8.bf16 %v2848
    %v3233 = vunpack.c.l.s8.bf16 %v2849
    %v3234 = vunpack.c.h.s8.bf16 %v2849
    %v3235 = vunpack.c.l.s8.bf16 %v2850
    %v3236 = vunpack.c.h.s8.bf16 %v2850
    %v3237 = vunpack.c.l.s8.bf16 %v2851
    %v3238 = vunpack.c.h.s8.bf16 %v2851
    %v3239 = vunpack.c.l.s8.bf16 %v2852
    %v3240 = vunpack.c.h.s8.bf16 %v2852
    %v3241 = vunpack.c.l.s8.bf16 %v2853
    %v3242 = vunpack.c.h.s8.bf16 %v2853
    %v3243 = vunpack.c.l.s8.bf16 %v2854
    %v3244 = vunpack.c.h.s8.bf16 %v2854
    %v3245 = vunpack.c.l.s8.bf16 %v2855
    %v3246 = vunpack.c.h.s8.bf16 %v2855
    %v3247 = vunpack.c.l.s8.bf16 %v2856
    %v3248 = vunpack.c.h.s8.bf16 %v2856
    %v3249 = vunpack.c.l.s8.bf16 %v2857
    %v3250 = vunpack.c.h.s8.bf16 %v2857
    %v3251 = vunpack.c.l.s8.bf16 %v2858
    %v3252 = vunpack.c.h.s8.bf16 %v2858
    %v3253 = vunpack.c.l.s8.bf16 %v2859
    %v3254 = vunpack.c.h.s8.bf16 %v2859
    %v3255 = vunpack.c.l.s8.bf16 %v2860
    %v3256 = vunpack.c.h.s8.bf16 %v2860
    %v3257 = vunpack.c.l.s8.bf16 %v2861
    %v3258 = vunpack.c.h.s8.bf16 %v2861
    %v3259 = vunpack.c.l.s8.bf16 %v2862
    %v3260 = vunpack.c.h.s8.bf16 %v2862
    %v3261 = vunpack.c.l.s8.bf16 %v2863
    %v3262 = vunpack.c.h.s8.bf16 %v2863
    %v3263 = vunpack.c.l.s8.bf16 %v2864
    %v3264 = vunpack.c.h.s8.bf16 %v2864
    %v3265 = vunpack.c.l.s8.bf16 %v2865
    %v3266 = vunpack.c.h.s8.bf16 %v2865
    %v3267 = vunpack.c.l.s8.bf16 %v2866
    %v3268 = vunpack.c.h.s8.bf16 %v2866
    %v3269 = vunpack.c.l.s8.bf16 %v2867
    %v3270 = vunpack.c.h.s8.bf16 %v2867
    %v3271 = vunpack.c.l.s8.bf16 %v2868
    %v3272 = vunpack.c.h.s8.bf16 %v2868
    %v3273 = vunpack.c.l.s8.bf16 %v2869
    %v3274 = vunpack.c.h.s8.bf16 %v2869
    %v3275 = vunpack.c.l.s8.bf16 %v2870
    %v3276 = vunpack.c.h.s8.bf16 %v2870
    %v3277 = vunpack.c.l.s8.bf16 %v2871
    %v3278 = vunpack.c.h.s8.bf16 %v2871
    %v3279 = vunpack.c.l.s8.bf16 %v2872
    %v3280 = vunpack.c.h.s8.bf16 %v2872
    %v3281 = vunpack.c.l.s8.bf16 %v2873
    %v3282 = vunpack.c.h.s8.bf16 %v2873
    %v3283 = vunpack.c.l.s8.bf16 %v2874
    %v3284 = vunpack.c.h.s8.bf16 %v2874
    %v3285 = vunpack.c.l.s8.bf16 %v2875
    %v3286 = vunpack.c.h.s8.bf16 %v2875
    %v3287 = vunpack.c.l.s8.bf16 %v2876
    %v3288 = vunpack.c.h.s8.bf16 %v2876
    %v3289 = vunpack.c.l.s8.bf16 %v2877
    %v3290 = vunpack.c.h.s8.bf16 %v2877
    %v3291 = vunpack.c.l.s8.bf16 %v2878
    %v3292 = vunpack.c.h.s8.bf16 %v2878
    %v3293 = vunpack.c.l.s8.bf16 %v2879
    %v3294 = vunpack.c.h.s8.bf16 %v2879
    %v3295 = vunpack.c.l.s8.bf16 %v2880
    %v3296 = vunpack.c.h.s8.bf16 %v2880
    %v3297 = vunpack.c.l.s8.bf16 %v2881
    %v3298 = vunpack.c.h.s8.bf16 %v2881
    %v3299 = vunpack.c.l.s8.bf16 %v2882
    %v3300 = vunpack.c.h.s8.bf16 %v2882
    %v3301 = vunpack.c.l.s8.bf16 %v2883
    %v3302 = vunpack.c.h.s8.bf16 %v2883
    %v3303 = vunpack.c.l.s8.bf16 %v2884
    %v3304 = vunpack.c.h.s8.bf16 %v2884
    %v3305 = vunpack.c.l.s8.bf16 %v2885
    %v3306 = vunpack.c.h.s8.bf16 %v2885
    %v3307 = vunpack.c.l.s8.bf16 %v2886
    %v3308 = vunpack.c.h.s8.bf16 %v2886
    %v3309 = vunpack.c.l.s8.bf16 %v2887
    %v3310 = vunpack.c.h.s8.bf16 %v2887
    %v3311 = vunpack.c.l.s8.bf16 %v2888
    %v3312 = vunpack.c.h.s8.bf16 %v2888
    %v3313 = vunpack.c.l.s8.bf16 %v2889
    %v3314 = vunpack.c.h.s8.bf16 %v2889
    %v3315 = vunpack.c.l.s8.bf16 %v2890
    %v3316 = vunpack.c.h.s8.bf16 %v2890
    %v3317 = vunpack.c.l.s8.bf16 %v2891
    %v3318 = vunpack.c.h.s8.bf16 %v2891
    %v3319 = vunpack.c.l.s8.bf16 %v2892
    %v3320 = vunpack.c.h.s8.bf16 %v2892
    %v3321 = vunpack.c.l.s8.bf16 %v2893
    %v3322 = vunpack.c.h.s8.bf16 %v2893
    %v3323 = vunpack.c.l.s8.bf16 %v2894
    %v3324 = vunpack.c.h.s8.bf16 %v2894
    %v3325 = vunpack.c.l.s8.bf16 %v2895
    %v3326 = vunpack.c.h.s8.bf16 %v2895
    %v3327 = vunpack.c.l.s8.bf16 %v2896
    %v3328 = vunpack.c.h.s8.bf16 %v2896
    %v3329 = vunpack.c.l.s8.bf16 %v2897
    %v3330 = vunpack.c.h.s8.bf16 %v2897
    %v3331 = vunpack.c.l.s8.bf16 %v2898
    %v3332 = vunpack.c.h.s8.bf16 %v2898
    %v3333 = vunpack.c.l.s8.bf16 %v2899
    %v3334 = vunpack.c.h.s8.bf16 %v2899
    %v3335 = vunpack.c.l.s8.bf16 %v2900
    %v3336 = vunpack.c.h.s8.bf16 %v2900
    %v3337 = vunpack.c.l.s8.bf16 %v2901
    %v3338 = vunpack.c.h.s8.bf16 %v2901
    %v3339 = vunpack.c.l.s8.bf16 %v2902
    %v3340 = vunpack.c.h.s8.bf16 %v2902
    %v3341 = vunpack.c.l.s8.bf16 %v2903
    %v3342 = vunpack.c.h.s8.bf16 %v2903
    %v3343 = vunpack.c.l.s8.bf16 %v2904
    %v3344 = vunpack.c.h.s8.bf16 %v2904
    %v3345 = vunpack.c.l.s8.bf16 %v2905
    %v3346 = vunpack.c.h.s8.bf16 %v2905
    %v3347 = vunpack.c.l.s8.bf16 %v2906
    %v3348 = vunpack.c.h.s8.bf16 %v2906
    %v3349 = vunpack.c.l.s8.bf16 %v2907
    %v3350 = vunpack.c.h.s8.bf16 %v2907
    %v3351 = vunpack.c.l.s8.bf16 %v2908
    %v3352 = vunpack.c.h.s8.bf16 %v2908
    %v3353 = vunpack.c.l.s8.bf16 %v2909
    %v3354 = vunpack.c.h.s8.bf16 %v2909
    %v3355 = vunpack.c.l.s8.bf16 %v2910
    %v3356 = vunpack.c.h.s8.bf16 %v2910
    %v3357 = vunpack.c.l.s8.bf16 %v2911
    %v3358 = vunpack.c.h.s8.bf16 %v2911
    %v3359 = vunpack.c.l.s8.bf16 %v2912
    %v3360 = vunpack.c.h.s8.bf16 %v2912
    %v3361 = vunpack.c.l.s8.bf16 %v2913
    %v3362 = vunpack.c.h.s8.bf16 %v2913
    %v3363 = vunpack.c.l.s8.bf16 %v2914
    %v3364 = vunpack.c.h.s8.bf16 %v2914
    %v3365 = vunpack.c.l.s8.bf16 %v2915
    %v3366 = vunpack.c.h.s8.bf16 %v2915
    %v3367 = vunpack.c.l.s8.bf16 %v2916
    %v3368 = vunpack.c.h.s8.bf16 %v2916
    %v3369 = vunpack.c.l.s8.bf16 %v2917
    %v3370 = vunpack.c.h.s8.bf16 %v2917
    %v3371 = vunpack.c.l.s8.bf16 %v2918
    %v3372 = vunpack.c.h.s8.bf16 %v2918
    %v3373 = vunpack.c.l.s8.bf16 %v2919
    %v3374 = vunpack.c.h.s8.bf16 %v2919
    %v3375 = vunpack.c.l.s8.bf16 %v2920
    %v3376 = vunpack.c.h.s8.bf16 %v2920
    %v3377 = vunpack.c.l.s8.bf16 %v2921
    %v3378 = vunpack.c.h.s8.bf16 %v2921
    %v3379 = vunpack.c.l.s8.bf16 %v2922
    %v3380 = vunpack.c.h.s8.bf16 %v2922
    %v3381 = vunpack.c.l.s8.bf16 %v2923
    %v3382 = vunpack.c.h.s8.bf16 %v2923
    %v3383 = vunpack.c.l.s8.bf16 %v2924
    %v3384 = vunpack.c.h.s8.bf16 %v2924
    %v3385 = vunpack.c.l.s8.bf16 %v2925
    %v3386 = vunpack.c.h.s8.bf16 %v2925
    %v3387 = vunpack.c.l.s8.bf16 %v2926
    %v3388 = vunpack.c.h.s8.bf16 %v2926
    %v3389 = vunpack.c.l.s8.bf16 %v2927
    %v3390 = vunpack.c.h.s8.bf16 %v2927
    %v3391 = vunpack.c.l.s8.bf16 %v2928
    %v3392 = vunpack.c.h.s8.bf16 %v2928
    %v3393 = vunpack.c.l.s8.bf16 %v2929
    %v3394 = vunpack.c.h.s8.bf16 %v2929
    %v3395 = vunpack.c.l.s8.bf16 %v2930
    %v3396 = vunpack.c.h.s8.bf16 %v2930
    %v3397 = vunpack.c.l.s8.bf16 %v2931
    %v3398 = vunpack.c.h.s8.bf16 %v2931
    %v3399 = vunpack.c.l.s8.bf16 %v2932
    %v3400 = vunpack.c.h.s8.bf16 %v2932
    %v3401 = vunpack.c.l.s8.bf16 %v2933
    %v3402 = vunpack.c.h.s8.bf16 %v2933
    %v3403 = vunpack.c.l.s8.bf16 %v2934
    %v3404 = vunpack.c.h.s8.bf16 %v2934
    %v3405 = vunpack.c.l.s8.bf16 %v2935
    %v3406 = vunpack.c.h.s8.bf16 %v2935
    %v3407 = vunpack.c.l.s8.bf16 %v2936
    %v3408 = vunpack.c.h.s8.bf16 %v2936
    %v3409 = vunpack.c.l.s8.bf16 %v2937
    %v3410 = vunpack.c.h.s8.bf16 %v2937
    %v3411 = vunpack.c.l.s8.bf16 %v2938
    %v3412 = vunpack.c.h.s8.bf16 %v2938
    %v3413 = vunpack.c.l.s8.bf16 %v2939
    %v3414 = vunpack.c.h.s8.bf16 %v2939
    %v3415 = vunpack.c.l.s8.bf16 %v2940
    %v3416 = vunpack.c.h.s8.bf16 %v2940
    %v3417 = vunpack.c.l.s8.bf16 %v2941
    %v3418 = vunpack.c.h.s8.bf16 %v2941
    %v3419 = vunpack.c.l.s8.bf16 %v2942
    %v3420 = vunpack.c.h.s8.bf16 %v2942
    %v3421 = vunpack.c.l.s8.bf16 %v2943
    %v3422 = vunpack.c.h.s8.bf16 %v2943
    %v3423 = vunpack.c.l.s8.bf16 %v2944
    %v3424 = vunpack.c.h.s8.bf16 %v2944
    %v3425 = vunpack.c.l.s8.bf16 %v2945
    %v3426 = vunpack.c.h.s8.bf16 %v2945
    %v3427 = vunpack.c.l.s8.bf16 %v2946
    %v3428 = vunpack.c.h.s8.bf16 %v2946
    %v3429 = vunpack.c.l.s8.bf16 %v2947
    %v3430 = vunpack.c.h.s8.bf16 %v2947
    %v3431 = vunpack.c.l.s8.bf16 %v2948
    %v3432 = vunpack.c.h.s8.bf16 %v2948
    %v3433 = vunpack.c.l.s8.bf16 %v2949
    %v3434 = vunpack.c.h.s8.bf16 %v2949
    %v3435 = vunpack.c.l.s8.bf16 %v2950
    %v3436 = vunpack.c.h.s8.bf16 %v2950
    %v3437 = vunpack.c.l.s8.bf16 %v2951
    %v3438 = vunpack.c.h.s8.bf16 %v2951
    %v3439 = vunpack.c.l.s8.bf16 %v2952
    %v3440 = vunpack.c.h.s8.bf16 %v2952
    %v3441 = vunpack.c.l.s8.bf16 %v2953
    %v3442 = vunpack.c.h.s8.bf16 %v2953
    %v3443 = vunpack.c.l.s8.bf16 %v2954
    %v3444 = vunpack.c.h.s8.bf16 %v2954
    %v3445 = vunpack.c.l.s8.bf16 %v2955
    %v3446 = vunpack.c.h.s8.bf16 %v2955
    %v3447 = vunpack.c.l.s8.bf16 %v2956
    %v3448 = vunpack.c.h.s8.bf16 %v2956
    %v3449 = vunpack.c.l.s8.bf16 %v2957
    %v3450 = vunpack.c.h.s8.bf16 %v2957
    %v3451 = vunpack.c.l.s8.bf16 %v2958
    %v3452 = vunpack.c.h.s8.bf16 %v2958
    %v3453 = vunpack.c.l.s8.bf16 %v2959
    %v3454 = vunpack.c.h.s8.bf16 %v2959
    %v3455 = vunpack.c.l.s8.bf16 %v2960
    %v3456 = vunpack.c.h.s8.bf16 %v2960
    %v3457 = vunpack.c.l.s8.bf16 %v2961
    %v3458 = vunpack.c.h.s8.bf16 %v2961
    %v3459 = vunpack.c.l.s8.bf16 %v2962
    %v3460 = vunpack.c.h.s8.bf16 %v2962
    %v3461 = vunpack.c.l.s8.bf16 %v2963
    %v3462 = vunpack.c.h.s8.bf16 %v2963
    %v3463 = vunpack.c.l.s8.bf16 %v2964
    %v3464 = vunpack.c.h.s8.bf16 %v2964
    %v3465 = vunpack.c.l.s8.bf16 %v2965
    %v3466 = vunpack.c.h.s8.bf16 %v2965
    %v3467 = vunpack.c.l.s8.bf16 %v2966
    %v3468 = vunpack.c.h.s8.bf16 %v2966
    %v3469 = vunpack.c.l.s8.bf16 %v2967
    %v3470 = vunpack.c.h.s8.bf16 %v2967
    %v3471 = vunpack.c.l.s8.bf16 %v2968
    %v3472 = vunpack.c.h.s8.bf16 %v2968
    %v3473 = vunpack.c.l.s8.bf16 %v2969
    %v3474 = vunpack.c.h.s8.bf16 %v2969
    %v3475 = vunpack.c.l.s8.bf16 %v2970
    %v3476 = vunpack.c.h.s8.bf16 %v2970
    %v3477 = vunpack.c.l.s8.bf16 %v2971
    %v3478 = vunpack.c.h.s8.bf16 %v2971
    %v3479 = vunpack.c.l.s8.bf16 %v2972
    %v3480 = vunpack.c.h.s8.bf16 %v2972
    %v3481 = vunpack.c.l.s8.bf16 %v2973
    %v3482 = vunpack.c.h.s8.bf16 %v2973
    %v3483 = vunpack.c.l.s8.bf16 %v2974
    %v3484 = vunpack.c.h.s8.bf16 %v2974
    %v3485 = vunpack.c.l.s8.bf16 %v2975
    %v3486 = vunpack.c.h.s8.bf16 %v2975
    %v3487 = vunpack.c.l.s8.bf16 %v2976
    %v3488 = vunpack.c.h.s8.bf16 %v2976
    %v3489 = vld [vmem:[#allocation6] sm:$0xff]
    %v3490 = vld [vmem:[#allocation6 + $0x8] sm:$0xff]
    %v3491 = vld [vmem:[#allocation6 + $0x10] sm:$0xff]
    %v3492 = vld [vmem:[#allocation6 + $0x18] sm:$0xff]
    %v3493 = vld [vmem:[#allocation6 + $0x20] sm:$0xff]
    %v3494 = vld [vmem:[#allocation6 + $0x28] sm:$0xff]
    %v3495 = vld [vmem:[#allocation6 + $0x30] sm:$0xff]
    %v3496 = vld [vmem:[#allocation6 + $0x38] sm:$0xff]
    %v3505 = vcombine.high %v3489, %v3489
    %v3507 = vunpack.c.l.s4 1966171168
    %v3508 = vunpack.c.0.s8 %v3507
    %v3509 = vlaneseq
    %v3510 = vshrl.u32 %v3509, 7
    %v3511 = vsub.s32 %v3508, %v3510
    %v3512 = vrot.slane %v3489, %v3511
    %v3514 = vunpack.c.l.s4 1966171168
    %v3515 = vunpack.c.0.s8 %v3514
    %v3516 = vlaneseq
    %v3517 = vshrl.u32 %v3516, 7
    %v3518 = vsub.s32 %v3515, %v3517
    %v3519 = vrot.slane %v3505, %v3518
    %v3520 = vcombine.high %v3512, %v3512
    %v3521 = vcombine.high %v3519, %v3519
    %v3523 = vunpack.c.l.s4 1966171168
    %v3524 = vunpack.c.0.s8 %v3523
    %v3525 = vlaneseq
    %v3526 = vshrl.u32 %v3525, 7
    %v3527 = vsub.s32 %v3524, %v3526
    %v3528 = vrot.slane %v3512, %v3527
    %v3530 = vunpack.c.l.s4 1966171168
    %v3531 = vunpack.c.0.s8 %v3530
    %v3532 = vlaneseq
    %v3533 = vshrl.u32 %v3532, 7
    %v3534 = vsub.s32 %v3531, %v3533
    %v3535 = vrot.slane %v3519, %v3534
    %v3537 = vunpack.c.l.s4 1966171168
    %v3538 = vunpack.c.0.s8 %v3537
    %v3539 = vlaneseq
    %v3540 = vshrl.u32 %v3539, 7
    %v3541 = vsub.s32 %v3538, %v3540
    %v3542 = vrot.slane %v3520, %v3541
    %v3544 = vunpack.c.l.s4 1966171168
    %v3545 = vunpack.c.0.s8 %v3544
    %v3546 = vlaneseq
    %v3547 = vshrl.u32 %v3546, 7
    %v3548 = vsub.s32 %v3545, %v3547
    %v3549 = vrot.slane %v3521, %v3548
    %v3550 = vcombine.high %v3528, %v3528
    %v3551 = vcombine.high %v3535, %v3535
    %v3552 = vcombine.high %v3542, %v3542
    %v3553 = vcombine.high %v3549, %v3549
    %v3554 = vcombine.high %v3490, %v3490
    %v3556 = vunpack.c.l.s4 1966171168
    %v3557 = vunpack.c.0.s8 %v3556
    %v3558 = vlaneseq
    %v3559 = vshrl.u32 %v3558, 7
    %v3560 = vsub.s32 %v3557, %v3559
    %v3561 = vrot.slane %v3490, %v3560
    %v3563 = vunpack.c.l.s4 1966171168
    %v3564 = vunpack.c.0.s8 %v3563
    %v3565 = vlaneseq
    %v3566 = vshrl.u32 %v3565, 7
    %v3567 = vsub.s32 %v3564, %v3566
    %v3568 = vrot.slane %v3554, %v3567
    %v3569 = vcombine.high %v3561, %v3561
    %v3570 = vcombine.high %v3568, %v3568
    %v3572 = vunpack.c.l.s4 1966171168
    %v3573 = vunpack.c.0.s8 %v3572
    %v3574 = vlaneseq
    %v3575 = vshrl.u32 %v3574, 7
    %v3576 = vsub.s32 %v3573, %v3575
    %v3577 = vrot.slane %v3561, %v3576
    %v3579 = vunpack.c.l.s4 1966171168
    %v3580 = vunpack.c.0.s8 %v3579
    %v3581 = vlaneseq
    %v3582 = vshrl.u32 %v3581, 7
    %v3583 = vsub.s32 %v3580, %v3582
    %v3584 = vrot.slane %v3568, %v3583
    %v3586 = vunpack.c.l.s4 1966171168
    %v3587 = vunpack.c.0.s8 %v3586
    %v3588 = vlaneseq
    %v3589 = vshrl.u32 %v3588, 7
    %v3590 = vsub.s32 %v3587, %v3589
    %v3591 = vrot.slane %v3569, %v3590
    %v3593 = vunpack.c.l.s4 1966171168
    %v3594 = vunpack.c.0.s8 %v3593
    %v3595 = vlaneseq
    %v3596 = vshrl.u32 %v3595, 7
    %v3597 = vsub.s32 %v3594, %v3596
    %v3598 = vrot.slane %v3570, %v3597
    %v3599 = vcombine.high %v3577, %v3577
    %v3600 = vcombine.high %v3584, %v3584
    %v3601 = vcombine.high %v3591, %v3591
    %v3602 = vcombine.high %v3598, %v3598
    %v3603 = vcombine.high %v3491, %v3491
    %v3605 = vunpack.c.l.s4 1966171168
    %v3606 = vunpack.c.0.s8 %v3605
    %v3607 = vlaneseq
    %v3608 = vshrl.u32 %v3607, 7
    %v3609 = vsub.s32 %v3606, %v3608
    %v3610 = vrot.slane %v3491, %v3609
    %v3612 = vunpack.c.l.s4 1966171168
    %v3613 = vunpack.c.0.s8 %v3612
    %v3614 = vlaneseq
    %v3615 = vshrl.u32 %v3614, 7
    %v3616 = vsub.s32 %v3613, %v3615
    %v3617 = vrot.slane %v3603, %v3616
    %v3618 = vcombine.high %v3610, %v3610
    %v3619 = vcombine.high %v3617, %v3617
    %v3621 = vunpack.c.l.s4 1966171168
    %v3622 = vunpack.c.0.s8 %v3621
    %v3623 = vlaneseq
    %v3624 = vshrl.u32 %v3623, 7
    %v3625 = vsub.s32 %v3622, %v3624
    %v3626 = vrot.slane %v3610, %v3625
    %v3628 = vunpack.c.l.s4 1966171168
    %v3629 = vunpack.c.0.s8 %v3628
    %v3630 = vlaneseq
    %v3631 = vshrl.u32 %v3630, 7
    %v3632 = vsub.s32 %v3629, %v3631
    %v3633 = vrot.slane %v3617, %v3632
    %v3635 = vunpack.c.l.s4 1966171168
    %v3636 = vunpack.c.0.s8 %v3635
    %v3637 = vlaneseq
    %v3638 = vshrl.u32 %v3637, 7
    %v3639 = vsub.s32 %v3636, %v3638
    %v3640 = vrot.slane %v3618, %v3639
    %v3642 = vunpack.c.l.s4 1966171168
    %v3643 = vunpack.c.0.s8 %v3642
    %v3644 = vlaneseq
    %v3645 = vshrl.u32 %v3644, 7
    %v3646 = vsub.s32 %v3643, %v3645
    %v3647 = vrot.slane %v3619, %v3646
    %v3648 = vcombine.high %v3626, %v3626
    %v3649 = vcombine.high %v3633, %v3633
    %v3650 = vcombine.high %v3640, %v3640
    %v3651 = vcombine.high %v3647, %v3647
    %v3652 = vcombine.high %v3492, %v3492
    %v3654 = vunpack.c.l.s4 1966171168
    %v3655 = vunpack.c.0.s8 %v3654
    %v3656 = vlaneseq
    %v3657 = vshrl.u32 %v3656, 7
    %v3658 = vsub.s32 %v3655, %v3657
    %v3659 = vrot.slane %v3492, %v3658
    %v3661 = vunpack.c.l.s4 1966171168
    %v3662 = vunpack.c.0.s8 %v3661
    %v3663 = vlaneseq
    %v3664 = vshrl.u32 %v3663, 7
    %v3665 = vsub.s32 %v3662, %v3664
    %v3666 = vrot.slane %v3652, %v3665
    %v3667 = vcombine.high %v3659, %v3659
    %v3668 = vcombine.high %v3666, %v3666
    %v3670 = vunpack.c.l.s4 1966171168
    %v3671 = vunpack.c.0.s8 %v3670
    %v3672 = vlaneseq
    %v3673 = vshrl.u32 %v3672, 7
    %v3674 = vsub.s32 %v3671, %v3673
    %v3675 = vrot.slane %v3659, %v3674
    %v3677 = vunpack.c.l.s4 1966171168
    %v3678 = vunpack.c.0.s8 %v3677
    %v3679 = vlaneseq
    %v3680 = vshrl.u32 %v3679, 7
    %v3681 = vsub.s32 %v3678, %v3680
    %v3682 = vrot.slane %v3666, %v3681
    %v3684 = vunpack.c.l.s4 1966171168
    %v3685 = vunpack.c.0.s8 %v3684
    %v3686 = vlaneseq
    %v3687 = vshrl.u32 %v3686, 7
    %v3688 = vsub.s32 %v3685, %v3687
    %v3689 = vrot.slane %v3667, %v3688
    %v3691 = vunpack.c.l.s4 1966171168
    %v3692 = vunpack.c.0.s8 %v3691
    %v3693 = vlaneseq
    %v3694 = vshrl.u32 %v3693, 7
    %v3695 = vsub.s32 %v3692, %v3694
    %v3696 = vrot.slane %v3668, %v3695
    %v3697 = vcombine.high %v3675, %v3675
    %v3698 = vcombine.high %v3682, %v3682
    %v3699 = vcombine.high %v3689, %v3689
    %v3700 = vcombine.high %v3696, %v3696
    %v3701 = vcombine.high %v3493, %v3493
    %v3703 = vunpack.c.l.s4 1966171168
    %v3704 = vunpack.c.0.s8 %v3703
    %v3705 = vlaneseq
    %v3706 = vshrl.u32 %v3705, 7
    %v3707 = vsub.s32 %v3704, %v3706
    %v3708 = vrot.slane %v3493, %v3707
    %v3710 = vunpack.c.l.s4 1966171168
    %v3711 = vunpack.c.0.s8 %v3710
    %v3712 = vlaneseq
    %v3713 = vshrl.u32 %v3712, 7
    %v3714 = vsub.s32 %v3711, %v3713
    %v3715 = vrot.slane %v3701, %v3714
    %v3716 = vcombine.high %v3708, %v3708
    %v3717 = vcombine.high %v3715, %v3715
    %v3719 = vunpack.c.l.s4 1966171168
    %v3720 = vunpack.c.0.s8 %v3719
    %v3721 = vlaneseq
    %v3722 = vshrl.u32 %v3721, 7
    %v3723 = vsub.s32 %v3720, %v3722
    %v3724 = vrot.slane %v3708, %v3723
    %v3726 = vunpack.c.l.s4 1966171168
    %v3727 = vunpack.c.0.s8 %v3726
    %v3728 = vlaneseq
    %v3729 = vshrl.u32 %v3728, 7
    %v3730 = vsub.s32 %v3727, %v3729
    %v3731 = vrot.slane %v3715, %v3730
    %v3733 = vunpack.c.l.s4 1966171168
    %v3734 = vunpack.c.0.s8 %v3733
    %v3735 = vlaneseq
    %v3736 = vshrl.u32 %v3735, 7
    %v3737 = vsub.s32 %v3734, %v3736
    %v3738 = vrot.slane %v3716, %v3737
    %v3740 = vunpack.c.l.s4 1966171168
    %v3741 = vunpack.c.0.s8 %v3740
    %v3742 = vlaneseq
    %v3743 = vshrl.u32 %v3742, 7
    %v3744 = vsub.s32 %v3741, %v3743
    %v3745 = vrot.slane %v3717, %v3744
    %v3746 = vcombine.high %v3724, %v3724
    %v3747 = vcombine.high %v3731, %v3731
    %v3748 = vcombine.high %v3738, %v3738
    %v3749 = vcombine.high %v3745, %v3745
    %v3750 = vcombine.high %v3494, %v3494
    %v3752 = vunpack.c.l.s4 1966171168
    %v3753 = vunpack.c.0.s8 %v3752
    %v3754 = vlaneseq
    %v3755 = vshrl.u32 %v3754, 7
    %v3756 = vsub.s32 %v3753, %v3755
    %v3757 = vrot.slane %v3494, %v3756
    %v3759 = vunpack.c.l.s4 1966171168
    %v3760 = vunpack.c.0.s8 %v3759
    %v3761 = vlaneseq
    %v3762 = vshrl.u32 %v3761, 7
    %v3763 = vsub.s32 %v3760, %v3762
    %v3764 = vrot.slane %v3750, %v3763
    %v3765 = vcombine.high %v3757, %v3757
    %v3766 = vcombine.high %v3764, %v3764
    %v3768 = vunpack.c.l.s4 1966171168
    %v3769 = vunpack.c.0.s8 %v3768
    %v3770 = vlaneseq
    %v3771 = vshrl.u32 %v3770, 7
    %v3772 = vsub.s32 %v3769, %v3771
    %v3773 = vrot.slane %v3757, %v3772
    %v3775 = vunpack.c.l.s4 1966171168
    %v3776 = vunpack.c.0.s8 %v3775
    %v3777 = vlaneseq
    %v3778 = vshrl.u32 %v3777, 7
    %v3779 = vsub.s32 %v3776, %v3778
    %v3780 = vrot.slane %v3764, %v3779
    %v3782 = vunpack.c.l.s4 1966171168
    %v3783 = vunpack.c.0.s8 %v3782
    %v3784 = vlaneseq
    %v3785 = vshrl.u32 %v3784, 7
    %v3786 = vsub.s32 %v3783, %v3785
    %v3787 = vrot.slane %v3765, %v3786
    %v3789 = vunpack.c.l.s4 1966171168
    %v3790 = vunpack.c.0.s8 %v3789
    %v3791 = vlaneseq
    %v3792 = vshrl.u32 %v3791, 7
    %v3793 = vsub.s32 %v3790, %v3792
    %v3794 = vrot.slane %v3766, %v3793
    %v3795 = vcombine.high %v3773, %v3773
    %v3796 = vcombine.high %v3780, %v3780
    %v3797 = vcombine.high %v3787, %v3787
    %v3798 = vcombine.high %v3794, %v3794
    %v3799 = vcombine.high %v3495, %v3495
    %v3801 = vunpack.c.l.s4 1966171168
    %v3802 = vunpack.c.0.s8 %v3801
    %v3803 = vlaneseq
    %v3804 = vshrl.u32 %v3803, 7
    %v3805 = vsub.s32 %v3802, %v3804
    %v3806 = vrot.slane %v3495, %v3805
    %v3808 = vunpack.c.l.s4 1966171168
    %v3809 = vunpack.c.0.s8 %v3808
    %v3810 = vlaneseq
    %v3811 = vshrl.u32 %v3810, 7
    %v3812 = vsub.s32 %v3809, %v3811
    %v3813 = vrot.slane %v3799, %v3812
    %v3814 = vcombine.high %v3806, %v3806
    %v3815 = vcombine.high %v3813, %v3813
    %v3817 = vunpack.c.l.s4 1966171168
    %v3818 = vunpack.c.0.s8 %v3817
    %v3819 = vlaneseq
    %v3820 = vshrl.u32 %v3819, 7
    %v3821 = vsub.s32 %v3818, %v3820
    %v3822 = vrot.slane %v3806, %v3821
    %v3824 = vunpack.c.l.s4 1966171168
    %v3825 = vunpack.c.0.s8 %v3824
    %v3826 = vlaneseq
    %v3827 = vshrl.u32 %v3826, 7
    %v3828 = vsub.s32 %v3825, %v3827
    %v3829 = vrot.slane %v3813, %v3828
    %v3831 = vunpack.c.l.s4 1966171168
    %v3832 = vunpack.c.0.s8 %v3831
    %v3833 = vlaneseq
    %v3834 = vshrl.u32 %v3833, 7
    %v3835 = vsub.s32 %v3832, %v3834
    %v3836 = vrot.slane %v3814, %v3835
    %v3838 = vunpack.c.l.s4 1966171168
    %v3839 = vunpack.c.0.s8 %v3838
    %v3840 = vlaneseq
    %v3841 = vshrl.u32 %v3840, 7
    %v3842 = vsub.s32 %v3839, %v3841
    %v3843 = vrot.slane %v3815, %v3842
    %v3844 = vcombine.high %v3822, %v3822
    %v3845 = vcombine.high %v3829, %v3829
    %v3846 = vcombine.high %v3836, %v3836
    %v3847 = vcombine.high %v3843, %v3843
    %v3848 = vcombine.high %v3496, %v3496
    %v3850 = vunpack.c.l.s4 1966171168
    %v3851 = vunpack.c.0.s8 %v3850
    %v3852 = vlaneseq
    %v3853 = vshrl.u32 %v3852, 7
    %v3854 = vsub.s32 %v3851, %v3853
    %v3855 = vrot.slane %v3496, %v3854
    %v3857 = vunpack.c.l.s4 1966171168
    %v3858 = vunpack.c.0.s8 %v3857
    %v3859 = vlaneseq
    %v3860 = vshrl.u32 %v3859, 7
    %v3861 = vsub.s32 %v3858, %v3860
    %v3862 = vrot.slane %v3848, %v3861
    %v3863 = vcombine.high %v3855, %v3855
    %v3864 = vcombine.high %v3862, %v3862
    %v3866 = vunpack.c.l.s4 1966171168
    %v3867 = vunpack.c.0.s8 %v3866
    %v3868 = vlaneseq
    %v3869 = vshrl.u32 %v3868, 7
    %v3870 = vsub.s32 %v3867, %v3869
    %v3871 = vrot.slane %v3855, %v3870
    %v3873 = vunpack.c.l.s4 1966171168
    %v3874 = vunpack.c.0.s8 %v3873
    %v3875 = vlaneseq
    %v3876 = vshrl.u32 %v3875, 7
    %v3877 = vsub.s32 %v3874, %v3876
    %v3878 = vrot.slane %v3862, %v3877
    %v3880 = vunpack.c.l.s4 1966171168
    %v3881 = vunpack.c.0.s8 %v3880
    %v3882 = vlaneseq
    %v3883 = vshrl.u32 %v3882, 7
    %v3884 = vsub.s32 %v3881, %v3883
    %v3885 = vrot.slane %v3863, %v3884
    %v3887 = vunpack.c.l.s4 1966171168
    %v3888 = vunpack.c.0.s8 %v3887
    %v3889 = vlaneseq
    %v3890 = vshrl.u32 %v3889, 7
    %v3891 = vsub.s32 %v3888, %v3890
    %v3892 = vrot.slane %v3864, %v3891
    %v3893 = vcombine.high %v3871, %v3871
    %v3894 = vcombine.high %v3878, %v3878
    %v3895 = vcombine.high %v3885, %v3885
    %v3896 = vcombine.high %v3892, %v3892
    %3961 = vmatprep.subr.bf16.mxu0 0
    %3962 = vmatpush1.bf16.msra.mxu0 %v2984
    %3963 = vmatprep.subr.bf16.mxu0 0
    %3964 = vmatpush1.bf16.msra.mxu0 %v2983
    %3965 = vmatprep.subr.bf16.mxu0 0
    %3966 = vmatpush1.bf16.msra.mxu0 %v2982
    %3967 = vmatprep.subr.bf16.mxu0 0
    %3968 = vmatpush1.bf16.msra.mxu0 %v2981
    %3969 = vmatprep.subr.bf16.mxu0 0
    %3970 = vmatpush1.bf16.msra.mxu0 %v2980
    %3971 = vmatprep.subr.bf16.mxu0 0
    %3972 = vmatpush1.bf16.msra.mxu0 %v2979
    %3973 = vmatprep.subr.bf16.mxu0 0
    %3974 = vmatpush1.bf16.msra.mxu0 %v2978
    %3975 = vmatprep.subr.bf16.mxu0 0
    %3976 = vmatpush1.bf16.msra.mxu0 %v2977
    %3977 = vmatprep.subr.bf16.mxu0 0
    %3978 = vmatpush2.bf16.msra.mxu0 %v2992
    %3979 = vmatprep.subr.bf16.mxu0 0
    %3980 = vmatpush2.bf16.msra.mxu0 %v2991
    %3981 = vmatprep.subr.bf16.mxu0 0
    %3982 = vmatpush2.bf16.msra.mxu0 %v2990
    %3983 = vmatprep.subr.bf16.mxu0 0
    %3984 = vmatpush2.bf16.msra.mxu0 %v2989
    %3985 = vmatprep.subr.bf16.mxu0 0
    %3986 = vmatpush2.bf16.msra.mxu0 %v2988
    %3987 = vmatprep.subr.bf16.mxu0 0
    %3988 = vmatpush2.bf16.msra.mxu0 %v2987
    %3989 = vmatprep.subr.bf16.mxu0 0
    %3990 = vmatpush2.bf16.msra.mxu0 %v2986
    %3991 = vmatprep.subr.bf16.mxu0 0
    %3992 = vmatpush2.bf16.msra.mxu0 %v2985
    %3993 = vmatprep.mubr.bf16.mxu0 %v3542
    %3994 = vmatmul.mubr.bf16.gmra.mxu0 %v3528
    %v3995 = vpop.f32.mrf.mxu0
    %v3996 = vadd.f32 0.0, %v3995
    %v3997 = vpop.f32.mrf.mxu0
    %v3998 = vpop.f32.mrf.mxu0
    %v3999 = vpop.f32.mrf.mxu0
    %4000 = vdwg.mxu0
    %4001 = vmatprep.subr.bf16.mxu0 0
    %4002 = vmatpush1.bf16.msra.mxu0 %v3000
    %4003 = vmatprep.subr.bf16.mxu0 0
    %4004 = vmatpush1.bf16.msra.mxu0 %v2999
    %4005 = vmatprep.subr.bf16.mxu0 0
    %4006 = vmatpush1.bf16.msra.mxu0 %v2998
    %4007 = vmatprep.subr.bf16.mxu0 0
    %4008 = vmatpush1.bf16.msra.mxu0 %v2997
    %4009 = vmatprep.subr.bf16.mxu0 0
    %4010 = vmatpush1.bf16.msra.mxu0 %v2996
    %4011 = vmatprep.subr.bf16.mxu0 0
    %4012 = vmatpush1.bf16.msra.mxu0 %v2995
    %4013 = vmatprep.subr.bf16.mxu0 0
    %4014 = vmatpush1.bf16.msra.mxu0 %v2994
    %4015 = vmatprep.subr.bf16.mxu0 0
    %4016 = vmatpush1.bf16.msra.mxu0 %v2993
    %4017 = vmatprep.subr.bf16.mxu0 0
    %4018 = vmatpush2.bf16.msra.mxu0 %v3008
    %4019 = vmatprep.subr.bf16.mxu0 0
    %4020 = vmatpush2.bf16.msra.mxu0 %v3007
    %4021 = vmatprep.subr.bf16.mxu0 0
    %4022 = vmatpush2.bf16.msra.mxu0 %v3006
    %4023 = vmatprep.subr.bf16.mxu0 0
    %4024 = vmatpush2.bf16.msra.mxu0 %v3005
    %4025 = vmatprep.subr.bf16.mxu0 0
    %4026 = vmatpush2.bf16.msra.mxu0 %v3004
    %4027 = vmatprep.subr.bf16.mxu0 0
    %4028 = vmatpush2.bf16.msra.mxu0 %v3003
    %4029 = vmatprep.subr.bf16.mxu0 0
    %4030 = vmatpush2.bf16.msra.mxu0 %v3002
    %4031 = vmatprep.subr.bf16.mxu0 0
    %4032 = vmatpush2.bf16.msra.mxu0 %v3001
    %4033 = vmatprep.mubr.bf16.mxu0 %v3552
    %4034 = vmatmul.mubr.bf16.gmra.mxu0 %v3550
    %v4035 = vpop.f32.mrf.mxu0
    %v4036 = vadd.f32 %v3996, %v4035
    %v4037 = vpop.f32.mrf.mxu0
    %v4038 = vpop.f32.mrf.mxu0
    %v4039 = vpop.f32.mrf.mxu0
    %4040 = vdwg.mxu0
    %4041 = vmatprep.subr.bf16.mxu0 0
    %4042 = vmatpush1.bf16.msra.mxu0 %v3016
    %4043 = vmatprep.subr.bf16.mxu0 0
    %4044 = vmatpush1.bf16.msra.mxu0 %v3015
    %4045 = vmatprep.subr.bf16.mxu0 0
    %4046 = vmatpush1.bf16.msra.mxu0 %v3014
    %4047 = vmatprep.subr.bf16.mxu0 0
    %4048 = vmatpush1.bf16.msra.mxu0 %v3013
    %4049 = vmatprep.subr.bf16.mxu0 0
    %4050 = vmatpush1.bf16.msra.mxu0 %v3012
    %4051 = vmatprep.subr.bf16.mxu0 0
    %4052 = vmatpush1.bf16.msra.mxu0 %v3011
    %4053 = vmatprep.subr.bf16.mxu0 0
    %4054 = vmatpush1.bf16.msra.mxu0 %v3010
    %4055 = vmatprep.subr.bf16.mxu0 0
    %4056 = vmatpush1.bf16.msra.mxu0 %v3009
    %4057 = vmatprep.subr.bf16.mxu0 0
    %4058 = vmatpush2.bf16.msra.mxu0 %v3024
    %4059 = vmatprep.subr.bf16.mxu0 0
    %4060 = vmatpush2.bf16.msra.mxu0 %v3023
    %4061 = vmatprep.subr.bf16.mxu0 0
    %4062 = vmatpush2.bf16.msra.mxu0 %v3022
    %4063 = vmatprep.subr.bf16.mxu0 0
    %4064 = vmatpush2.bf16.msra.mxu0 %v3021
    %4065 = vmatprep.subr.bf16.mxu0 0
    %4066 = vmatpush2.bf16.msra.mxu0 %v3020
    %4067 = vmatprep.subr.bf16.mxu0 0
    %4068 = vmatpush2.bf16.msra.mxu0 %v3019
    %4069 = vmatprep.subr.bf16.mxu0 0
    %4070 = vmatpush2.bf16.msra.mxu0 %v3018
    %4071 = vmatprep.subr.bf16.mxu0 0
    %4072 = vmatpush2.bf16.msra.mxu0 %v3017
    %4073 = vmatprep.mubr.bf16.mxu0 %v3549
    %4074 = vmatmul.mubr.bf16.gmra.mxu0 %v3535
    %v4075 = vpop.f32.mrf.mxu0
    %v4076 = vadd.f32 %v4036, %v4075
    %v4077 = vpop.f32.mrf.mxu0
    %v4078 = vpop.f32.mrf.mxu0
    %v4079 = vpop.f32.mrf.mxu0
    %4080 = vdwg.mxu0
    %4081 = vmatprep.subr.bf16.mxu0 0
    %4082 = vmatpush1.bf16.msra.mxu0 %v3032
    %4083 = vmatprep.subr.bf16.mxu0 0
    %4084 = vmatpush1.bf16.msra.mxu0 %v3031
    %4085 = vmatprep.subr.bf16.mxu0 0
    %4086 = vmatpush1.bf16.msra.mxu0 %v3030
    %4087 = vmatprep.subr.bf16.mxu0 0
    %4088 = vmatpush1.bf16.msra.mxu0 %v3029
    %4089 = vmatprep.subr.bf16.mxu0 0
    %4090 = vmatpush1.bf16.msra.mxu0 %v3028
    %4091 = vmatprep.subr.bf16.mxu0 0
    %4092 = vmatpush1.bf16.msra.mxu0 %v3027
    %4093 = vmatprep.subr.bf16.mxu0 0
    %4094 = vmatpush1.bf16.msra.mxu0 %v3026
    %4095 = vmatprep.subr.bf16.mxu0 0
    %4096 = vmatpush1.bf16.msra.mxu0 %v3025
    %4097 = vmatprep.subr.bf16.mxu0 0
    %4098 = vmatpush2.bf16.msra.mxu0 %v3040
    %4099 = vmatprep.subr.bf16.mxu0 0
    %4100 = vmatpush2.bf16.msra.mxu0 %v3039
    %4101 = vmatprep.subr.bf16.mxu0 0
    %4102 = vmatpush2.bf16.msra.mxu0 %v3038
    %4103 = vmatprep.subr.bf16.mxu0 0
    %4104 = vmatpush2.bf16.msra.mxu0 %v3037
    %4105 = vmatprep.subr.bf16.mxu0 0
    %4106 = vmatpush2.bf16.msra.mxu0 %v3036
    %4107 = vmatprep.subr.bf16.mxu0 0
    %4108 = vmatpush2.bf16.msra.mxu0 %v3035
    %4109 = vmatprep.subr.bf16.mxu0 0
    %4110 = vmatpush2.bf16.msra.mxu0 %v3034
    %4111 = vmatprep.subr.bf16.mxu0 0
    %4112 = vmatpush2.bf16.msra.mxu0 %v3033
    %4113 = vmatprep.mubr.bf16.mxu0 %v3553
    %4114 = vmatmul.mubr.bf16.gmra.mxu0 %v3551
    %v4115 = vpop.f32.mrf.mxu0
    %v4116 = vadd.f32 %v4076, %v4115
    %v4117 = vpop.f32.mrf.mxu0
    %v4118 = vpop.f32.mrf.mxu0
    %v4119 = vpop.f32.mrf.mxu0
    %4120 = vdwg.mxu0
    %4121 = vmatprep.subr.bf16.mxu0 0
    %4122 = vmatpush1.bf16.msra.mxu0 %v3048
    %4123 = vmatprep.subr.bf16.mxu0 0
    %4124 = vmatpush1.bf16.msra.mxu0 %v3047
    %4125 = vmatprep.subr.bf16.mxu0 0
    %4126 = vmatpush1.bf16.msra.mxu0 %v3046
    %4127 = vmatprep.subr.bf16.mxu0 0
    %4128 = vmatpush1.bf16.msra.mxu0 %v3045
    %4129 = vmatprep.subr.bf16.mxu0 0
    %4130 = vmatpush1.bf16.msra.mxu0 %v3044
    %4131 = vmatprep.subr.bf16.mxu0 0
    %4132 = vmatpush1.bf16.msra.mxu0 %v3043
    %4133 = vmatprep.subr.bf16.mxu0 0
    %4134 = vmatpush1.bf16.msra.mxu0 %v3042
    %4135 = vmatprep.subr.bf16.mxu0 0
    %4136 = vmatpush1.bf16.msra.mxu0 %v3041
    %4137 = vmatprep.subr.bf16.mxu0 0
    %4138 = vmatpush2.bf16.msra.mxu0 %v3056
    %4139 = vmatprep.subr.bf16.mxu0 0
    %4140 = vmatpush2.bf16.msra.mxu0 %v3055
    %4141 = vmatprep.subr.bf16.mxu0 0
    %4142 = vmatpush2.bf16.msra.mxu0 %v3054
    %4143 = vmatprep.subr.bf16.mxu0 0
    %4144 = vmatpush2.bf16.msra.mxu0 %v3053
    %4145 = vmatprep.subr.bf16.mxu0 0
    %4146 = vmatpush2.bf16.msra.mxu0 %v3052
    %4147 = vmatprep.subr.bf16.mxu0 0
    %4148 = vmatpush2.bf16.msra.mxu0 %v3051
    %4149 = vmatprep.subr.bf16.mxu0 0
    %4150 = vmatpush2.bf16.msra.mxu0 %v3050
    %4151 = vmatprep.subr.bf16.mxu0 0
    %4152 = vmatpush2.bf16.msra.mxu0 %v3049
    %4153 = vmatprep.mubr.bf16.mxu0 %v3591
    %4154 = vmatmul.mubr.bf16.gmra.mxu0 %v3577
    %v4155 = vpop.f32.mrf.mxu0
    %v4156 = vadd.f32 %v4116, %v4155
    %v4157 = vpop.f32.mrf.mxu0
    %v4158 = vpop.f32.mrf.mxu0
    %v4159 = vpop.f32.mrf.mxu0
    %4160 = vdwg.mxu0
    %4161 = vmatprep.subr.bf16.mxu0 0
    %4162 = vmatpush1.bf16.msra.mxu0 %v3064
    %4163 = vmatprep.subr.bf16.mxu0 0
    %4164 = vmatpush1.bf16.msra.mxu0 %v3063
    %4165 = vmatprep.subr.bf16.mxu0 0
    %4166 = vmatpush1.bf16.msra.mxu0 %v3062
    %4167 = vmatprep.subr.bf16.mxu0 0
    %4168 = vmatpush1.bf16.msra.mxu0 %v3061
    %4169 = vmatprep.subr.bf16.mxu0 0
    %4170 = vmatpush1.bf16.msra.mxu0 %v3060
    %4171 = vmatprep.subr.bf16.mxu0 0
    %4172 = vmatpush1.bf16.msra.mxu0 %v3059
    %4173 = vmatprep.subr.bf16.mxu0 0
    %4174 = vmatpush1.bf16.msra.mxu0 %v3058
    %4175 = vmatprep.subr.bf16.mxu0 0
    %4176 = vmatpush1.bf16.msra.mxu0 %v3057
    %4177 = vmatprep.subr.bf16.mxu0 0
    %4178 = vmatpush2.bf16.msra.mxu0 %v3072
    %4179 = vmatprep.subr.bf16.mxu0 0
    %4180 = vmatpush2.bf16.msra.mxu0 %v3071
    %4181 = vmatprep.subr.bf16.mxu0 0
    %4182 = vmatpush2.bf16.msra.mxu0 %v3070
    %4183 = vmatprep.subr.bf16.mxu0 0
    %4184 = vmatpush2.bf16.msra.mxu0 %v3069
    %4185 = vmatprep.subr.bf16.mxu0 0
    %4186 = vmatpush2.bf16.msra.mxu0 %v3068
    %4187 = vmatprep.subr.bf16.mxu0 0
    %4188 = vmatpush2.bf16.msra.mxu0 %v3067
    %4189 = vmatprep.subr.bf16.mxu0 0
    %4190 = vmatpush2.bf16.msra.mxu0 %v3066
    %4191 = vmatprep.subr.bf16.mxu0 0
    %4192 = vmatpush2.bf16.msra.mxu0 %v3065
    %4193 = vmatprep.mubr.bf16.mxu0 %v3601
    %4194 = vmatmul.mubr.bf16.gmra.mxu0 %v3599
    %v4195 = vpop.f32.mrf.mxu0
    %v4196 = vadd.f32 %v4156, %v4195
    %v4197 = vpop.f32.mrf.mxu0
    %v4198 = vpop.f32.mrf.mxu0
    %v4199 = vpop.f32.mrf.mxu0
    %4200 = vdwg.mxu0
    %4201 = vmatprep.subr.bf16.mxu0 0
    %4202 = vmatpush1.bf16.msra.mxu0 %v3080
    %4203 = vmatprep.subr.bf16.mxu0 0
    %4204 = vmatpush1.bf16.msra.mxu0 %v3079
    %4205 = vmatprep.subr.bf16.mxu0 0
    %4206 = vmatpush1.bf16.msra.mxu0 %v3078
    %4207 = vmatprep.subr.bf16.mxu0 0
    %4208 = vmatpush1.bf16.msra.mxu0 %v3077
    %4209 = vmatprep.subr.bf16.mxu0 0
    %4210 = vmatpush1.bf16.msra.mxu0 %v3076
    %4211 = vmatprep.subr.bf16.mxu0 0
    %4212 = vmatpush1.bf16.msra.mxu0 %v3075
    %4213 = vmatprep.subr.bf16.mxu0 0
    %4214 = vmatpush1.bf16.msra.mxu0 %v3074
    %4215 = vmatprep.subr.bf16.mxu0 0
    %4216 = vmatpush1.bf16.msra.mxu0 %v3073
    %4217 = vmatprep.subr.bf16.mxu0 0
    %4218 = vmatpush2.bf16.msra.mxu0 %v3088
    %4219 = vmatprep.subr.bf16.mxu0 0
    %4220 = vmatpush2.bf16.msra.mxu0 %v3087
    %4221 = vmatprep.subr.bf16.mxu0 0
    %4222 = vmatpush2.bf16.msra.mxu0 %v3086
    %4223 = vmatprep.subr.bf16.mxu0 0
    %4224 = vmatpush2.bf16.msra.mxu0 %v3085
    %4225 = vmatprep.subr.bf16.mxu0 0
    %4226 = vmatpush2.bf16.msra.mxu0 %v3084
    %4227 = vmatprep.subr.bf16.mxu0 0
    %4228 = vmatpush2.bf16.msra.mxu0 %v3083
    %4229 = vmatprep.subr.bf16.mxu0 0
    %4230 = vmatpush2.bf16.msra.mxu0 %v3082
    %4231 = vmatprep.subr.bf16.mxu0 0
    %4232 = vmatpush2.bf16.msra.mxu0 %v3081
    %4233 = vmatprep.mubr.bf16.mxu0 %v3598
    %4234 = vmatmul.mubr.bf16.gmra.mxu0 %v3584
    %v4235 = vpop.f32.mrf.mxu0
    %v4236 = vadd.f32 %v4196, %v4235
    %v4237 = vpop.f32.mrf.mxu0
    %v4238 = vpop.f32.mrf.mxu0
    %v4239 = vpop.f32.mrf.mxu0
    %4240 = vdwg.mxu0
    %4241 = vmatprep.subr.bf16.mxu0 0
    %4242 = vmatpush1.bf16.msra.mxu0 %v3096
    %4243 = vmatprep.subr.bf16.mxu0 0
    %4244 = vmatpush1.bf16.msra.mxu0 %v3095
    %4245 = vmatprep.subr.bf16.mxu0 0
    %4246 = vmatpush1.bf16.msra.mxu0 %v3094
    %4247 = vmatprep.subr.bf16.mxu0 0
    %4248 = vmatpush1.bf16.msra.mxu0 %v3093
    %4249 = vmatprep.subr.bf16.mxu0 0
    %4250 = vmatpush1.bf16.msra.mxu0 %v3092
    %4251 = vmatprep.subr.bf16.mxu0 0
    %4252 = vmatpush1.bf16.msra.mxu0 %v3091
    %4253 = vmatprep.subr.bf16.mxu0 0
    %4254 = vmatpush1.bf16.msra.mxu0 %v3090
    %4255 = vmatprep.subr.bf16.mxu0 0
    %4256 = vmatpush1.bf16.msra.mxu0 %v3089
    %4257 = vmatprep.subr.bf16.mxu0 0
    %4258 = vmatpush2.bf16.msra.mxu0 %v3104
    %4259 = vmatprep.subr.bf16.mxu0 0
    %4260 = vmatpush2.bf16.msra.mxu0 %v3103
    %4261 = vmatprep.subr.bf16.mxu0 0
    %4262 = vmatpush2.bf16.msra.mxu0 %v3102
    %4263 = vmatprep.subr.bf16.mxu0 0
    %4264 = vmatpush2.bf16.msra.mxu0 %v3101
    %4265 = vmatprep.subr.bf16.mxu0 0
    %4266 = vmatpush2.bf16.msra.mxu0 %v3100
    %4267 = vmatprep.subr.bf16.mxu0 0
    %4268 = vmatpush2.bf16.msra.mxu0 %v3099
    %4269 = vmatprep.subr.bf16.mxu0 0
    %4270 = vmatpush2.bf16.msra.mxu0 %v3098
    %4271 = vmatprep.subr.bf16.mxu0 0
    %4272 = vmatpush2.bf16.msra.mxu0 %v3097
    %4273 = vmatprep.mubr.bf16.mxu0 %v3602
    %4274 = vmatmul.mubr.bf16.gmra.mxu0 %v3600
    %v4275 = vpop.f32.mrf.mxu0
    %v4276 = vadd.f32 %v4236, %v4275
    %v4277 = vpop.f32.mrf.mxu0
    %v4278 = vpop.f32.mrf.mxu0
    %v4279 = vpop.f32.mrf.mxu0
    %4280 = vdwg.mxu0
    %4281 = vmatprep.subr.bf16.mxu0 0
    %4282 = vmatpush1.bf16.msra.mxu0 %v3112
    %4283 = vmatprep.subr.bf16.mxu0 0
    %4284 = vmatpush1.bf16.msra.mxu0 %v3111
    %4285 = vmatprep.subr.bf16.mxu0 0
    %4286 = vmatpush1.bf16.msra.mxu0 %v3110
    %4287 = vmatprep.subr.bf16.mxu0 0
    %4288 = vmatpush1.bf16.msra.mxu0 %v3109
    %4289 = vmatprep.subr.bf16.mxu0 0
    %4290 = vmatpush1.bf16.msra.mxu0 %v3108
    %4291 = vmatprep.subr.bf16.mxu0 0
    %4292 = vmatpush1.bf16.msra.mxu0 %v3107
    %4293 = vmatprep.subr.bf16.mxu0 0
    %4294 = vmatpush1.bf16.msra.mxu0 %v3106
    %4295 = vmatprep.subr.bf16.mxu0 0
    %4296 = vmatpush1.bf16.msra.mxu0 %v3105
    %4297 = vmatprep.subr.bf16.mxu0 0
    %4298 = vmatpush2.bf16.msra.mxu0 %v3120
    %4299 = vmatprep.subr.bf16.mxu0 0
    %4300 = vmatpush2.bf16.msra.mxu0 %v3119
    %4301 = vmatprep.subr.bf16.mxu0 0
    %4302 = vmatpush2.bf16.msra.mxu0 %v3118
    %4303 = vmatprep.subr.bf16.mxu0 0
    %4304 = vmatpush2.bf16.msra.mxu0 %v3117
    %4305 = vmatprep.subr.bf16.mxu0 0
    %4306 = vmatpush2.bf16.msra.mxu0 %v3116
    %4307 = vmatprep.subr.bf16.mxu0 0
    %4308 = vmatpush2.bf16.msra.mxu0 %v3115
    %4309 = vmatprep.subr.bf16.mxu0 0
    %4310 = vmatpush2.bf16.msra.mxu0 %v3114
    %4311 = vmatprep.subr.bf16.mxu0 0
    %4312 = vmatpush2.bf16.msra.mxu0 %v3113
    %4313 = vmatprep.mubr.bf16.mxu0 %v3640
    %4314 = vmatmul.mubr.bf16.gmra.mxu0 %v3626
    %v4315 = vpop.f32.mrf.mxu0
    %v4316 = vadd.f32 %v4276, %v4315
    %v4317 = vpop.f32.mrf.mxu0
    %v4318 = vpop.f32.mrf.mxu0
    %v4319 = vpop.f32.mrf.mxu0
    %4320 = vdwg.mxu0
    %4321 = vmatprep.subr.bf16.mxu0 0
    %4322 = vmatpush1.bf16.msra.mxu0 %v3128
    %4323 = vmatprep.subr.bf16.mxu0 0
    %4324 = vmatpush1.bf16.msra.mxu0 %v3127
    %4325 = vmatprep.subr.bf16.mxu0 0
    %4326 = vmatpush1.bf16.msra.mxu0 %v3126
    %4327 = vmatprep.subr.bf16.mxu0 0
    %4328 = vmatpush1.bf16.msra.mxu0 %v3125
    %4329 = vmatprep.subr.bf16.mxu0 0
    %4330 = vmatpush1.bf16.msra.mxu0 %v3124
    %4331 = vmatprep.subr.bf16.mxu0 0
    %4332 = vmatpush1.bf16.msra.mxu0 %v3123
    %4333 = vmatprep.subr.bf16.mxu0 0
    %4334 = vmatpush1.bf16.msra.mxu0 %v3122
    %4335 = vmatprep.subr.bf16.mxu0 0
    %4336 = vmatpush1.bf16.msra.mxu0 %v3121
    %4337 = vmatprep.subr.bf16.mxu0 0
    %4338 = vmatpush2.bf16.msra.mxu0 %v3136
    %4339 = vmatprep.subr.bf16.mxu0 0
    %4340 = vmatpush2.bf16.msra.mxu0 %v3135
    %4341 = vmatprep.subr.bf16.mxu0 0
    %4342 = vmatpush2.bf16.msra.mxu0 %v3134
    %4343 = vmatprep.subr.bf16.mxu0 0
    %4344 = vmatpush2.bf16.msra.mxu0 %v3133
    %4345 = vmatprep.subr.bf16.mxu0 0
    %4346 = vmatpush2.bf16.msra.mxu0 %v3132
    %4347 = vmatprep.subr.bf16.mxu0 0
    %4348 = vmatpush2.bf16.msra.mxu0 %v3131
    %4349 = vmatprep.subr.bf16.mxu0 0
    %4350 = vmatpush2.bf16.msra.mxu0 %v3130
    %4351 = vmatprep.subr.bf16.mxu0 0
    %4352 = vmatpush2.bf16.msra.mxu0 %v3129
    %4353 = vmatprep.mubr.bf16.mxu0 %v3650
    %4354 = vmatmul.mubr.bf16.gmra.mxu0 %v3648
    %v4355 = vpop.f32.mrf.mxu0
    %v4356 = vadd.f32 %v4316, %v4355
    %v4357 = vpop.f32.mrf.mxu0
    %v4358 = vpop.f32.mrf.mxu0
    %v4359 = vpop.f32.mrf.mxu0
    %4360 = vdwg.mxu0
    %4361 = vmatprep.subr.bf16.mxu0 0
    %4362 = vmatpush1.bf16.msra.mxu0 %v3144
    %4363 = vmatprep.subr.bf16.mxu0 0
    %4364 = vmatpush1.bf16.msra.mxu0 %v3143
    %4365 = vmatprep.subr.bf16.mxu0 0
    %4366 = vmatpush1.bf16.msra.mxu0 %v3142
    %4367 = vmatprep.subr.bf16.mxu0 0
    %4368 = vmatpush1.bf16.msra.mxu0 %v3141
    %4369 = vmatprep.subr.bf16.mxu0 0
    %4370 = vmatpush1.bf16.msra.mxu0 %v3140
    %4371 = vmatprep.subr.bf16.mxu0 0
    %4372 = vmatpush1.bf16.msra.mxu0 %v3139
    %4373 = vmatprep.subr.bf16.mxu0 0
    %4374 = vmatpush1.bf16.msra.mxu0 %v3138
    %4375 = vmatprep.subr.bf16.mxu0 0
    %4376 = vmatpush1.bf16.msra.mxu0 %v3137
    %4377 = vmatprep.subr.bf16.mxu0 0
    %4378 = vmatpush2.bf16.msra.mxu0 %v3152
    %4379 = vmatprep.subr.bf16.mxu0 0
    %4380 = vmatpush2.bf16.msra.mxu0 %v3151
    %4381 = vmatprep.subr.bf16.mxu0 0
    %4382 = vmatpush2.bf16.msra.mxu0 %v3150
    %4383 = vmatprep.subr.bf16.mxu0 0
    %4384 = vmatpush2.bf16.msra.mxu0 %v3149
    %4385 = vmatprep.subr.bf16.mxu0 0
    %4386 = vmatpush2.bf16.msra.mxu0 %v3148
    %4387 = vmatprep.subr.bf16.mxu0 0
    %4388 = vmatpush2.bf16.msra.mxu0 %v3147
    %4389 = vmatprep.subr.bf16.mxu0 0
    %4390 = vmatpush2.bf16.msra.mxu0 %v3146
    %4391 = vmatprep.subr.bf16.mxu0 0
    %4392 = vmatpush2.bf16.msra.mxu0 %v3145
    %4393 = vmatprep.mubr.bf16.mxu0 %v3647
    %4394 = vmatmul.mubr.bf16.gmra.mxu0 %v3633
    %v4395 = vpop.f32.mrf.mxu0
    %v4396 = vadd.f32 %v4356, %v4395
    %v4397 = vpop.f32.mrf.mxu0
    %v4398 = vpop.f32.mrf.mxu0
    %v4399 = vpop.f32.mrf.mxu0
    %4400 = vdwg.mxu0
    %4401 = vmatprep.subr.bf16.mxu0 0
    %4402 = vmatpush1.bf16.msra.mxu0 %v3160
    %4403 = vmatprep.subr.bf16.mxu0 0
    %4404 = vmatpush1.bf16.msra.mxu0 %v3159
    %4405 = vmatprep.subr.bf16.mxu0 0
    %4406 = vmatpush1.bf16.msra.mxu0 %v3158
    %4407 = vmatprep.subr.bf16.mxu0 0
    %4408 = vmatpush1.bf16.msra.mxu0 %v3157
    %4409 = vmatprep.subr.bf16.mxu0 0
    %4410 = vmatpush1.bf16.msra.mxu0 %v3156
    %4411 = vmatprep.subr.bf16.mxu0 0
    %4412 = vmatpush1.bf16.msra.mxu0 %v3155
    %4413 = vmatprep.subr.bf16.mxu0 0
    %4414 = vmatpush1.bf16.msra.mxu0 %v3154
    %4415 = vmatprep.subr.bf16.mxu0 0
    %4416 = vmatpush1.bf16.msra.mxu0 %v3153
    %4417 = vmatprep.subr.bf16.mxu0 0
    %4418 = vmatpush2.bf16.msra.mxu0 %v3168
    %4419 = vmatprep.subr.bf16.mxu0 0
    %4420 = vmatpush2.bf16.msra.mxu0 %v3167
    %4421 = vmatprep.subr.bf16.mxu0 0
    %4422 = vmatpush2.bf16.msra.mxu0 %v3166
    %4423 = vmatprep.subr.bf16.mxu0 0
    %4424 = vmatpush2.bf16.msra.mxu0 %v3165
    %4425 = vmatprep.subr.bf16.mxu0 0
    %4426 = vmatpush2.bf16.msra.mxu0 %v3164
    %4427 = vmatprep.subr.bf16.mxu0 0
    %4428 = vmatpush2.bf16.msra.mxu0 %v3163
    %4429 = vmatprep.subr.bf16.mxu0 0
    %4430 = vmatpush2.bf16.msra.mxu0 %v3162
    %4431 = vmatprep.subr.bf16.mxu0 0
    %4432 = vmatpush2.bf16.msra.mxu0 %v3161
    %4433 = vmatprep.mubr.bf16.mxu0 %v3651
    %4434 = vmatmul.mubr.bf16.gmra.mxu0 %v3649
    %v4435 = vpop.f32.mrf.mxu0
    %v4436 = vadd.f32 %v4396, %v4435
    %v4437 = vpop.f32.mrf.mxu0
    %v4438 = vpop.f32.mrf.mxu0
    %v4439 = vpop.f32.mrf.mxu0
    %4440 = vdwg.mxu0
    %4441 = vmatprep.subr.bf16.mxu0 0
    %4442 = vmatpush1.bf16.msra.mxu0 %v3176
    %4443 = vmatprep.subr.bf16.mxu0 0
    %4444 = vmatpush1.bf16.msra.mxu0 %v3175
    %4445 = vmatprep.subr.bf16.mxu0 0
    %4446 = vmatpush1.bf16.msra.mxu0 %v3174
    %4447 = vmatprep.subr.bf16.mxu0 0
    %4448 = vmatpush1.bf16.msra.mxu0 %v3173
    %4449 = vmatprep.subr.bf16.mxu0 0
    %4450 = vmatpush1.bf16.msra.mxu0 %v3172
    %4451 = vmatprep.subr.bf16.mxu0 0
    %4452 = vmatpush1.bf16.msra.mxu0 %v3171
    %4453 = vmatprep.subr.bf16.mxu0 0
    %4454 = vmatpush1.bf16.msra.mxu0 %v3170
    %4455 = vmatprep.subr.bf16.mxu0 0
    %4456 = vmatpush1.bf16.msra.mxu0 %v3169
    %4457 = vmatprep.subr.bf16.mxu0 0
    %4458 = vmatpush2.bf16.msra.mxu0 %v3184
    %4459 = vmatprep.subr.bf16.mxu0 0
    %4460 = vmatpush2.bf16.msra.mxu0 %v3183
    %4461 = vmatprep.subr.bf16.mxu0 0
    %4462 = vmatpush2.bf16.msra.mxu0 %v3182
    %4463 = vmatprep.subr.bf16.mxu0 0
    %4464 = vmatpush2.bf16.msra.mxu0 %v3181
    %4465 = vmatprep.subr.bf16.mxu0 0
    %4466 = vmatpush2.bf16.msra.mxu0 %v3180
    %4467 = vmatprep.subr.bf16.mxu0 0
    %4468 = vmatpush2.bf16.msra.mxu0 %v3179
    %4469 = vmatprep.subr.bf16.mxu0 0
    %4470 = vmatpush2.bf16.msra.mxu0 %v3178
    %4471 = vmatprep.subr.bf16.mxu0 0
    %4472 = vmatpush2.bf16.msra.mxu0 %v3177
    %4473 = vmatprep.mubr.bf16.mxu0 %v3689
    %4474 = vmatmul.mubr.bf16.gmra.mxu0 %v3675
    %v4475 = vpop.f32.mrf.mxu0
    %v4476 = vadd.f32 %v4436, %v4475
    %v4477 = vpop.f32.mrf.mxu0
    %v4478 = vpop.f32.mrf.mxu0
    %v4479 = vpop.f32.mrf.mxu0
    %4480 = vdwg.mxu0
    %4481 = vmatprep.subr.bf16.mxu0 0
    %4482 = vmatpush1.bf16.msra.mxu0 %v3192
    %4483 = vmatprep.subr.bf16.mxu0 0
    %4484 = vmatpush1.bf16.msra.mxu0 %v3191
    %4485 = vmatprep.subr.bf16.mxu0 0
    %4486 = vmatpush1.bf16.msra.mxu0 %v3190
    %4487 = vmatprep.subr.bf16.mxu0 0
    %4488 = vmatpush1.bf16.msra.mxu0 %v3189
    %4489 = vmatprep.subr.bf16.mxu0 0
    %4490 = vmatpush1.bf16.msra.mxu0 %v3188
    %4491 = vmatprep.subr.bf16.mxu0 0
    %4492 = vmatpush1.bf16.msra.mxu0 %v3187
    %4493 = vmatprep.subr.bf16.mxu0 0
    %4494 = vmatpush1.bf16.msra.mxu0 %v3186
    %4495 = vmatprep.subr.bf16.mxu0 0
    %4496 = vmatpush1.bf16.msra.mxu0 %v3185
    %4497 = vmatprep.subr.bf16.mxu0 0
    %4498 = vmatpush2.bf16.msra.mxu0 %v3200
    %4499 = vmatprep.subr.bf16.mxu0 0
    %4500 = vmatpush2.bf16.msra.mxu0 %v3199
    %4501 = vmatprep.subr.bf16.mxu0 0
    %4502 = vmatpush2.bf16.msra.mxu0 %v3198
    %4503 = vmatprep.subr.bf16.mxu0 0
    %4504 = vmatpush2.bf16.msra.mxu0 %v3197
    %4505 = vmatprep.subr.bf16.mxu0 0
    %4506 = vmatpush2.bf16.msra.mxu0 %v3196
    %4507 = vmatprep.subr.bf16.mxu0 0
    %4508 = vmatpush2.bf16.msra.mxu0 %v3195
    %4509 = vmatprep.subr.bf16.mxu0 0
    %4510 = vmatpush2.bf16.msra.mxu0 %v3194
    %4511 = vmatprep.subr.bf16.mxu0 0
    %4512 = vmatpush2.bf16.msra.mxu0 %v3193
    %4513 = vmatprep.mubr.bf16.mxu0 %v3699
    %4514 = vmatmul.mubr.bf16.gmra.mxu0 %v3697
    %v4515 = vpop.f32.mrf.mxu0
    %v4516 = vadd.f32 %v4476, %v4515
    %v4517 = vpop.f32.mrf.mxu0
    %v4518 = vpop.f32.mrf.mxu0
    %v4519 = vpop.f32.mrf.mxu0
    %4520 = vdwg.mxu0
    %4521 = vmatprep.subr.bf16.mxu0 0
    %4522 = vmatpush1.bf16.msra.mxu0 %v3208
    %4523 = vmatprep.subr.bf16.mxu0 0
    %4524 = vmatpush1.bf16.msra.mxu0 %v3207
    %4525 = vmatprep.subr.bf16.mxu0 0
    %4526 = vmatpush1.bf16.msra.mxu0 %v3206
    %4527 = vmatprep.subr.bf16.mxu0 0
    %4528 = vmatpush1.bf16.msra.mxu0 %v3205
    %4529 = vmatprep.subr.bf16.mxu0 0
    %4530 = vmatpush1.bf16.msra.mxu0 %v3204
    %4531 = vmatprep.subr.bf16.mxu0 0
    %4532 = vmatpush1.bf16.msra.mxu0 %v3203
    %4533 = vmatprep.subr.bf16.mxu0 0
    %4534 = vmatpush1.bf16.msra.mxu0 %v3202
    %4535 = vmatprep.subr.bf16.mxu0 0
    %4536 = vmatpush1.bf16.msra.mxu0 %v3201
    %4537 = vmatprep.subr.bf16.mxu0 0
    %4538 = vmatpush2.bf16.msra.mxu0 %v3216
    %4539 = vmatprep.subr.bf16.mxu0 0
    %4540 = vmatpush2.bf16.msra.mxu0 %v3215
    %4541 = vmatprep.subr.bf16.mxu0 0
    %4542 = vmatpush2.bf16.msra.mxu0 %v3214
    %4543 = vmatprep.subr.bf16.mxu0 0
    %4544 = vmatpush2.bf16.msra.mxu0 %v3213
    %4545 = vmatprep.subr.bf16.mxu0 0
    %4546 = vmatpush2.bf16.msra.mxu0 %v3212
    %4547 = vmatprep.subr.bf16.mxu0 0
    %4548 = vmatpush2.bf16.msra.mxu0 %v3211
    %4549 = vmatprep.subr.bf16.mxu0 0
    %4550 = vmatpush2.bf16.msra.mxu0 %v3210
    %4551 = vmatprep.subr.bf16.mxu0 0
    %4552 = vmatpush2.bf16.msra.mxu0 %v3209
    %4553 = vmatprep.mubr.bf16.mxu0 %v3696
    %4554 = vmatmul.mubr.bf16.gmra.mxu0 %v3682
    %v4555 = vpop.f32.mrf.mxu0
    %v4556 = vadd.f32 %v4516, %v4555
    %v4557 = vpop.f32.mrf.mxu0
    %v4558 = vpop.f32.mrf.mxu0
    %v4559 = vpop.f32.mrf.mxu0
    %4560 = vdwg.mxu0
    %4561 = vmatprep.subr.bf16.mxu0 0
    %4562 = vmatpush1.bf16.msra.mxu0 %v3224
    %4563 = vmatprep.subr.bf16.mxu0 0
    %4564 = vmatpush1.bf16.msra.mxu0 %v3223
    %4565 = vmatprep.subr.bf16.mxu0 0
    %4566 = vmatpush1.bf16.msra.mxu0 %v3222
    %4567 = vmatprep.subr.bf16.mxu0 0
    %4568 = vmatpush1.bf16.msra.mxu0 %v3221
    %4569 = vmatprep.subr.bf16.mxu0 0
    %4570 = vmatpush1.bf16.msra.mxu0 %v3220
    %4571 = vmatprep.subr.bf16.mxu0 0
    %4572 = vmatpush1.bf16.msra.mxu0 %v3219
    %4573 = vmatprep.subr.bf16.mxu0 0
    %4574 = vmatpush1.bf16.msra.mxu0 %v3218
    %4575 = vmatprep.subr.bf16.mxu0 0
    %4576 = vmatpush1.bf16.msra.mxu0 %v3217
    %4577 = vmatprep.subr.bf16.mxu0 0
    %4578 = vmatpush2.bf16.msra.mxu0 %v3232
    %4579 = vmatprep.subr.bf16.mxu0 0
    %4580 = vmatpush2.bf16.msra.mxu0 %v3231
    %4581 = vmatprep.subr.bf16.mxu0 0
    %4582 = vmatpush2.bf16.msra.mxu0 %v3230
    %4583 = vmatprep.subr.bf16.mxu0 0
    %4584 = vmatpush2.bf16.msra.mxu0 %v3229
    %4585 = vmatprep.subr.bf16.mxu0 0
    %4586 = vmatpush2.bf16.msra.mxu0 %v3228
    %4587 = vmatprep.subr.bf16.mxu0 0
    %4588 = vmatpush2.bf16.msra.mxu0 %v3227
    %4589 = vmatprep.subr.bf16.mxu0 0
    %4590 = vmatpush2.bf16.msra.mxu0 %v3226
    %4591 = vmatprep.subr.bf16.mxu0 0
    %4592 = vmatpush2.bf16.msra.mxu0 %v3225
    %4593 = vmatprep.mubr.bf16.mxu0 %v3700
    %4594 = vmatmul.mubr.bf16.gmra.mxu0 %v3698
    %v4595 = vpop.f32.mrf.mxu0
    %v4596 = vadd.f32 %v4556, %v4595
    %v4597 = vpop.f32.mrf.mxu0
    %v4598 = vpop.f32.mrf.mxu0
    %v4599 = vpop.f32.mrf.mxu0
    %4600 = vdwg.mxu0
    %4601 = vmatprep.subr.bf16.mxu0 0
    %4602 = vmatpush1.bf16.msra.mxu0 %v3240
    %4603 = vmatprep.subr.bf16.mxu0 0
    %4604 = vmatpush1.bf16.msra.mxu0 %v3239
    %4605 = vmatprep.subr.bf16.mxu0 0
    %4606 = vmatpush1.bf16.msra.mxu0 %v3238
    %4607 = vmatprep.subr.bf16.mxu0 0
    %4608 = vmatpush1.bf16.msra.mxu0 %v3237
    %4609 = vmatprep.subr.bf16.mxu0 0
    %4610 = vmatpush1.bf16.msra.mxu0 %v3236
    %4611 = vmatprep.subr.bf16.mxu0 0
    %4612 = vmatpush1.bf16.msra.mxu0 %v3235
    %4613 = vmatprep.subr.bf16.mxu0 0
    %4614 = vmatpush1.bf16.msra.mxu0 %v3234
    %4615 = vmatprep.subr.bf16.mxu0 0
    %4616 = vmatpush1.bf16.msra.mxu0 %v3233
    %4617 = vmatprep.subr.bf16.mxu0 0
    %4618 = vmatpush2.bf16.msra.mxu0 %v3248
    %4619 = vmatprep.subr.bf16.mxu0 0
    %4620 = vmatpush2.bf16.msra.mxu0 %v3247
    %4621 = vmatprep.subr.bf16.mxu0 0
    %4622 = vmatpush2.bf16.msra.mxu0 %v3246
    %4623 = vmatprep.subr.bf16.mxu0 0
    %4624 = vmatpush2.bf16.msra.mxu0 %v3245
    %4625 = vmatprep.subr.bf16.mxu0 0
    %4626 = vmatpush2.bf16.msra.mxu0 %v3244
    %4627 = vmatprep.subr.bf16.mxu0 0
    %4628 = vmatpush2.bf16.msra.mxu0 %v3243
    %4629 = vmatprep.subr.bf16.mxu0 0
    %4630 = vmatpush2.bf16.msra.mxu0 %v3242
    %4631 = vmatprep.subr.bf16.mxu0 0
    %4632 = vmatpush2.bf16.msra.mxu0 %v3241
    %4633 = vmatprep.mubr.bf16.mxu0 %v3738
    %4634 = vmatmul.mubr.bf16.gmra.mxu0 %v3724
    %v4635 = vpop.f32.mrf.mxu0
    %v4636 = vadd.f32 %v4596, %v4635
    %v4637 = vpop.f32.mrf.mxu0
    %v4638 = vpop.f32.mrf.mxu0
    %v4639 = vpop.f32.mrf.mxu0
    %4640 = vdwg.mxu0
    %4641 = vmatprep.subr.bf16.mxu0 0
    %4642 = vmatpush1.bf16.msra.mxu0 %v3256
    %4643 = vmatprep.subr.bf16.mxu0 0
    %4644 = vmatpush1.bf16.msra.mxu0 %v3255
    %4645 = vmatprep.subr.bf16.mxu0 0
    %4646 = vmatpush1.bf16.msra.mxu0 %v3254
    %4647 = vmatprep.subr.bf16.mxu0 0
    %4648 = vmatpush1.bf16.msra.mxu0 %v3253
    %4649 = vmatprep.subr.bf16.mxu0 0
    %4650 = vmatpush1.bf16.msra.mxu0 %v3252
    %4651 = vmatprep.subr.bf16.mxu0 0
    %4652 = vmatpush1.bf16.msra.mxu0 %v3251
    %4653 = vmatprep.subr.bf16.mxu0 0
    %4654 = vmatpush1.bf16.msra.mxu0 %v3250
    %4655 = vmatprep.subr.bf16.mxu0 0
    %4656 = vmatpush1.bf16.msra.mxu0 %v3249
    %4657 = vmatprep.subr.bf16.mxu0 0
    %4658 = vmatpush2.bf16.msra.mxu0 %v3264
    %4659 = vmatprep.subr.bf16.mxu0 0
    %4660 = vmatpush2.bf16.msra.mxu0 %v3263
    %4661 = vmatprep.subr.bf16.mxu0 0
    %4662 = vmatpush2.bf16.msra.mxu0 %v3262
    %4663 = vmatprep.subr.bf16.mxu0 0
    %4664 = vmatpush2.bf16.msra.mxu0 %v3261
    %4665 = vmatprep.subr.bf16.mxu0 0
    %4666 = vmatpush2.bf16.msra.mxu0 %v3260
    %4667 = vmatprep.subr.bf16.mxu0 0
    %4668 = vmatpush2.bf16.msra.mxu0 %v3259
    %4669 = vmatprep.subr.bf16.mxu0 0
    %4670 = vmatpush2.bf16.msra.mxu0 %v3258
    %4671 = vmatprep.subr.bf16.mxu0 0
    %4672 = vmatpush2.bf16.msra.mxu0 %v3257
    %4673 = vmatprep.mubr.bf16.mxu0 %v3748
    %4674 = vmatmul.mubr.bf16.gmra.mxu0 %v3746
    %v4675 = vpop.f32.mrf.mxu0
    %v4676 = vadd.f32 %v4636, %v4675
    %v4677 = vpop.f32.mrf.mxu0
    %v4678 = vpop.f32.mrf.mxu0
    %v4679 = vpop.f32.mrf.mxu0
    %4680 = vdwg.mxu0
    %4681 = vmatprep.subr.bf16.mxu0 0
    %4682 = vmatpush1.bf16.msra.mxu0 %v3272
    %4683 = vmatprep.subr.bf16.mxu0 0
    %4684 = vmatpush1.bf16.msra.mxu0 %v3271
    %4685 = vmatprep.subr.bf16.mxu0 0
    %4686 = vmatpush1.bf16.msra.mxu0 %v3270
    %4687 = vmatprep.subr.bf16.mxu0 0
    %4688 = vmatpush1.bf16.msra.mxu0 %v3269
    %4689 = vmatprep.subr.bf16.mxu0 0
    %4690 = vmatpush1.bf16.msra.mxu0 %v3268
    %4691 = vmatprep.subr.bf16.mxu0 0
    %4692 = vmatpush1.bf16.msra.mxu0 %v3267
    %4693 = vmatprep.subr.bf16.mxu0 0
    %4694 = vmatpush1.bf16.msra.mxu0 %v3266
    %4695 = vmatprep.subr.bf16.mxu0 0
    %4696 = vmatpush1.bf16.msra.mxu0 %v3265
    %4697 = vmatprep.subr.bf16.mxu0 0
    %4698 = vmatpush2.bf16.msra.mxu0 %v3280
    %4699 = vmatprep.subr.bf16.mxu0 0
    %4700 = vmatpush2.bf16.msra.mxu0 %v3279
    %4701 = vmatprep.subr.bf16.mxu0 0
    %4702 = vmatpush2.bf16.msra.mxu0 %v3278
    %4703 = vmatprep.subr.bf16.mxu0 0
    %4704 = vmatpush2.bf16.msra.mxu0 %v3277
    %4705 = vmatprep.subr.bf16.mxu0 0
    %4706 = vmatpush2.bf16.msra.mxu0 %v3276
    %4707 = vmatprep.subr.bf16.mxu0 0
    %4708 = vmatpush2.bf16.msra.mxu0 %v3275
    %4709 = vmatprep.subr.bf16.mxu0 0
    %4710 = vmatpush2.bf16.msra.mxu0 %v3274
    %4711 = vmatprep.subr.bf16.mxu0 0
    %4712 = vmatpush2.bf16.msra.mxu0 %v3273
    %4713 = vmatprep.mubr.bf16.mxu0 %v3745
    %4714 = vmatmul.mubr.bf16.gmra.mxu0 %v3731
    %v4715 = vpop.f32.mrf.mxu0
    %v4716 = vadd.f32 %v4676, %v4715
    %v4717 = vpop.f32.mrf.mxu0
    %v4718 = vpop.f32.mrf.mxu0
    %v4719 = vpop.f32.mrf.mxu0
    %4720 = vdwg.mxu0
    %4721 = vmatprep.subr.bf16.mxu0 0
    %4722 = vmatpush1.bf16.msra.mxu0 %v3288
    %4723 = vmatprep.subr.bf16.mxu0 0
    %4724 = vmatpush1.bf16.msra.mxu0 %v3287
    %4725 = vmatprep.subr.bf16.mxu0 0
    %4726 = vmatpush1.bf16.msra.mxu0 %v3286
    %4727 = vmatprep.subr.bf16.mxu0 0
    %4728 = vmatpush1.bf16.msra.mxu0 %v3285
    %4729 = vmatprep.subr.bf16.mxu0 0
    %4730 = vmatpush1.bf16.msra.mxu0 %v3284
    %4731 = vmatprep.subr.bf16.mxu0 0
    %4732 = vmatpush1.bf16.msra.mxu0 %v3283
    %4733 = vmatprep.subr.bf16.mxu0 0
    %4734 = vmatpush1.bf16.msra.mxu0 %v3282
    %4735 = vmatprep.subr.bf16.mxu0 0
    %4736 = vmatpush1.bf16.msra.mxu0 %v3281
    %4737 = vmatprep.subr.bf16.mxu0 0
    %4738 = vmatpush2.bf16.msra.mxu0 %v3296
    %4739 = vmatprep.subr.bf16.mxu0 0
    %4740 = vmatpush2.bf16.msra.mxu0 %v3295
    %4741 = vmatprep.subr.bf16.mxu0 0
    %4742 = vmatpush2.bf16.msra.mxu0 %v3294
    %4743 = vmatprep.subr.bf16.mxu0 0
    %4744 = vmatpush2.bf16.msra.mxu0 %v3293
    %4745 = vmatprep.subr.bf16.mxu0 0
    %4746 = vmatpush2.bf16.msra.mxu0 %v3292
    %4747 = vmatprep.subr.bf16.mxu0 0
    %4748 = vmatpush2.bf16.msra.mxu0 %v3291
    %4749 = vmatprep.subr.bf16.mxu0 0
    %4750 = vmatpush2.bf16.msra.mxu0 %v3290
    %4751 = vmatprep.subr.bf16.mxu0 0
    %4752 = vmatpush2.bf16.msra.mxu0 %v3289
    %4753 = vmatprep.mubr.bf16.mxu0 %v3749
    %4754 = vmatmul.mubr.bf16.gmra.mxu0 %v3747
    %v4755 = vpop.f32.mrf.mxu0
    %v4756 = vadd.f32 %v4716, %v4755
    %v4757 = vpop.f32.mrf.mxu0
    %v4758 = vpop.f32.mrf.mxu0
    %v4759 = vpop.f32.mrf.mxu0
    %4760 = vdwg.mxu0
    %4761 = vmatprep.subr.bf16.mxu0 0
    %4762 = vmatpush1.bf16.msra.mxu0 %v3304
    %4763 = vmatprep.subr.bf16.mxu0 0
    %4764 = vmatpush1.bf16.msra.mxu0 %v3303
    %4765 = vmatprep.subr.bf16.mxu0 0
    %4766 = vmatpush1.bf16.msra.mxu0 %v3302
    %4767 = vmatprep.subr.bf16.mxu0 0
    %4768 = vmatpush1.bf16.msra.mxu0 %v3301
    %4769 = vmatprep.subr.bf16.mxu0 0
    %4770 = vmatpush1.bf16.msra.mxu0 %v3300
    %4771 = vmatprep.subr.bf16.mxu0 0
    %4772 = vmatpush1.bf16.msra.mxu0 %v3299
    %4773 = vmatprep.subr.bf16.mxu0 0
    %4774 = vmatpush1.bf16.msra.mxu0 %v3298
    %4775 = vmatprep.subr.bf16.mxu0 0
    %4776 = vmatpush1.bf16.msra.mxu0 %v3297
    %4777 = vmatprep.subr.bf16.mxu0 0
    %4778 = vmatpush2.bf16.msra.mxu0 %v3312
    %4779 = vmatprep.subr.bf16.mxu0 0
    %4780 = vmatpush2.bf16.msra.mxu0 %v3311
    %4781 = vmatprep.subr.bf16.mxu0 0
    %4782 = vmatpush2.bf16.msra.mxu0 %v3310
    %4783 = vmatprep.subr.bf16.mxu0 0
    %4784 = vmatpush2.bf16.msra.mxu0 %v3309
    %4785 = vmatprep.subr.bf16.mxu0 0
    %4786 = vmatpush2.bf16.msra.mxu0 %v3308
    %4787 = vmatprep.subr.bf16.mxu0 0
    %4788 = vmatpush2.bf16.msra.mxu0 %v3307
    %4789 = vmatprep.subr.bf16.mxu0 0
    %4790 = vmatpush2.bf16.msra.mxu0 %v3306
    %4791 = vmatprep.subr.bf16.mxu0 0
    %4792 = vmatpush2.bf16.msra.mxu0 %v3305
    %4793 = vmatprep.mubr.bf16.mxu0 %v3787
    %4794 = vmatmul.mubr.bf16.gmra.mxu0 %v3773
    %v4795 = vpop.f32.mrf.mxu0
    %v4796 = vadd.f32 %v4756, %v4795
    %v4797 = vpop.f32.mrf.mxu0
    %v4798 = vpop.f32.mrf.mxu0
    %v4799 = vpop.f32.mrf.mxu0
    %4800 = vdwg.mxu0
    %4801 = vmatprep.subr.bf16.mxu0 0
    %4802 = vmatpush1.bf16.msra.mxu0 %v3320
    %4803 = vmatprep.subr.bf16.mxu0 0
    %4804 = vmatpush1.bf16.msra.mxu0 %v3319
    %4805 = vmatprep.subr.bf16.mxu0 0
    %4806 = vmatpush1.bf16.msra.mxu0 %v3318
    %4807 = vmatprep.subr.bf16.mxu0 0
    %4808 = vmatpush1.bf16.msra.mxu0 %v3317
    %4809 = vmatprep.subr.bf16.mxu0 0
    %4810 = vmatpush1.bf16.msra.mxu0 %v3316
    %4811 = vmatprep.subr.bf16.mxu0 0
    %4812 = vmatpush1.bf16.msra.mxu0 %v3315
    %4813 = vmatprep.subr.bf16.mxu0 0
    %4814 = vmatpush1.bf16.msra.mxu0 %v3314
    %4815 = vmatprep.subr.bf16.mxu0 0
    %4816 = vmatpush1.bf16.msra.mxu0 %v3313
    %4817 = vmatprep.subr.bf16.mxu0 0
    %4818 = vmatpush2.bf16.msra.mxu0 %v3328
    %4819 = vmatprep.subr.bf16.mxu0 0
    %4820 = vmatpush2.bf16.msra.mxu0 %v3327
    %4821 = vmatprep.subr.bf16.mxu0 0
    %4822 = vmatpush2.bf16.msra.mxu0 %v3326
    %4823 = vmatprep.subr.bf16.mxu0 0
    %4824 = vmatpush2.bf16.msra.mxu0 %v3325
    %4825 = vmatprep.subr.bf16.mxu0 0
    %4826 = vmatpush2.bf16.msra.mxu0 %v3324
    %4827 = vmatprep.subr.bf16.mxu0 0
    %4828 = vmatpush2.bf16.msra.mxu0 %v3323
    %4829 = vmatprep.subr.bf16.mxu0 0
    %4830 = vmatpush2.bf16.msra.mxu0 %v3322
    %4831 = vmatprep.subr.bf16.mxu0 0
    %4832 = vmatpush2.bf16.msra.mxu0 %v3321
    %4833 = vmatprep.mubr.bf16.mxu0 %v3797
    %4834 = vmatmul.mubr.bf16.gmra.mxu0 %v3795
    %v4835 = vpop.f32.mrf.mxu0
    %v4836 = vadd.f32 %v4796, %v4835
    %v4837 = vpop.f32.mrf.mxu0
    %v4838 = vpop.f32.mrf.mxu0
    %v4839 = vpop.f32.mrf.mxu0
    %4840 = vdwg.mxu0
    %4841 = vmatprep.subr.bf16.mxu0 0
    %4842 = vmatpush1.bf16.msra.mxu0 %v3336
    %4843 = vmatprep.subr.bf16.mxu0 0
    %4844 = vmatpush1.bf16.msra.mxu0 %v3335
    %4845 = vmatprep.subr.bf16.mxu0 0
    %4846 = vmatpush1.bf16.msra.mxu0 %v3334
    %4847 = vmatprep.subr.bf16.mxu0 0
    %4848 = vmatpush1.bf16.msra.mxu0 %v3333
    %4849 = vmatprep.subr.bf16.mxu0 0
    %4850 = vmatpush1.bf16.msra.mxu0 %v3332
    %4851 = vmatprep.subr.bf16.mxu0 0
    %4852 = vmatpush1.bf16.msra.mxu0 %v3331
    %4853 = vmatprep.subr.bf16.mxu0 0
    %4854 = vmatpush1.bf16.msra.mxu0 %v3330
    %4855 = vmatprep.subr.bf16.mxu0 0
    %4856 = vmatpush1.bf16.msra.mxu0 %v3329
    %4857 = vmatprep.subr.bf16.mxu0 0
    %4858 = vmatpush2.bf16.msra.mxu0 %v3344
    %4859 = vmatprep.subr.bf16.mxu0 0
    %4860 = vmatpush2.bf16.msra.mxu0 %v3343
    %4861 = vmatprep.subr.bf16.mxu0 0
    %4862 = vmatpush2.bf16.msra.mxu0 %v3342
    %4863 = vmatprep.subr.bf16.mxu0 0
    %4864 = vmatpush2.bf16.msra.mxu0 %v3341
    %4865 = vmatprep.subr.bf16.mxu0 0
    %4866 = vmatpush2.bf16.msra.mxu0 %v3340
    %4867 = vmatprep.subr.bf16.mxu0 0
    %4868 = vmatpush2.bf16.msra.mxu0 %v3339
    %4869 = vmatprep.subr.bf16.mxu0 0
    %4870 = vmatpush2.bf16.msra.mxu0 %v3338
    %4871 = vmatprep.subr.bf16.mxu0 0
    %4872 = vmatpush2.bf16.msra.mxu0 %v3337
    %4873 = vmatprep.mubr.bf16.mxu0 %v3794
    %4874 = vmatmul.mubr.bf16.gmra.mxu0 %v3780
    %v4875 = vpop.f32.mrf.mxu0
    %v4876 = vadd.f32 %v4836, %v4875
    %v4877 = vpop.f32.mrf.mxu0
    %v4878 = vpop.f32.mrf.mxu0
    %v4879 = vpop.f32.mrf.mxu0
    %4880 = vdwg.mxu0
    %4881 = vmatprep.subr.bf16.mxu0 0
    %4882 = vmatpush1.bf16.msra.mxu0 %v3352
    %4883 = vmatprep.subr.bf16.mxu0 0
    %4884 = vmatpush1.bf16.msra.mxu0 %v3351
    %4885 = vmatprep.subr.bf16.mxu0 0
    %4886 = vmatpush1.bf16.msra.mxu0 %v3350
    %4887 = vmatprep.subr.bf16.mxu0 0
    %4888 = vmatpush1.bf16.msra.mxu0 %v3349
    %4889 = vmatprep.subr.bf16.mxu0 0
    %4890 = vmatpush1.bf16.msra.mxu0 %v3348
    %4891 = vmatprep.subr.bf16.mxu0 0
    %4892 = vmatpush1.bf16.msra.mxu0 %v3347
    %4893 = vmatprep.subr.bf16.mxu0 0
    %4894 = vmatpush1.bf16.msra.mxu0 %v3346
    %4895 = vmatprep.subr.bf16.mxu0 0
    %4896 = vmatpush1.bf16.msra.mxu0 %v3345
    %4897 = vmatprep.subr.bf16.mxu0 0
    %4898 = vmatpush2.bf16.msra.mxu0 %v3360
    %4899 = vmatprep.subr.bf16.mxu0 0
    %4900 = vmatpush2.bf16.msra.mxu0 %v3359
    %4901 = vmatprep.subr.bf16.mxu0 0
    %4902 = vmatpush2.bf16.msra.mxu0 %v3358
    %4903 = vmatprep.subr.bf16.mxu0 0
    %4904 = vmatpush2.bf16.msra.mxu0 %v3357
    %4905 = vmatprep.subr.bf16.mxu0 0
    %4906 = vmatpush2.bf16.msra.mxu0 %v3356
    %4907 = vmatprep.subr.bf16.mxu0 0
    %4908 = vmatpush2.bf16.msra.mxu0 %v3355
    %4909 = vmatprep.subr.bf16.mxu0 0
    %4910 = vmatpush2.bf16.msra.mxu0 %v3354
    %4911 = vmatprep.subr.bf16.mxu0 0
    %4912 = vmatpush2.bf16.msra.mxu0 %v3353
    %4913 = vmatprep.mubr.bf16.mxu0 %v3798
    %4914 = vmatmul.mubr.bf16.gmra.mxu0 %v3796
    %v4915 = vpop.f32.mrf.mxu0
    %v4916 = vadd.f32 %v4876, %v4915
    %v4917 = vpop.f32.mrf.mxu0
    %v4918 = vpop.f32.mrf.mxu0
    %v4919 = vpop.f32.mrf.mxu0
    %4920 = vdwg.mxu0
    %4921 = vmatprep.subr.bf16.mxu0 0
    %4922 = vmatpush1.bf16.msra.mxu0 %v3368
    %4923 = vmatprep.subr.bf16.mxu0 0
    %4924 = vmatpush1.bf16.msra.mxu0 %v3367
    %4925 = vmatprep.subr.bf16.mxu0 0
    %4926 = vmatpush1.bf16.msra.mxu0 %v3366
    %4927 = vmatprep.subr.bf16.mxu0 0
    %4928 = vmatpush1.bf16.msra.mxu0 %v3365
    %4929 = vmatprep.subr.bf16.mxu0 0
    %4930 = vmatpush1.bf16.msra.mxu0 %v3364
    %4931 = vmatprep.subr.bf16.mxu0 0
    %4932 = vmatpush1.bf16.msra.mxu0 %v3363
    %4933 = vmatprep.subr.bf16.mxu0 0
    %4934 = vmatpush1.bf16.msra.mxu0 %v3362
    %4935 = vmatprep.subr.bf16.mxu0 0
    %4936 = vmatpush1.bf16.msra.mxu0 %v3361
    %4937 = vmatprep.subr.bf16.mxu0 0
    %4938 = vmatpush2.bf16.msra.mxu0 %v3376
    %4939 = vmatprep.subr.bf16.mxu0 0
    %4940 = vmatpush2.bf16.msra.mxu0 %v3375
    %4941 = vmatprep.subr.bf16.mxu0 0
    %4942 = vmatpush2.bf16.msra.mxu0 %v3374
    %4943 = vmatprep.subr.bf16.mxu0 0
    %4944 = vmatpush2.bf16.msra.mxu0 %v3373
    %4945 = vmatprep.subr.bf16.mxu0 0
    %4946 = vmatpush2.bf16.msra.mxu0 %v3372
    %4947 = vmatprep.subr.bf16.mxu0 0
    %4948 = vmatpush2.bf16.msra.mxu0 %v3371
    %4949 = vmatprep.subr.bf16.mxu0 0
    %4950 = vmatpush2.bf16.msra.mxu0 %v3370
    %4951 = vmatprep.subr.bf16.mxu0 0
    %4952 = vmatpush2.bf16.msra.mxu0 %v3369
    %4953 = vmatprep.mubr.bf16.mxu0 %v3836
    %4954 = vmatmul.mubr.bf16.gmra.mxu0 %v3822
    %v4955 = vpop.f32.mrf.mxu0
    %v4956 = vadd.f32 %v4916, %v4955
    %v4957 = vpop.f32.mrf.mxu0
    %v4958 = vpop.f32.mrf.mxu0
    %v4959 = vpop.f32.mrf.mxu0
    %4960 = vdwg.mxu0
    %4961 = vmatprep.subr.bf16.mxu0 0
    %4962 = vmatpush1.bf16.msra.mxu0 %v3384
    %4963 = vmatprep.subr.bf16.mxu0 0
    %4964 = vmatpush1.bf16.msra.mxu0 %v3383
    %4965 = vmatprep.subr.bf16.mxu0 0
    %4966 = vmatpush1.bf16.msra.mxu0 %v3382
    %4967 = vmatprep.subr.bf16.mxu0 0
    %4968 = vmatpush1.bf16.msra.mxu0 %v3381
    %4969 = vmatprep.subr.bf16.mxu0 0
    %4970 = vmatpush1.bf16.msra.mxu0 %v3380
    %4971 = vmatprep.subr.bf16.mxu0 0
    %4972 = vmatpush1.bf16.msra.mxu0 %v3379
    %4973 = vmatprep.subr.bf16.mxu0 0
    %4974 = vmatpush1.bf16.msra.mxu0 %v3378
    %4975 = vmatprep.subr.bf16.mxu0 0
    %4976 = vmatpush1.bf16.msra.mxu0 %v3377
    %4977 = vmatprep.subr.bf16.mxu0 0
    %4978 = vmatpush2.bf16.msra.mxu0 %v3392
    %4979 = vmatprep.subr.bf16.mxu0 0
    %4980 = vmatpush2.bf16.msra.mxu0 %v3391
    %4981 = vmatprep.subr.bf16.mxu0 0
    %4982 = vmatpush2.bf16.msra.mxu0 %v3390
    %4983 = vmatprep.subr.bf16.mxu0 0
    %4984 = vmatpush2.bf16.msra.mxu0 %v3389
    %4985 = vmatprep.subr.bf16.mxu0 0
    %4986 = vmatpush2.bf16.msra.mxu0 %v3388
    %4987 = vmatprep.subr.bf16.mxu0 0
    %4988 = vmatpush2.bf16.msra.mxu0 %v3387
    %4989 = vmatprep.subr.bf16.mxu0 0
    %4990 = vmatpush2.bf16.msra.mxu0 %v3386
    %4991 = vmatprep.subr.bf16.mxu0 0
    %4992 = vmatpush2.bf16.msra.mxu0 %v3385
    %4993 = vmatprep.mubr.bf16.mxu0 %v3846
    %4994 = vmatmul.mubr.bf16.gmra.mxu0 %v3844
    %v4995 = vpop.f32.mrf.mxu0
    %v4996 = vadd.f32 %v4956, %v4995
    %v4997 = vpop.f32.mrf.mxu0
    %v4998 = vpop.f32.mrf.mxu0
    %v4999 = vpop.f32.mrf.mxu0
    %5000 = vdwg.mxu0
    %5001 = vmatprep.subr.bf16.mxu0 0
    %5002 = vmatpush1.bf16.msra.mxu0 %v3400
    %5003 = vmatprep.subr.bf16.mxu0 0
    %5004 = vmatpush1.bf16.msra.mxu0 %v3399
    %5005 = vmatprep.subr.bf16.mxu0 0
    %5006 = vmatpush1.bf16.msra.mxu0 %v3398
    %5007 = vmatprep.subr.bf16.mxu0 0
    %5008 = vmatpush1.bf16.msra.mxu0 %v3397
    %5009 = vmatprep.subr.bf16.mxu0 0
    %5010 = vmatpush1.bf16.msra.mxu0 %v3396
    %5011 = vmatprep.subr.bf16.mxu0 0
    %5012 = vmatpush1.bf16.msra.mxu0 %v3395
    %5013 = vmatprep.subr.bf16.mxu0 0
    %5014 = vmatpush1.bf16.msra.mxu0 %v3394
    %5015 = vmatprep.subr.bf16.mxu0 0
    %5016 = vmatpush1.bf16.msra.mxu0 %v3393
    %5017 = vmatprep.subr.bf16.mxu0 0
    %5018 = vmatpush2.bf16.msra.mxu0 %v3408
    %5019 = vmatprep.subr.bf16.mxu0 0
    %5020 = vmatpush2.bf16.msra.mxu0 %v3407
    %5021 = vmatprep.subr.bf16.mxu0 0
    %5022 = vmatpush2.bf16.msra.mxu0 %v3406
    %5023 = vmatprep.subr.bf16.mxu0 0
    %5024 = vmatpush2.bf16.msra.mxu0 %v3405
    %5025 = vmatprep.subr.bf16.mxu0 0
    %5026 = vmatpush2.bf16.msra.mxu0 %v3404
    %5027 = vmatprep.subr.bf16.mxu0 0
    %5028 = vmatpush2.bf16.msra.mxu0 %v3403
    %5029 = vmatprep.subr.bf16.mxu0 0
    %5030 = vmatpush2.bf16.msra.mxu0 %v3402
    %5031 = vmatprep.subr.bf16.mxu0 0
    %5032 = vmatpush2.bf16.msra.mxu0 %v3401
    %5033 = vmatprep.mubr.bf16.mxu0 %v3843
    %5034 = vmatmul.mubr.bf16.gmra.mxu0 %v3829
    %v5035 = vpop.f32.mrf.mxu0
    %v5036 = vadd.f32 %v4996, %v5035
    %v5037 = vpop.f32.mrf.mxu0
    %v5038 = vpop.f32.mrf.mxu0
    %v5039 = vpop.f32.mrf.mxu0
    %5040 = vdwg.mxu0
    %5041 = vmatprep.subr.bf16.mxu0 0
    %5042 = vmatpush1.bf16.msra.mxu0 %v3416
    %5043 = vmatprep.subr.bf16.mxu0 0
    %5044 = vmatpush1.bf16.msra.mxu0 %v3415
    %5045 = vmatprep.subr.bf16.mxu0 0
    %5046 = vmatpush1.bf16.msra.mxu0 %v3414
    %5047 = vmatprep.subr.bf16.mxu0 0
    %5048 = vmatpush1.bf16.msra.mxu0 %v3413
    %5049 = vmatprep.subr.bf16.mxu0 0
    %5050 = vmatpush1.bf16.msra.mxu0 %v3412
    %5051 = vmatprep.subr.bf16.mxu0 0
    %5052 = vmatpush1.bf16.msra.mxu0 %v3411
    %5053 = vmatprep.subr.bf16.mxu0 0
    %5054 = vmatpush1.bf16.msra.mxu0 %v3410
    %5055 = vmatprep.subr.bf16.mxu0 0
    %5056 = vmatpush1.bf16.msra.mxu0 %v3409
    %5057 = vmatprep.subr.bf16.mxu0 0
    %5058 = vmatpush2.bf16.msra.mxu0 %v3424
    %5059 = vmatprep.subr.bf16.mxu0 0
    %5060 = vmatpush2.bf16.msra.mxu0 %v3423
    %5061 = vmatprep.subr.bf16.mxu0 0
    %5062 = vmatpush2.bf16.msra.mxu0 %v3422
    %5063 = vmatprep.subr.bf16.mxu0 0
    %5064 = vmatpush2.bf16.msra.mxu0 %v3421
    %5065 = vmatprep.subr.bf16.mxu0 0
    %5066 = vmatpush2.bf16.msra.mxu0 %v3420
    %5067 = vmatprep.subr.bf16.mxu0 0
    %5068 = vmatpush2.bf16.msra.mxu0 %v3419
    %5069 = vmatprep.subr.bf16.mxu0 0
    %5070 = vmatpush2.bf16.msra.mxu0 %v3418
    %5071 = vmatprep.subr.bf16.mxu0 0
    %5072 = vmatpush2.bf16.msra.mxu0 %v3417
    %5073 = vmatprep.mubr.bf16.mxu0 %v3847
    %5074 = vmatmul.mubr.bf16.gmra.mxu0 %v3845
    %v5075 = vpop.f32.mrf.mxu0
    %v5076 = vadd.f32 %v5036, %v5075
    %v5077 = vpop.f32.mrf.mxu0
    %v5078 = vpop.f32.mrf.mxu0
    %v5079 = vpop.f32.mrf.mxu0
    %5080 = vdwg.mxu0
    %5081 = vmatprep.subr.bf16.mxu0 0
    %5082 = vmatpush1.bf16.msra.mxu0 %v3432
    %5083 = vmatprep.subr.bf16.mxu0 0
    %5084 = vmatpush1.bf16.msra.mxu0 %v3431
    %5085 = vmatprep.subr.bf16.mxu0 0
    %5086 = vmatpush1.bf16.msra.mxu0 %v3430
    %5087 = vmatprep.subr.bf16.mxu0 0
    %5088 = vmatpush1.bf16.msra.mxu0 %v3429
    %5089 = vmatprep.subr.bf16.mxu0 0
    %5090 = vmatpush1.bf16.msra.mxu0 %v3428
    %5091 = vmatprep.subr.bf16.mxu0 0
    %5092 = vmatpush1.bf16.msra.mxu0 %v3427
    %5093 = vmatprep.subr.bf16.mxu0 0
    %5094 = vmatpush1.bf16.msra.mxu0 %v3426
    %5095 = vmatprep.subr.bf16.mxu0 0
    %5096 = vmatpush1.bf16.msra.mxu0 %v3425
    %5097 = vmatprep.subr.bf16.mxu0 0
    %5098 = vmatpush2.bf16.msra.mxu0 %v3440
    %5099 = vmatprep.subr.bf16.mxu0 0
    %5100 = vmatpush2.bf16.msra.mxu0 %v3439
    %5101 = vmatprep.subr.bf16.mxu0 0
    %5102 = vmatpush2.bf16.msra.mxu0 %v3438
    %5103 = vmatprep.subr.bf16.mxu0 0
    %5104 = vmatpush2.bf16.msra.mxu0 %v3437
    %5105 = vmatprep.subr.bf16.mxu0 0
    %5106 = vmatpush2.bf16.msra.mxu0 %v3436
    %5107 = vmatprep.subr.bf16.mxu0 0
    %5108 = vmatpush2.bf16.msra.mxu0 %v3435
    %5109 = vmatprep.subr.bf16.mxu0 0
    %5110 = vmatpush2.bf16.msra.mxu0 %v3434
    %5111 = vmatprep.subr.bf16.mxu0 0
    %5112 = vmatpush2.bf16.msra.mxu0 %v3433
    %5113 = vmatprep.mubr.bf16.mxu0 %v3885
    %5114 = vmatmul.mubr.bf16.gmra.mxu0 %v3871
    %v5115 = vpop.f32.mrf.mxu0
    %v5116 = vadd.f32 %v5076, %v5115
    %v5117 = vpop.f32.mrf.mxu0
    %v5118 = vpop.f32.mrf.mxu0
    %v5119 = vpop.f32.mrf.mxu0
    %5120 = vdwg.mxu0
    %5121 = vmatprep.subr.bf16.mxu0 0
    %5122 = vmatpush1.bf16.msra.mxu0 %v3448
    %5123 = vmatprep.subr.bf16.mxu0 0
    %5124 = vmatpush1.bf16.msra.mxu0 %v3447
    %5125 = vmatprep.subr.bf16.mxu0 0
    %5126 = vmatpush1.bf16.msra.mxu0 %v3446
    %5127 = vmatprep.subr.bf16.mxu0 0
    %5128 = vmatpush1.bf16.msra.mxu0 %v3445
    %5129 = vmatprep.subr.bf16.mxu0 0
    %5130 = vmatpush1.bf16.msra.mxu0 %v3444
    %5131 = vmatprep.subr.bf16.mxu0 0
    %5132 = vmatpush1.bf16.msra.mxu0 %v3443
    %5133 = vmatprep.subr.bf16.mxu0 0
    %5134 = vmatpush1.bf16.msra.mxu0 %v3442
    %5135 = vmatprep.subr.bf16.mxu0 0
    %5136 = vmatpush1.bf16.msra.mxu0 %v3441
    %5137 = vmatprep.subr.bf16.mxu0 0
    %5138 = vmatpush2.bf16.msra.mxu0 %v3456
    %5139 = vmatprep.subr.bf16.mxu0 0
    %5140 = vmatpush2.bf16.msra.mxu0 %v3455
    %5141 = vmatprep.subr.bf16.mxu0 0
    %5142 = vmatpush2.bf16.msra.mxu0 %v3454
    %5143 = vmatprep.subr.bf16.mxu0 0
    %5144 = vmatpush2.bf16.msra.mxu0 %v3453
    %5145 = vmatprep.subr.bf16.mxu0 0
    %5146 = vmatpush2.bf16.msra.mxu0 %v3452
    %5147 = vmatprep.subr.bf16.mxu0 0
    %5148 = vmatpush2.bf16.msra.mxu0 %v3451
    %5149 = vmatprep.subr.bf16.mxu0 0
    %5150 = vmatpush2.bf16.msra.mxu0 %v3450
    %5151 = vmatprep.subr.bf16.mxu0 0
    %5152 = vmatpush2.bf16.msra.mxu0 %v3449
    %5153 = vmatprep.mubr.bf16.mxu0 %v3895
    %5154 = vmatmul.mubr.bf16.gmra.mxu0 %v3893
    %v5155 = vpop.f32.mrf.mxu0
    %v5156 = vadd.f32 %v5116, %v5155
    %v5157 = vpop.f32.mrf.mxu0
    %v5158 = vpop.f32.mrf.mxu0
    %v5159 = vpop.f32.mrf.mxu0
    %5160 = vdwg.mxu0
    %5161 = vmatprep.subr.bf16.mxu0 0
    %5162 = vmatpush1.bf16.msra.mxu0 %v3464
    %5163 = vmatprep.subr.bf16.mxu0 0
    %5164 = vmatpush1.bf16.msra.mxu0 %v3463
    %5165 = vmatprep.subr.bf16.mxu0 0
    %5166 = vmatpush1.bf16.msra.mxu0 %v3462
    %5167 = vmatprep.subr.bf16.mxu0 0
    %5168 = vmatpush1.bf16.msra.mxu0 %v3461
    %5169 = vmatprep.subr.bf16.mxu0 0
    %5170 = vmatpush1.bf16.msra.mxu0 %v3460
    %5171 = vmatprep.subr.bf16.mxu0 0
    %5172 = vmatpush1.bf16.msra.mxu0 %v3459
    %5173 = vmatprep.subr.bf16.mxu0 0
    %5174 = vmatpush1.bf16.msra.mxu0 %v3458
    %5175 = vmatprep.subr.bf16.mxu0 0
    %5176 = vmatpush1.bf16.msra.mxu0 %v3457
    %5177 = vmatprep.subr.bf16.mxu0 0
    %5178 = vmatpush2.bf16.msra.mxu0 %v3472
    %5179 = vmatprep.subr.bf16.mxu0 0
    %5180 = vmatpush2.bf16.msra.mxu0 %v3471
    %5181 = vmatprep.subr.bf16.mxu0 0
    %5182 = vmatpush2.bf16.msra.mxu0 %v3470
    %5183 = vmatprep.subr.bf16.mxu0 0
    %5184 = vmatpush2.bf16.msra.mxu0 %v3469
    %5185 = vmatprep.subr.bf16.mxu0 0
    %5186 = vmatpush2.bf16.msra.mxu0 %v3468
    %5187 = vmatprep.subr.bf16.mxu0 0
    %5188 = vmatpush2.bf16.msra.mxu0 %v3467
    %5189 = vmatprep.subr.bf16.mxu0 0
    %5190 = vmatpush2.bf16.msra.mxu0 %v3466
    %5191 = vmatprep.subr.bf16.mxu0 0
    %5192 = vmatpush2.bf16.msra.mxu0 %v3465
    %5193 = vmatprep.mubr.bf16.mxu0 %v3892
    %5194 = vmatmul.mubr.bf16.gmra.mxu0 %v3878
    %v5195 = vpop.f32.mrf.mxu0
    %v5196 = vadd.f32 %v5156, %v5195
    %v5197 = vpop.f32.mrf.mxu0
    %v5198 = vpop.f32.mrf.mxu0
    %v5199 = vpop.f32.mrf.mxu0
    %5200 = vdwg.mxu0
    %5201 = vmatprep.subr.bf16.mxu0 0
    %5202 = vmatpush1.bf16.msra.mxu0 %v3480
    %5203 = vmatprep.subr.bf16.mxu0 0
    %5204 = vmatpush1.bf16.msra.mxu0 %v3479
    %5205 = vmatprep.subr.bf16.mxu0 0
    %5206 = vmatpush1.bf16.msra.mxu0 %v3478
    %5207 = vmatprep.subr.bf16.mxu0 0
    %5208 = vmatpush1.bf16.msra.mxu0 %v3477
    %5209 = vmatprep.subr.bf16.mxu0 0
    %5210 = vmatpush1.bf16.msra.mxu0 %v3476
    %5211 = vmatprep.subr.bf16.mxu0 0
    %5212 = vmatpush1.bf16.msra.mxu0 %v3475
    %5213 = vmatprep.subr.bf16.mxu0 0
    %5214 = vmatpush1.bf16.msra.mxu0 %v3474
    %5215 = vmatprep.subr.bf16.mxu0 0
    %5216 = vmatpush1.bf16.msra.mxu0 %v3473
    %5217 = vmatprep.subr.bf16.mxu0 0
    %5218 = vmatpush2.bf16.msra.mxu0 %v3488
    %5219 = vmatprep.subr.bf16.mxu0 0
    %5220 = vmatpush2.bf16.msra.mxu0 %v3487
    %5221 = vmatprep.subr.bf16.mxu0 0
    %5222 = vmatpush2.bf16.msra.mxu0 %v3486
    %5223 = vmatprep.subr.bf16.mxu0 0
    %5224 = vmatpush2.bf16.msra.mxu0 %v3485
    %5225 = vmatprep.subr.bf16.mxu0 0
    %5226 = vmatpush2.bf16.msra.mxu0 %v3484
    %5227 = vmatprep.subr.bf16.mxu0 0
    %5228 = vmatpush2.bf16.msra.mxu0 %v3483
    %5229 = vmatprep.subr.bf16.mxu0 0
    %5230 = vmatpush2.bf16.msra.mxu0 %v3482
    %5231 = vmatprep.subr.bf16.mxu0 0
    %5232 = vmatpush2.bf16.msra.mxu0 %v3481
    %5233 = vmatprep.mubr.bf16.mxu0 %v3896
    %5234 = vmatmul.mubr.bf16.gmra.mxu0 %v3894
    %v5235 = vpop.f32.mrf.mxu0
    %v5236 = vadd.f32 %v5196, %v5235
    %v5237 = vpop.f32.mrf.mxu0
    %v5238 = vpop.f32.mrf.mxu0
    %v5239 = vpop.f32.mrf.mxu0
    %5240 = vdwg.mxu0
    %v5241 = vld [vmem:[#allocation11] sm:$0x1]
    %v5243 = vlaneseq
    %v5244 = vshrl.u32 %v5243, 7
    %v5245 = vsub.s32 0, %v5244
    %v5246 = vrot.slane %v5241, %v5245
    %v5248 = vmul.f32 %v2716, %v5246
    %v5249 = vld [vmem:[#allocation12] sm:$0x1]
    %v5251 = vlaneseq
    %v5252 = vshrl.u32 %v5251, 7
    %v5253 = vsub.s32 0, %v5252
    %v5254 = vrot.slane %v5249, %v5253
    %v5256 = vadd.f32 %v5248, %v5254
    %vm5257 = vcmp.ge.f32.partialorder %v5256, 0.0
    %v5258 = vstv %s200
    %v5259 = vmul.f32 %v5258, %v5256
    %v5260 = vsel %vm5257, %v5256, %v5259
    %v5261 = vld [vmem:[#allocation11 + $0x1] sm:$0x1]
    %v5263 = vlaneseq
    %v5264 = vshrl.u32 %v5263, 7
    %v5265 = vsub.s32 0, %v5264
    %v5266 = vrot.slane %v5261, %v5265
    %v5268 = vmul.f32 %v5236, %v5266
    %v5269 = vld [vmem:[#allocation12 + $0x1] sm:$0x1]
    %v5271 = vlaneseq
    %v5272 = vshrl.u32 %v5271, 7
    %v5273 = vsub.s32 0, %v5272
    %v5274 = vrot.slane %v5269, %v5273
    %v5276 = vadd.f32 %v5268, %v5274
    %vm5277 = vcmp.ge.f32.partialorder %v5276, 0.0
    %v5278 = vmul.f32 %v5258, %v5276
    %v5279 = vsel %vm5277, %v5276, %v5278
    %v5280 = vld [vmem:[#allocation14] sm:$0xff]
    %v5281 = vld [vmem:[#allocation14 + $0x8] sm:$0xff]
    %v5282 = vld [vmem:[#allocation14 + $0x10] sm:$0xff]
    %v5283 = vld [vmem:[#allocation14 + $0x18] sm:$0xff]
    %v5284 = vld [vmem:[#allocation14 + $0x20] sm:$0xff]
    %v5285 = vld [vmem:[#allocation14 + $0x28] sm:$0xff]
    %v5286 = vld [vmem:[#allocation14 + $0x30] sm:$0xff]
    %v5287 = vld [vmem:[#allocation14 + $0x38] sm:$0xff]
    %v5288 = vld [vmem:[#allocation14 + $0x40] sm:$0xff]
    %v5289 = vld [vmem:[#allocation14 + $0x48] sm:$0xff]
    %v5290 = vld [vmem:[#allocation14 + $0x50] sm:$0xff]
    %v5291 = vld [vmem:[#allocation14 + $0x58] sm:$0xff]
    %v5292 = vld [vmem:[#allocation14 + $0x60] sm:$0xff]
    %v5293 = vld [vmem:[#allocation14 + $0x68] sm:$0xff]
    %v5294 = vld [vmem:[#allocation14 + $0x70] sm:$0xff]
    %v5295 = vld [vmem:[#allocation14 + $0x78] sm:$0xff]
    %v5296 = vld [vmem:[#allocation15] sm:$0xff]
    %v5297 = vld [vmem:[#allocation15 + $0x8] sm:$0xff]
    %v5298 = vld [vmem:[#allocation15 + $0x10] sm:$0xff]
    %v5299 = vld [vmem:[#allocation15 + $0x18] sm:$0xff]
    %v5300 = vld [vmem:[#allocation15 + $0x20] sm:$0xff]
    %v5301 = vld [vmem:[#allocation15 + $0x28] sm:$0xff]
    %v5302 = vld [vmem:[#allocation15 + $0x30] sm:$0xff]
    %v5303 = vld [vmem:[#allocation15 + $0x38] sm:$0xff]
    %v5304 = vld [vmem:[#allocation15 + $0x40] sm:$0xff]
    %v5305 = vld [vmem:[#allocation15 + $0x48] sm:$0xff]
    %v5306 = vld [vmem:[#allocation15 + $0x50] sm:$0xff]
    %v5307 = vld [vmem:[#allocation15 + $0x58] sm:$0xff]
    %v5308 = vld [vmem:[#allocation15 + $0x60] sm:$0xff]
    %v5309 = vld [vmem:[#allocation15 + $0x68] sm:$0xff]
    %v5310 = vld [vmem:[#allocation15 + $0x70] sm:$0xff]
    %v5311 = vld [vmem:[#allocation15 + $0x78] sm:$0xff]
    %5312 = vmatprep.subr.mxu0 0.0
    %5313 = vmatpush1.msra.mxu0 %v5311
    %5314 = vmatprep.subr.mxu0 0.0
    %5315 = vmatpush1.msra.mxu0 %v5310
    %5316 = vmatprep.subr.mxu0 0.0
    %5317 = vmatpush1.msra.mxu0 %v5309
    %5318 = vmatprep.subr.mxu0 0.0
    %5319 = vmatpush1.msra.mxu0 %v5308
    %5320 = vmatprep.subr.mxu0 0.0
    %5321 = vmatpush1.msra.mxu0 %v5307
    %5322 = vmatprep.subr.mxu0 0.0
    %5323 = vmatpush1.msra.mxu0 %v5306
    %5324 = vmatprep.subr.mxu0 0.0
    %5325 = vmatpush1.msra.mxu0 %v5305
    %5326 = vmatprep.subr.mxu0 0.0
    %5327 = vmatpush1.msra.mxu0 %v5304
    %5328 = vmatprep.subr.mxu0 0.0
    %5329 = vmatpush1.msra.mxu0 %v5303
    %5330 = vmatprep.subr.mxu0 0.0
    %5331 = vmatpush1.msra.mxu0 %v5302
    %5332 = vmatprep.subr.mxu0 0.0
    %5333 = vmatpush1.msra.mxu0 %v5301
    %5334 = vmatprep.subr.mxu0 0.0
    %5335 = vmatpush1.msra.mxu0 %v5300
    %5336 = vmatprep.subr.mxu0 0.0
    %5337 = vmatpush1.msra.mxu0 %v5299
    %5338 = vmatprep.subr.mxu0 0.0
    %5339 = vmatpush1.msra.mxu0 %v5298
    %5340 = vmatprep.subr.mxu0 0.0
    %5341 = vmatpush1.msra.mxu0 %v5297
    %5342 = vmatprep.subr.mxu0 0.0
    %5343 = vmatpush1.msra.mxu0 %v5296
    %5344 = vmatprep.subr.mxu0 0.0
    %5345 = vmatpush2.msra.mxu0 0.0
    %5346 = vmatprep.subr.mxu0 0.0
    %5347 = vmatpush2.msra.mxu0 0.0
    %5348 = vmatprep.subr.mxu0 0.0
    %5349 = vmatpush2.msra.mxu0 0.0
    %5350 = vmatprep.subr.mxu0 0.0
    %5351 = vmatpush2.msra.mxu0 0.0
    %5352 = vmatprep.subr.mxu0 0.0
    %5353 = vmatpush2.msra.mxu0 0.0
    %5354 = vmatprep.subr.mxu0 0.0
    %5355 = vmatpush2.msra.mxu0 0.0
    %5356 = vmatprep.subr.mxu0 0.0
    %5357 = vmatpush2.msra.mxu0 0.0
    %5358 = vmatprep.subr.mxu0 0.0
    %5359 = vmatpush2.msra.mxu0 0.0
    %5360 = vmatprep.subr.mxu0 0.0
    %5361 = vmatpush2.msra.mxu0 0.0
    %5362 = vmatprep.subr.mxu0 0.0
    %5363 = vmatpush2.msra.mxu0 0.0
    %5364 = vmatprep.subr.mxu0 0.0
    %5365 = vmatpush2.msra.mxu0 0.0
    %5366 = vmatprep.subr.mxu0 0.0
    %5367 = vmatpush2.msra.mxu0 0.0
    %5368 = vmatprep.subr.mxu0 0.0
    %5369 = vmatpush2.msra.mxu0 0.0
    %5370 = vmatprep.subr.mxu0 0.0
    %5371 = vmatpush2.msra.mxu0 0.0
    %5372 = vmatprep.subr.mxu0 0.0
    %5373 = vmatpush2.msra.mxu0 0.0
    %5374 = vmatprep.subr.mxu0 0.0
    %5375 = vmatpush2.msra.mxu0 0.0
    %5376 = vmatprep.mubr.f32.mxu0 0.0
    %5377 = vmatmul.mubr.f32.gmra.mxu0 %v5279
    %v5378 = vpop.f32.mrf.mxu0
    %v5379 = vadd.f32 0.0, %v5378
    %v5380 = vpop.f32.mrf.mxu0
    %5381 = vdwg.mxu0
    %5382 = vmatprep.subr.mxu0 0.0
    %5383 = vmatpush1.msra.mxu0 %v5295
    %5384 = vmatprep.subr.mxu0 0.0
    %5385 = vmatpush1.msra.mxu0 %v5294
    %5386 = vmatprep.subr.mxu0 0.0
    %5387 = vmatpush1.msra.mxu0 %v5293
    %5388 = vmatprep.subr.mxu0 0.0
    %5389 = vmatpush1.msra.mxu0 %v5292
    %5390 = vmatprep.subr.mxu0 0.0
    %5391 = vmatpush1.msra.mxu0 %v5291
    %5392 = vmatprep.subr.mxu0 0.0
    %5393 = vmatpush1.msra.mxu0 %v5290
    %5394 = vmatprep.subr.mxu0 0.0
    %5395 = vmatpush1.msra.mxu0 %v5289
    %5396 = vmatprep.subr.mxu0 0.0
    %5397 = vmatpush1.msra.mxu0 %v5288
    %5398 = vmatprep.subr.mxu0 0.0
    %5399 = vmatpush1.msra.mxu0 %v5287
    %5400 = vmatprep.subr.mxu0 0.0
    %5401 = vmatpush1.msra.mxu0 %v5286
    %5402 = vmatprep.subr.mxu0 0.0
    %5403 = vmatpush1.msra.mxu0 %v5285
    %5404 = vmatprep.subr.mxu0 0.0
    %5405 = vmatpush1.msra.mxu0 %v5284
    %5406 = vmatprep.subr.mxu0 0.0
    %5407 = vmatpush1.msra.mxu0 %v5283
    %5408 = vmatprep.subr.mxu0 0.0
    %5409 = vmatpush1.msra.mxu0 %v5282
    %5410 = vmatprep.subr.mxu0 0.0
    %5411 = vmatpush1.msra.mxu0 %v5281
    %5412 = vmatprep.subr.mxu0 0.0
    %5413 = vmatpush1.msra.mxu0 %v5280
    %5414 = vmatprep.subr.mxu0 0.0
    %5415 = vmatpush2.msra.mxu0 0.0
    %5416 = vmatprep.subr.mxu0 0.0
    %5417 = vmatpush2.msra.mxu0 0.0
    %5418 = vmatprep.subr.mxu0 0.0
    %5419 = vmatpush2.msra.mxu0 0.0
    %5420 = vmatprep.subr.mxu0 0.0
    %5421 = vmatpush2.msra.mxu0 0.0
    %5422 = vmatprep.subr.mxu0 0.0
    %5423 = vmatpush2.msra.mxu0 0.0
    %5424 = vmatprep.subr.mxu0 0.0
    %5425 = vmatpush2.msra.mxu0 0.0
    %5426 = vmatprep.subr.mxu0 0.0
    %5427 = vmatpush2.msra.mxu0 0.0
    %5428 = vmatprep.subr.mxu0 0.0
    %5429 = vmatpush2.msra.mxu0 0.0
    %5430 = vmatprep.subr.mxu0 0.0
    %5431 = vmatpush2.msra.mxu0 0.0
    %5432 = vmatprep.subr.mxu0 0.0
    %5433 = vmatpush2.msra.mxu0 0.0
    %5434 = vmatprep.subr.mxu0 0.0
    %5435 = vmatpush2.msra.mxu0 0.0
    %5436 = vmatprep.subr.mxu0 0.0
    %5437 = vmatpush2.msra.mxu0 0.0
    %5438 = vmatprep.subr.mxu0 0.0
    %5439 = vmatpush2.msra.mxu0 0.0
    %5440 = vmatprep.subr.mxu0 0.0
    %5441 = vmatpush2.msra.mxu0 0.0
    %5442 = vmatprep.subr.mxu0 0.0
    %5443 = vmatpush2.msra.mxu0 0.0
    %5444 = vmatprep.subr.mxu0 0.0
    %5445 = vmatpush2.msra.mxu0 0.0
    %5446 = vmatprep.mubr.f32.mxu0 0.0
    %5447 = vmatmul.mubr.f32.gmra.mxu0 %v5260
    %v5448 = vpop.f32.mrf.mxu0
    %v5449 = vadd.f32 %v5379, %v5448
    %v5450 = vpop.f32.mrf.mxu0
    %5451 = vdwg.mxu0
    %v5452 = vld [vmem:[#allocation8] sm:$0x3]
    %v5453 = vld [vmem:[#allocation17] sm:$0xff]
    %v5454 = vld [vmem:[#allocation17 + $0x8] sm:$0xff]
    %vm5455 = vcmask 130048
    %v5457 = vsel %vm5455, %v5452, 0
    %5459 = vmatprep.subr.mxu0 0.0
    %5460 = vmatpush1.msra.mxu0 0.0
    %5461 = vmatprep.subr.mxu0 0.0
    %5462 = vmatpush1.msra.mxu0 0.0
    %5463 = vmatprep.subr.mxu0 0.0
    %5464 = vmatpush1.msra.mxu0 0.0
    %5465 = vmatprep.subr.mxu0 0.0
    %5466 = vmatpush1.msra.mxu0 0.0
    %5467 = vmatprep.subr.mxu0 0.0
    %5468 = vmatpush1.msra.mxu0 0.0
    %5469 = vmatprep.subr.mxu0 0.0
    %5470 = vmatpush1.msra.mxu0 0.0
    %5471 = vmatprep.subr.mxu0 0.0
    %5472 = vmatpush1.msra.mxu0 0.0
    %5473 = vmatprep.subr.mxu0 0.0
    %5474 = vmatpush1.msra.mxu0 0.0
    %5475 = vmatprep.subr.mxu0 0.0
    %5476 = vmatpush1.msra.mxu0 0.0
    %5477 = vmatprep.subr.mxu0 0.0
    %5478 = vmatpush1.msra.mxu0 0.0
    %5479 = vmatprep.subr.mxu0 0.0
    %5480 = vmatpush1.msra.mxu0 0.0
    %5481 = vmatprep.subr.mxu0 0.0
    %5482 = vmatpush1.msra.mxu0 0.0
    %5483 = vmatprep.subr.mxu0 0.0
    %5484 = vmatpush1.msra.mxu0 0.0
    %5485 = vmatprep.subr.mxu0 0.0
    %5486 = vmatpush1.msra.mxu0 0.0
    %5487 = vmatprep.subr.mxu0 0.0
    %5488 = vmatpush1.msra.mxu0 %v5454
    %5489 = vmatprep.subr.mxu0 0.0
    %5490 = vmatpush1.msra.mxu0 %v5453
    %5491 = vmatprep.subr.mxu0 0.0
    %5492 = vmatpush2.msra.mxu0 0.0
    %5493 = vmatprep.subr.mxu0 0.0
    %5494 = vmatpush2.msra.mxu0 0.0
    %5495 = vmatprep.subr.mxu0 0.0
    %5496 = vmatpush2.msra.mxu0 0.0
    %5497 = vmatprep.subr.mxu0 0.0
    %5498 = vmatpush2.msra.mxu0 0.0
    %5499 = vmatprep.subr.mxu0 0.0
    %5500 = vmatpush2.msra.mxu0 0.0
    %5501 = vmatprep.subr.mxu0 0.0
    %5502 = vmatpush2.msra.mxu0 0.0
    %5503 = vmatprep.subr.mxu0 0.0
    %5504 = vmatpush2.msra.mxu0 0.0
    %5505 = vmatprep.subr.mxu0 0.0
    %5506 = vmatpush2.msra.mxu0 0.0
    %5507 = vmatprep.subr.mxu0 0.0
    %5508 = vmatpush2.msra.mxu0 0.0
    %5509 = vmatprep.subr.mxu0 0.0
    %5510 = vmatpush2.msra.mxu0 0.0
    %5511 = vmatprep.subr.mxu0 0.0
    %5512 = vmatpush2.msra.mxu0 0.0
    %5513 = vmatprep.subr.mxu0 0.0
    %5514 = vmatpush2.msra.mxu0 0.0
    %5515 = vmatprep.subr.mxu0 0.0
    %5516 = vmatpush2.msra.mxu0 0.0
    %5517 = vmatprep.subr.mxu0 0.0
    %5518 = vmatpush2.msra.mxu0 0.0
    %5519 = vmatprep.subr.mxu0 0.0
    %5520 = vmatpush2.msra.mxu0 0.0
    %5521 = vmatprep.subr.mxu0 0.0
    %5522 = vmatpush2.msra.mxu0 0.0
    %5523 = vmatprep.mubr.f32.mxu0 0.0
    %5524 = vmatmul.mubr.f32.gmra.mxu0 %v5457
    %v5525 = vpop.f32.mrf.mxu0
    %v5526 = vadd.f32 0.0, %v5525
    %v5527 = vpop.f32.mrf.mxu0
    %5528 = vdwg.mxu0
    %v5529 = vadd.f32 %v5449, %v5526
    %v5530 = vld [vmem:[#allocation18] sm:$0x1]
    %v5532 = vlaneseq
    %v5533 = vshrl.u32 %v5532, 7
    %v5534 = vsub.s32 0, %v5533
    %v5535 = vrot.slane %v5530, %v5534
    %v5537 = vadd.f32 %v5529, %v5535
    %vm5538 = vcmp.ge.f32.partialorder %v5537, 0.0
    %v5539 = vmul.f32 %v5258, %v5537
    %v5540 = vsel %vm5538, %v5537, %v5539
    %v5541 = vld [vmem:[%s10] sm:$0xff]
    %v5542 = vld [vmem:[%s10 + $0x8] sm:$0xff]
    %v5543 = vld [vmem:[%s10 + $0x10] sm:$0xff]
    %v5544 = vld [vmem:[%s10 + $0x18] sm:$0xff]
    %v5545 = vld [vmem:[%s10 + $0x20] sm:$0xff]
    %v5546 = vld [vmem:[%s10 + $0x28] sm:$0xff]
    %v5547 = vld [vmem:[%s10 + $0x30] sm:$0xff]
    %v5548 = vld [vmem:[%s10 + $0x38] sm:$0xff]
    %v5549 = vld [vmem:[%s10 + $0x40] sm:$0xff]
    %v5550 = vld [vmem:[%s10 + $0x48] sm:$0xff]
    %v5551 = vld [vmem:[%s10 + $0x50] sm:$0xff]
    %v5552 = vld [vmem:[%s10 + $0x58] sm:$0xff]
    %v5553 = vld [vmem:[%s10 + $0x60] sm:$0xff]
    %v5554 = vld [vmem:[%s10 + $0x68] sm:$0xff]
    %v5555 = vld [vmem:[%s10 + $0x70] sm:$0xff]
    %v5556 = vld [vmem:[%s10 + $0x78] sm:$0xff]
    %v5557 = vld [vmem:[#allocation20] sm:$0x1]
    %v5559 = vlaneseq
    %v5560 = vshrl.u32 %v5559, 7
    %v5561 = vsub.s32 0, %v5560
    %v5562 = vrot.slane %v5557, %v5561
    %5564 = vmatprep.subr.mxu0 0.0
    %5565 = vmatpush1.msra.mxu0 %v5556
    %5566 = vmatprep.subr.mxu0 0.0
    %5567 = vmatpush1.msra.mxu0 %v5555
    %5568 = vmatprep.subr.mxu0 0.0
    %5569 = vmatpush1.msra.mxu0 %v5554
    %5570 = vmatprep.subr.mxu0 0.0
    %5571 = vmatpush1.msra.mxu0 %v5553
    %5572 = vmatprep.subr.mxu0 0.0
    %5573 = vmatpush1.msra.mxu0 %v5552
    %5574 = vmatprep.subr.mxu0 0.0
    %5575 = vmatpush1.msra.mxu0 %v5551
    %5576 = vmatprep.subr.mxu0 0.0
    %5577 = vmatpush1.msra.mxu0 %v5550
    %5578 = vmatprep.subr.mxu0 0.0
    %5579 = vmatpush1.msra.mxu0 %v5549
    %5580 = vmatprep.subr.mxu0 0.0
    %5581 = vmatpush1.msra.mxu0 %v5548
    %5582 = vmatprep.subr.mxu0 0.0
    %5583 = vmatpush1.msra.mxu0 %v5547
    %5584 = vmatprep.subr.mxu0 0.0
    %5585 = vmatpush1.msra.mxu0 %v5546
    %5586 = vmatprep.subr.mxu0 0.0
    %5587 = vmatpush1.msra.mxu0 %v5545
    %5588 = vmatprep.subr.mxu0 0.0
    %5589 = vmatpush1.msra.mxu0 %v5544
    %5590 = vmatprep.subr.mxu0 0.0
    %5591 = vmatpush1.msra.mxu0 %v5543
    %5592 = vmatprep.subr.mxu0 0.0
    %5593 = vmatpush1.msra.mxu0 %v5542
    %5594 = vmatprep.subr.mxu0 0.0
    %5595 = vmatpush1.msra.mxu0 %v5541
    %5596 = vmatprep.subr.mxu0 0.0
    %5597 = vmatpush2.msra.mxu0 0.0
    %5598 = vmatprep.subr.mxu0 0.0
    %5599 = vmatpush2.msra.mxu0 0.0
    %5600 = vmatprep.subr.mxu0 0.0
    %5601 = vmatpush2.msra.mxu0 0.0
    %5602 = vmatprep.subr.mxu0 0.0
    %5603 = vmatpush2.msra.mxu0 0.0
    %5604 = vmatprep.subr.mxu0 0.0
    %5605 = vmatpush2.msra.mxu0 0.0
    %5606 = vmatprep.subr.mxu0 0.0
    %5607 = vmatpush2.msra.mxu0 0.0
    %5608 = vmatprep.subr.mxu0 0.0
    %5609 = vmatpush2.msra.mxu0 0.0
    %5610 = vmatprep.subr.mxu0 0.0
    %5611 = vmatpush2.msra.mxu0 0.0
    %5612 = vmatprep.subr.mxu0 0.0
    %5613 = vmatpush2.msra.mxu0 0.0
    %5614 = vmatprep.subr.mxu0 0.0
    %5615 = vmatpush2.msra.mxu0 0.0
    %5616 = vmatprep.subr.mxu0 0.0
    %5617 = vmatpush2.msra.mxu0 0.0
    %5618 = vmatprep.subr.mxu0 0.0
    %5619 = vmatpush2.msra.mxu0 0.0
    %5620 = vmatprep.subr.mxu0 0.0
    %5621 = vmatpush2.msra.mxu0 0.0
    %5622 = vmatprep.subr.mxu0 0.0
    %5623 = vmatpush2.msra.mxu0 0.0
    %5624 = vmatprep.subr.mxu0 0.0
    %5625 = vmatpush2.msra.mxu0 0.0
    %5626 = vmatprep.subr.mxu0 0.0
    %5627 = vmatpush2.msra.mxu0 0.0
    %5628 = vmatprep.mubr.f32.mxu0 0.0
    %5629 = vmatmul.mubr.f32.gmra.mxu0 %v5540
    %v5630 = vpop.f32.mrf.mxu0
    %v5631 = vadd.f32 %v5562, %v5630
    %v5632 = vpop.f32.mrf.mxu0
    %5633 = vdwg.mxu0
    %vm5634 = vcmp.ge.f32.partialorder %v5631, 0.0
    %v5635 = vmul.f32 %v5258, %v5631
    %v5636 = vsel %vm5634, %v5631, %v5635
    %v5637 = vld [vmem:[%s12] sm:$0xff]
    %v5638 = vld [vmem:[%s12 + $0x8] sm:$0xff]
    %v5639 = vld [vmem:[%s12 + $0x10] sm:$0xff]
    %v5640 = vld [vmem:[%s12 + $0x18] sm:$0xff]
    %v5641 = vld [vmem:[#allocation21] sm:$0x1]
    %v5643 = vlaneseq
    %v5644 = vshrl.u32 %v5643, 7
    %v5645 = vsub.s32 0, %v5644
    %v5646 = vrot.slane %v5641, %v5645
    %vm5648 = vcmask 261120
    %v5650 = vsel %vm5648, %v5636, 0
    %5652 = vmatprep.subr.mxu0 0.0
    %5653 = vmatpush1.msra.mxu0 0.0
    %5654 = vmatprep.subr.mxu0 0.0
    %5655 = vmatpush1.msra.mxu0 0.0
    %5656 = vmatprep.subr.mxu0 0.0
    %5657 = vmatpush1.msra.mxu0 0.0
    %5658 = vmatprep.subr.mxu0 0.0
    %5659 = vmatpush1.msra.mxu0 0.0
    %5660 = vmatprep.subr.mxu0 0.0
    %5661 = vmatpush1.msra.mxu0 0.0
    %5662 = vmatprep.subr.mxu0 0.0
    %5663 = vmatpush1.msra.mxu0 0.0
    %5664 = vmatprep.subr.mxu0 0.0
    %5665 = vmatpush1.msra.mxu0 0.0
    %5666 = vmatprep.subr.mxu0 0.0
    %5667 = vmatpush1.msra.mxu0 0.0
    %5668 = vmatprep.subr.mxu0 0.0
    %5669 = vmatpush1.msra.mxu0 0.0
    %5670 = vmatprep.subr.mxu0 0.0
    %5671 = vmatpush1.msra.mxu0 0.0
    %5672 = vmatprep.subr.mxu0 0.0
    %5673 = vmatpush1.msra.mxu0 0.0
    %5674 = vmatprep.subr.mxu0 0.0
    %5675 = vmatpush1.msra.mxu0 0.0
    %5676 = vmatprep.subr.mxu0 0.0
    %5677 = vmatpush1.msra.mxu0 %v5640
    %5678 = vmatprep.subr.mxu0 0.0
    %5679 = vmatpush1.msra.mxu0 %v5639
    %5680 = vmatprep.subr.mxu0 0.0
    %5681 = vmatpush1.msra.mxu0 %v5638
    %5682 = vmatprep.subr.mxu0 0.0
    %5683 = vmatpush1.msra.mxu0 %v5637
    %5684 = vmatprep.subr.mxu0 0.0
    %5685 = vmatpush2.msra.mxu0 0.0
    %5686 = vmatprep.subr.mxu0 0.0
    %5687 = vmatpush2.msra.mxu0 0.0
    %5688 = vmatprep.subr.mxu0 0.0
    %5689 = vmatpush2.msra.mxu0 0.0
    %5690 = vmatprep.subr.mxu0 0.0
    %5691 = vmatpush2.msra.mxu0 0.0
    %5692 = vmatprep.subr.mxu0 0.0
    %5693 = vmatpush2.msra.mxu0 0.0
    %5694 = vmatprep.subr.mxu0 0.0
    %5695 = vmatpush2.msra.mxu0 0.0
    %5696 = vmatprep.subr.mxu0 0.0
    %5697 = vmatpush2.msra.mxu0 0.0
    %5698 = vmatprep.subr.mxu0 0.0
    %5699 = vmatpush2.msra.mxu0 0.0
    %5700 = vmatprep.subr.mxu0 0.0
    %5701 = vmatpush2.msra.mxu0 0.0
    %5702 = vmatprep.subr.mxu0 0.0
    %5703 = vmatpush2.msra.mxu0 0.0
    %5704 = vmatprep.subr.mxu0 0.0
    %5705 = vmatpush2.msra.mxu0 0.0
    %5706 = vmatprep.subr.mxu0 0.0
    %5707 = vmatpush2.msra.mxu0 0.0
    %5708 = vmatprep.subr.mxu0 0.0
    %5709 = vmatpush2.msra.mxu0 0.0
    %5710 = vmatprep.subr.mxu0 0.0
    %5711 = vmatpush2.msra.mxu0 0.0
    %5712 = vmatprep.subr.mxu0 0.0
    %5713 = vmatpush2.msra.mxu0 0.0
    %5714 = vmatprep.subr.mxu0 0.0
    %5715 = vmatpush2.msra.mxu0 0.0
    %5716 = vmatprep.mubr.f32.mxu0 0.0
    %5717 = vmatmul.mubr.f32.gmra.mxu0 %v5650
    %v5718 = vpop.f32.mrf.mxu0
    %v5719 = vadd.f32 %v5646, %v5718
    %v5720 = vpop.f32.mrf.mxu0
    %5721 = vdwg.mxu0
    %v5722 = vtanh.pop %v5719
    %vm5723 = vcmask 58368
    %5724 = vst.msk [vmem:[#allocation23] sm:$0x3] %vm5723, %v5722
    // Predicated region
    $region110: #{tpu_custom_call.1} parent=1 // pred_check
      _
    $region111: #{tpu_custom_call.1} parent=1 // pred_check_branch
      %5726 = sbr.rel (0) target = $region113
    $region112: #{tpu_custom_call.1} parent=1 // pred_region
      %s5728 = ssub.s32 32, 32
      %5729 = vsyncadd [#allocation5], %s5728
      %s5731 = sshll.u32 [#allocation23], 4
      %s5732 = int_to_ptr.vmem [resolvable:$true] %s5731
      %5734 = dma.vmem_to_hbm [thread:$0]  %s5732, 32, %s15, [#allocation5]
    $region113: #{tpu_custom_call.1} parent=1 // pred_fallthru
      _
    // Predicated region
    $region114: #{tpu_custom_call.1} parent=1 // pred_check
      _
    $region115: #{tpu_custom_call.1} parent=1 // pred_check_branch
      %5736 = sbr.rel (0) target = $region117
    $region116: #{tpu_custom_call.1} parent=1 // pred_region
      %5737 = dma.done [#allocation5], 32
    $region117: #{tpu_custom_call.1} parent=1 // pred_fallthru
      _
    %5738 = vsyncpa [#allocation4], 1
    %5739 = vsyncpa [#allocation7], 1
    %5740 = vsyncpa [#allocation10], 1
    %5741 = vsyncpa [#allocation13], 1
    %5742 = vsyncpa [#allocation16], 1
    %5743 = vsyncpa [#allocation19], 1
    %5744 = vsyncpa [#allocation22], 1
    %5745 = vsyncpa [#allocation5], 1

</llo_original>
